<compile_context>
chip_gen: v6e
topology: v6e:2x2x1
jax: 0.10.0
libtpu: 0.0.40
codegen_flags: <defaults>
</compile_context>

<pallas_src>
import functools

import jax
import jax.numpy as jnp
from jax import lax
from jax.experimental import pallas as pl
from jax.experimental.pallas import tpu as pltpu


def _round_up(x, m):
    return ((x + m - 1) // m) * m


# -----------------------------------------------------------------------------
# Device profile + feature probes (computed once, outside any trace).
# -----------------------------------------------------------------------------
_DEVICE_PROFILE = None
_SINGLE_BUF_MODE = "unset"


def _device_profile():
    """(tensorcores_per_chip, physical_vmem_bytes_per_core) — best effort."""
    global _DEVICE_PROFILE
    if _DEVICE_PROFILE is not None:
        return _DEVICE_PROFILE
    kind = ""
    try:
        kind = jax.devices()[0].device_kind.lower()
    except Exception:
        pass
    vmem = None
    try:
        vmem = int(pltpu.get_tpu_info().vmem_capacity_bytes)
    except Exception:
        vmem = None
    is_two_tc = ("v7" in kind) or ("7x" in kind)
    if vmem is None:
        if is_two_tc or not kind:
            vmem = 64 << 20          # v7x per-TC / conservative default
        else:
            vmem = 128 << 20         # v5e / v6e
    num_tc = 2 if is_two_tc else 1
    _DEVICE_PROFILE = (num_tc, vmem)
    return _DEVICE_PROFILE


def _resident_pipeline_mode():
    """pl.Buffered(1) if this JAX/Mosaic supports it, else None (default 2x).

    Probed with a tiny real compile+run so the main kernel never risks a
    lowering failure from the pipeline_mode kwarg.
    """
    global _SINGLE_BUF_MODE
    if _SINGLE_BUF_MODE != "unset":
        return _SINGLE_BUF_MODE
    mode = None
    try:
        try:
            cand = pl.Buffered(buffer_count=1)
        except TypeError:
            cand = pl.Buffered(1)

        def _probe(x_ref, o_ref):
            o_ref[...] = x_ref[...] + 1.0

        fn = pl.pallas_call(
            _probe,
            out_shape=jax.ShapeDtypeStruct((8, 128), jnp.float32),
            grid=(2,),
            in_specs=[pl.BlockSpec((8, 128), lambda i: (0, 0),
                                   pipeline_mode=cand)],
            out_specs=pl.BlockSpec((8, 128), lambda i: (0, 0)),
        )
        jax.block_until_ready(fn(jnp.zeros((8, 128), jnp.float32)))
        mode = cand
    except Exception:
        mode = None
    _SINGLE_BUF_MODE = mode
    return mode


# -----------------------------------------------------------------------------
# VMEM budgeting
# -----------------------------------------------------------------------------
def _vmem_estimate_bytes(tt, b_blk, dp, hp, cpad, write_seq, with_fc,
                         act_bytes, wbuf):
    f32 = 4
    est = 2 * tt * b_blk * dp * act_bytes                      # x chunk (2x buffered)
    est += wbuf * ((dp + hp) * 4 * hp + 4 * hp) * f32          # resident weights + bias
    est += tt * b_blk * 4 * hp * f32                           # gx scratch (explicit)
    est += 2 * b_blk * hp * f32                                # h/c scratch
    est += 8 * b_blk * hp * f32                                # per-step temporaries
    if write_seq:
        est += 2 * tt * b_blk * hp * act_bytes                 # out chunk (2x buffered)
    if with_fc:
        est += wbuf * (hp * cpad + cpad) * f32 + 2 * b_blk * cpad * f32
    return est


def _choose_time_block(T, target, b_blk, dp_max, hp, cpad, act_bytes, wbuf,
                       budget):
    tt = max(1, min(target, T))
    # Shrink until the per-chunk VMEM estimate fits the per-generation budget.
    while tt > 8 and _vmem_estimate_bytes(tt, b_blk, dp_max, hp, cpad, True,
                                          True, act_bytes, wbuf) > budget:
        tt = max(8, tt // 2)
    # Prefer a divisor of T near tt so the per-step tail masking is not needed.
    for cand in range(tt, max(1, tt // 2) - 1, -1):
        if T % cand == 0:
            return cand
    return tt


# -----------------------------------------------------------------------------
# Kernel factory.  Gate order matches PyTorch: [i, f, g, o].
# -----------------------------------------------------------------------------
def _make_lstm_kernel(*, seq_len, tt, hp, with_fc, write_seq, needs_mask,
                      unroll):
    def kernel(*refs):
        if with_fc:
            (x_ref, wih_ref, whh_ref, b_ref, wfc_ref, bfc_ref,
             out_ref, gx_ref, h_st, c_st) = refs
        else:
            (x_ref, wih_ref, whh_ref, b_ref,
             out_ref, gx_ref, h_st, c_st) = refs

        chunk = pl.program_id(1)  # time-chunk index (serial / "arbitrary")

        @pl.when(chunk == 0)
        def _init():
            h_st[...] = jnp.zeros_like(h_st)
            c_st[...] = jnp.zeros_like(c_st)
            if with_fc:
                out_ref[...] = jnp.zeros_like(out_ref)

        tt_blk, b_blk, dp = x_ref.shape

        # Hoisted input projection: ONE (tt*B, D) x (D, 4H) MXU matmul per
        # chunk, written into an explicit VMEM scratch and re-read per step.
        x_flat = x_ref[...].astype(jnp.float32).reshape(tt_blk * b_blk, dp)
        gx_ref[...] = (
            jnp.dot(x_flat, wih_ref[...], preferred_element_type=jnp.float32)
            + b_ref[...]
        ).reshape(tt_blk, b_blk, 4 * hp)

        whh = whh_ref[...]  # loaded once per chunk, reused every step

        def one_step(t, h, c):
            gates = gx_ref[t] + jnp.dot(h, whh,
                                        preferred_element_type=jnp.float32)
            i_g = jax.nn.sigmoid(gates[:, 0 * hp:1 * hp])
            f_g = jax.nn.sigmoid(gates[:, 1 * hp:2 * hp])
            g_g = jnp.tanh(gates[:, 2 * hp:3 * hp])
            o_g = jax.nn.sigmoid(gates[:, 3 * hp:4 * hp])
            c_new = f_g * c + i_g * g_g
            h_new = o_g * jnp.tanh(c_new)
            if needs_mask:
                valid = (chunk * tt + t) < seq_len
                h_new = jnp.where(valid, h_new, h)
                c_new = jnp.where(valid, c_new, c)
            if write_seq:
                out_ref[t] = h_new.astype(out_ref.dtype)
            return h_new, c_new

        def body(t, carry):
            return one_step(t, *carry)

        # Recurrent state carried in vregs across the chunk; unrolled fori_loop
        # bounds live ranges and removes per-iteration loop overhead.
        h, c = lax.fori_loop(0, tt, body, (h_st[...], c_st[...]),
                             unroll=unroll)

        # Persist state for the next time chunk.
        h_st[...] = h
        c_st[...] = c

        if with_fc:
            # Fused classifier head: only at the very last time chunk.
            @pl.when(chunk == pl.num_programs(1) - 1)
            def _fc():
                out_ref[...] = (
                    jnp.dot(h, wfc_ref[...],
                            preferred_element_type=jnp.float32)
                    + bfc_ref[...]
                ).astype(out_ref.dtype)

    return kernel


def _lstm_layer(x_pad, layer_params, *, seq_len, tt, b_blk, fc, act_dtype,
                vmem_cap, single_buffer):
    """One LSTM layer over padded, time-major input (T_pad, Bp, Dp)."""
    t_pad, bp, dp = x_pad.shape
    hp = layer_params["w_hh"].shape[0]
    n_tc = t_pad // tt
    n_bb = bp // b_blk
    with_fc = fc is not None
    write_seq = not with_fc

    kernel = _make_lstm_kernel(
        seq_len=seq_len, tt=tt, hp=hp, with_fc=with_fc, write_seq=write_seq,
        needs_mask=(t_pad != seq_len), unroll=(True if tt <= 32 else 8))

    const = lambda b, t: (0, 0)
    mode = _resident_pipeline_mode() if single_buffer else None

    def resident(shape):
        # Constant index_map -> never re-fetched; single-buffer when supported
        # so large weights don't allocate two VMEM copies.
        if mode is not None:
            return pl.BlockSpec(shape, const, pipeline_mode=mode)
        return pl.BlockSpec(shape, const)

    in_specs = [
        pl.BlockSpec((tt, b_blk, dp), lambda b, t: (t, b, 0)),   # x chunk
        resident((dp, 4 * hp)),                                  # W_ih^T
        resident((hp, 4 * hp)),                                  # W_hh^T
        resident((1, 4 * hp)),                                   # bias
    ]
    args = [x_pad, layer_params["w_ih"], layer_params["w_hh"],
            layer_params["b"]]

    if with_fc:
        wfc, bfc = fc
        cpad = wfc.shape[1]
        in_specs += [resident((hp, cpad)), resident((1, cpad))]
        args += [wfc, bfc]
        out_spec = pl.BlockSpec((b_blk, cpad), lambda b, t: (b, 0))
        out_shape = jax.ShapeDtypeStruct((bp, cpad), jnp.float32)
    else:
        cpad = 0
        out_spec = pl.BlockSpec((tt, b_blk, hp), lambda b, t: (t, b, 0))
        out_shape = jax.ShapeDtypeStruct((t_pad, bp, hp), act_dtype)

    wbuf = 1 if mode is not None else 2
    est = _vmem_estimate_bytes(tt, b_blk, dp, hp, cpad, write_seq, with_fc,
                               jnp.dtype(act_dtype).itemsize, wbuf)
    cparams = {"dimension_semantics": ("parallel", "arbitrary")}
    if est > (12 << 20):
        # Set an explicit budget once we exceed the default scoped VMEM
        # (16 MiB on v5e, 32 MiB on v6e/v7x), clamped to physical VMEM minus
        # headroom (v7x only has 64 MiB per TC).
        limit = min(int(est * 1.25) + (4 << 20),
                    max(vmem_cap - (8 << 20), est))
        cparams["vmem_limit_bytes"] = int(limit)

    return pl.pallas_call(
        kernel,
        out_shape=out_shape,
        grid=(n_bb, n_tc),
        in_specs=in_specs,
        out_specs=out_spec,
        scratch_shapes=[pltpu.VMEM((tt, b_blk, 4 * hp), jnp.float32),  # gx
                        pltpu.VMEM((b_blk, hp), jnp.float32),          # h
                        pltpu.VMEM((b_blk, hp), jnp.float32)],         # c
        compiler_params=pltpu.CompilerParams(**cparams),
    )(*args)


# -----------------------------------------------------------------------------
# Full forward pass (matches the PyTorch module):
#   h0 = c0 = 0; out, _ = lstm(x); out = fc(out[:, -1, :])
# -----------------------------------------------------------------------------
@functools.partial(jax.jit, static_argnames=(
    "num_classes", "tt", "b_blk", "activation_dtype", "vmem_cap",
    "single_buffer"))
def _rnn_forward_impl(x_btd, params, *, num_classes, tt, b_blk,
                      activation_dtype, vmem_cap, single_buffer):
    B, T, D = x_btd.shape
    lstm_params = params["lstm"]
    dp0 = lstm_params[0]["w_ih"].shape[0]
    act_dtype = jnp.dtype(activation_dtype)

    bp = _round_up(B, 8)
    t_pad = _round_up(T, tt)

    # Time-major, lane/sublane padded input (padding is zero -> inert).
    x_tbd = jnp.transpose(x_btd, (1, 0, 2)).astype(act_dtype)
    x_pad = jnp.zeros((t_pad, bp, dp0), act_dtype).at[:T, :B, :D].set(x_tbd)

    h_seq = x_pad
    n_layers = len(lstm_params)
    for l, lp in enumerate(lstm_params):
        is_top = l == n_layers - 1
        fc = (params["fc"]["w"], params["fc"]["b"]) if is_top else None
        h_seq = _lstm_layer(h_seq, lp, seq_len=T, tt=tt, b_blk=b_blk, fc=fc,
                            act_dtype=act_dtype, vmem_cap=vmem_cap,
                            single_buffer=single_buffer)

    # Top layer returned fused logits (Bp, Cp); strip padding.
    return h_seq[:B, :num_classes]


def rnn_forward(x_btd, params, *, num_classes, time_block=None,
                activation_dtype="float32"):
    """Python wrapper: device-/shape-dependent config is decided outside jit."""
    B, T, _ = x_btd.shape
    hp = params["lstm"][0]["w_hh"].shape[0]
    dp0 = params["lstm"][0]["w_ih"].shape[0]
    cpad = params["fc"]["w"].shape[1]
    act_bytes = jnp.dtype(activation_dtype).itemsize

    num_tc, vmem_cap = _device_profile()
    single_buffer = _resident_pipeline_mode() is not None
    wbuf = 1 if single_buffer else 2

    bp = _round_up(B, 8)
    # Split batch across TensorCores only on 2-TC chips (v7x); on single-TC
    # v5e/v6e the leading "parallel" axis is a serial loop and splitting just
    # doubles the number of serial recurrence passes.
    b_blk = bp // 2 if (num_tc >= 2 and bp >= 16 and bp % 16 == 0) else bp

    target_tt = time_block if time_block is not None else (
        256 if vmem_cap >= (100 << 20) else 128)
    budget = max(8 << 20, vmem_cap - (16 << 20))
    tt = _choose_time_block(T, target_tt, b_blk, max(dp0, hp), hp, cpad,
                            act_bytes, wbuf, budget)

    return _rnn_forward_impl(
        x_btd, params, num_classes=num_classes, tt=tt, b_blk=b_blk,
        activation_dtype=activation_dtype, vmem_cap=vmem_cap,
        single_buffer=single_buffer)


# -----------------------------------------------------------------------------
# Parameter init (PyTorch-like uniform init), padded to lane-dense layout.
# Returns (padded params for the kernel, raw params for the pure-JAX reference).
# -----------------------------------------------------------------------------
def init_params(key, input_size, hidden_size, num_layers, num_classes):
    h = hidden_size
    hp = _round_up(h, 128)
    cpad = _round_up(num_classes, 128)
    scale = 1.0 / (hidden_size ** 0.5)

    params = {"lstm": [], "fc": {}}
    raw = {"lstm": [], "fc": {}}
    for l in range(num_layers):
        d_in = input_size if l == 0 else hidden_size
        dp = _round_up(d_in, 128) if l == 0 else hp
        key, k1, k2, k3, k4 = jax.random.split(key, 5)
        w_ih = jax.random.uniform(k1, (4 * h, d_in), jnp.float32, -scale, scale)
        w_hh = jax.random.uniform(k2, (4 * h, h), jnp.float32, -scale, scale)
        b_ih = jax.random.uniform(k3, (4 * h,), jnp.float32, -scale, scale)
        b_hh = jax.random.uniform(k4, (4 * h,), jnp.float32, -scale, scale)
        bias = b_ih + b_hh
        raw["lstm"].append({"w_ih": w_ih, "w_hh": w_hh, "b": bias})

        w_ih_p = jnp.zeros((dp, 4 * hp), jnp.float32)
        w_hh_p = jnp.zeros((hp, 4 * hp), jnp.float32)
        b_p = jnp.zeros((1, 4 * hp), jnp.float32)
        for g in range(4):
            w_ih_p = w_ih_p.at[:d_in, g * hp:g * hp + h].set(
                w_ih[g * h:(g + 1) * h, :].T)
            w_hh_p = w_hh_p.at[:h, g * hp:g * hp + h].set(
                w_hh[g * h:(g + 1) * h, :].T)
            b_p = b_p.at[0, g * hp:g * hp + h].set(bias[g * h:(g + 1) * h])
        params["lstm"].append({"w_ih": w_ih_p, "w_hh": w_hh_p, "b": b_p})

    key, k1, k2 = jax.random.split(key, 3)
    w_fc = jax.random.uniform(k1, (num_classes, hidden_size), jnp.float32,
                              -scale, scale)
    b_fc = jax.random.uniform(k2, (num_classes,), jnp.float32, -scale, scale)
    raw["fc"]["w"] = w_fc
    raw["fc"]["b"] = b_fc
    params["fc"]["w"] = jnp.zeros((hp, cpad), jnp.float32).at[
        :h, :num_classes].set(w_fc.T)
    params["fc"]["b"] = jnp.zeros((1, cpad), jnp.float32).at[
        0, :num_classes].set(b_fc)
    return params, raw


def reference_forward(x_btd, raw):
    """Pure-JAX reference mirroring PyTorch nn.LSTM(batch_first=True) + fc."""
    x = x_btd.astype(jnp.float32)
    B = x.shape[0]
    h_seq = jnp.transpose(x, (1, 0, 2))
    for layer in raw["lstm"]:
        w_ih, w_hh, b = layer["w_ih"], layer["w_hh"], layer["b"]
        H = w_hh.shape[1]
        h = jnp.zeros((B, H), jnp.float32)
        c = jnp.zeros((B, H), jnp.float32)
        outs = []
        for t in range(h_seq.shape[0]):
            g = h_seq[t] @ w_ih.T + h @ w_hh.T + b
            i = jax.nn.sigmoid(g[:, 0 * H:1 * H])
            f = jax.nn.sigmoid(g[:, 1 * H:2 * H])
            gg = jnp.tanh(g[:, 2 * H:3 * H])
            o = jax.nn.sigmoid(g[:, 3 * H:4 * H])
            c = f * c + i * gg
            h = o * jnp.tanh(c)
            outs.append(h)
        h_seq = jnp.stack(outs, axis=0)
    return h_seq[-1] @ raw["fc"]["w"].T + raw["fc"]["b"]


if __name__ == "__main__":
    batch, seq_len = 2, 8
    input_size, hidden_size, num_layers, num_classes = 16, 32, 2, 10

    key = jax.random.PRNGKey(0)
    key, xk = jax.random.split(key)
    x = jax.random.normal(xk, (batch, seq_len, input_size), jnp.float32)

    params, raw = init_params(key, input_size, hidden_size, num_layers,
                              num_classes)

    out = rnn_forward(x, params, num_classes=num_classes)
    jax.block_until_ready(out)
    assert out.shape == (batch, num_classes), out.shape

    ref = reference_forward(x, raw)
    assert bool(jnp.all(jnp.isfinite(out)))
    assert bool(jnp.allclose(out, ref, atol=2e-3, rtol=2e-3)), (out, ref)
    print("KERNEL_OK")
</pallas_src>

<mosaic_0001>
module attributes {stable_mosaic.version = 11 : i64} {
  func.func @_probe(%arg0: i32, %arg1: memref<8x128xf32, #tpu.memory_space<vmem>>, %arg2: memref<8x128xf32, #tpu.memory_space<vmem>>) attributes {dimension_semantics = [#tpu.dimension_semantics<arbitrary>], iteration_bounds = array<i64: 2>, scalar_prefetch = 0 : i64, scratch_operands = 0 : i64, tpu.core_type = #tpu.core_type<tc>, window_params = [{pipeline_mode = #tpu.pipeline_mode<synchronous>, transform_indices = @transform_0, window_bounds = array<i64: 8, 128>}, {pipeline_mode = #tpu.pipeline_mode<synchronous>, transform_indices = @transform_1, window_bounds = array<i64: 8, 128>}]} {
    %c0 = arith.constant 0 : index
    %c0_0 = arith.constant 0 : index
    %0 = vector.load %arg1[%c0, %c0_0] : memref<8x128xf32, #tpu.memory_space<vmem>>, vector<8x128xf32>
    %cst = arith.constant 1.000000e+00 : f32
    %1 = vector.broadcast %cst : f32 to vector<8x128xf32>
    %2 = arith.addf %0, %1 : vector<8x128xf32>
    %c0_1 = arith.constant 0 : index
    %c0_2 = arith.constant 0 : index
    %3 = vector.load %arg2[%c0_1, %c0_2] : memref<8x128xf32, #tpu.memory_space<vmem>>, vector<8x128xf32>
    tpu.vector_store %arg2[%c0_1, %c0_2], %2 {strides = array<i32>} : memref<8x128xf32, #tpu.memory_space<vmem>>, vector<8x128xf32>,
    return
  }
  func.func @transform_0(%arg0: i32) -> (i32, i32) {
    %c0_i32 = arith.constant 0 : i32
    %c0_i32_0 = arith.constant 0 : i32
    %c0_i32_1 = arith.constant 0 : i32
    return %c0_i32, %c0_i32_0 : i32, i32
  }
  func.func @transform_1(%arg0: i32) -> (i32, i32) {
    %c0_i32 = arith.constant 0 : i32
    %c0_i32_0 = arith.constant 0 : i32
    %c0_i32_1 = arith.constant 0 : i32
    return %c0_i32, %c0_i32_0 : i32, i32
  }
}

module attributes {stable_mosaic.version = 11 : i64} {
  func.func @kernel(%arg0: i32, %arg1: i32, %arg2: memref<8x8x128xf32, #tpu.memory_space<vmem>>, %arg3: memref<128x512xf32, #tpu.memory_space<vmem>>, %arg4: memref<128x512xf32, #tpu.memory_space<vmem>>, %arg5: memref<1x512xf32, #tpu.memory_space<vmem>>, %arg6: memref<128x128xf32, #tpu.memory_space<vmem>>, %arg7: memref<1x128xf32, #tpu.memory_space<vmem>>, %arg8: memref<8x128xf32, #tpu.memory_space<vmem>>, %arg9: memref<8x8x512xf32, #tpu.memory_space<vmem>>, %arg10: memref<8x128xf32, #tpu.memory_space<vmem>>, %arg11: memref<8x128xf32, #tpu.memory_space<vmem>>) attributes {dimension_semantics = [#tpu.dimension_semantics<parallel>, #tpu.dimension_semantics<arbitrary>], iteration_bounds = array<i64: 1, 1>, scalar_prefetch = 0 : i64, scratch_operands = 3 : i64, tpu.core_type = #tpu.core_type<tc>, window_params = [{transform_indices = @transform_0, window_bounds = array<i64: 8, 8, 128>}, {pipeline_mode = #tpu.pipeline_mode<synchronous>, transform_indices = @transform_1, window_bounds = array<i64: 128, 512>}, {pipeline_mode = #tpu.pipeline_mode<synchronous>, transform_indices = @transform_2, window_bounds = array<i64: 128, 512>}, {pipeline_mode = #tpu.pipeline_mode<synchronous>, transform_indices = @transform_3, window_bounds = array<i64: 1, 512>}, {pipeline_mode = #tpu.pipeline_mode<synchronous>, transform_indices = @transform_4, window_bounds = array<i64: 128, 128>}, {pipeline_mode = #tpu.pipeline_mode<synchronous>, transform_indices = @transform_5, window_bounds = array<i64: 1, 128>}, {transform_indices = @transform_6, window_bounds = array<i64: 8, 128>}]} {
    %c0_i32 = arith.constant 0 : i32
    %0 = arith.cmpi eq, %arg1, %c0_i32 : i32
    %1 = arith.extui %0 : i1 to i32
    %c0_i32_0 = arith.constant 0 : i32
    %2 = arith.cmpi ne, %1, %c0_i32_0 : i32
    scf.if %2 {
      %cst_71 = arith.constant 0.000000e+00 : f32
      %260 = vector.broadcast %cst_71 : f32 to vector<8x128xf32>
      %c0_72 = arith.constant 0 : index
      %c0_73 = arith.constant 0 : index
      %261 = vector.load %arg10[%c0_72, %c0_73] : memref<8x128xf32, #tpu.memory_space<vmem>>, vector<8x128xf32>
      tpu.vector_store %arg10[%c0_72, %c0_73], %260 {strides = array<i32>} : memref<8x128xf32, #tpu.memory_space<vmem>>, vector<8x128xf32>,
      %cst_74 = arith.constant 0.000000e+00 : f32
      %262 = vector.broadcast %cst_74 : f32 to vector<8x128xf32>
      %c0_75 = arith.constant 0 : index
      %c0_76 = arith.constant 0 : index
      %263 = vector.load %arg11[%c0_75, %c0_76] : memref<8x128xf32, #tpu.memory_space<vmem>>, vector<8x128xf32>
      tpu.vector_store %arg11[%c0_75, %c0_76], %262 {strides = array<i32>} : memref<8x128xf32, #tpu.memory_space<vmem>>, vector<8x128xf32>,
      %cst_77 = arith.constant 0.000000e+00 : f32
      %264 = vector.broadcast %cst_77 : f32 to vector<8x128xf32>
      %c0_78 = arith.constant 0 : index
      %c0_79 = arith.constant 0 : index
      %265 = vector.load %arg8[%c0_78, %c0_79] : memref<8x128xf32, #tpu.memory_space<vmem>>, vector<8x128xf32>
      tpu.vector_store %arg8[%c0_78, %c0_79], %264 {strides = array<i32>} : memref<8x128xf32, #tpu.memory_space<vmem>>, vector<8x128xf32>,
    } else {
    }
    %c0 = arith.constant 0 : index
    %c0_1 = arith.constant 0 : index
    %c0_2 = arith.constant 0 : index
    %3 = vector.load %arg2[%c0, %c0_1, %c0_2] : memref<8x8x128xf32, #tpu.memory_space<vmem>>, vector<8x8x128xf32>
    %4 = vector.shape_cast %3 : vector<8x8x128xf32> to vector<64x128xf32>
    %c0_3 = arith.constant 0 : index
    %c0_4 = arith.constant 0 : index
    %5 = vector.load %arg3[%c0_3, %c0_4] : memref<128x512xf32, #tpu.memory_space<vmem>>, vector<128x512xf32>
    %cst = arith.constant dense<0.000000e+00> : vector<64x512xf32>
    %6 = tpu.matmul %4, %5, %cst {dimension_numbers = #tpu.dot_dimension_numbers<[1], [0], [0], [1], [0, 0, 1, 1], [], []>} : vector<64x128xf32>, vector<128x512xf32>, vector<64x512xf32> -> vector<64x512xf32>
    %c0_5 = arith.constant 0 : index
    %c0_6 = arith.constant 0 : index
    %7 = vector.load %arg5[%c0_5, %c0_6] : memref<1x512xf32, #tpu.memory_space<vmem>>, vector<1x512xf32>
    %8 = vector.broadcast %7 : vector<1x512xf32> to vector<64x512xf32>
    %9 = arith.addf %6, %8 : vector<64x512xf32>
    %10 = vector.shape_cast %9 : vector<64x512xf32> to vector<8x8x512xf32>
    %c0_7 = arith.constant 0 : index
    %c0_8 = arith.constant 0 : index
    %c0_9 = arith.constant 0 : index
    %11 = vector.load %arg9[%c0_7, %c0_8, %c0_9] : memref<8x8x512xf32, #tpu.memory_space<vmem>>, vector<8x8x512xf32>
    tpu.vector_store %arg9[%c0_7, %c0_8, %c0_9], %10 {strides = array<i32>} : memref<8x8x512xf32, #tpu.memory_space<vmem>>, vector<8x8x512xf32>,
    %c0_10 = arith.constant 0 : index
    %c0_11 = arith.constant 0 : index
    %12 = vector.load %arg4[%c0_10, %c0_11] : memref<128x512xf32, #tpu.memory_space<vmem>>, vector<128x512xf32>
    %c0_12 = arith.constant 0 : index
    %c0_13 = arith.constant 0 : index
    %13 = vector.load %arg10[%c0_12, %c0_13] : memref<8x128xf32, #tpu.memory_space<vmem>>, vector<8x128xf32>
    %c0_14 = arith.constant 0 : index
    %c0_15 = arith.constant 0 : index
    %14 = vector.load %arg11[%c0_14, %c0_15] : memref<8x128xf32, #tpu.memory_space<vmem>>, vector<8x128xf32>
    %c0_i32_16 = arith.constant 0 : i32
    %15 = arith.index_cast %c0_i32_16 : i32 to index
    %c0_17 = arith.constant 0 : index
    %c0_18 = arith.constant 0 : index
    %16 = vector.load %arg9[%15, %c0_17, %c0_18] : memref<8x8x512xf32, #tpu.memory_space<vmem>>, vector<1x8x512xf32>
    %17 = vector.shape_cast %16 : vector<1x8x512xf32> to vector<8x512xf32>
    %cst_19 = arith.constant dense<0.000000e+00> : vector<8x512xf32>
    %18 = tpu.matmul %13, %12, %cst_19 {dimension_numbers = #tpu.dot_dimension_numbers<[1], [0], [0], [1], [0, 0, 1, 1], [], []>} : vector<8x128xf32>, vector<128x512xf32>, vector<8x512xf32> -> vector<8x512xf32>
    %19 = arith.addf %17, %18 : vector<8x512xf32>
    %20 = vector.extract_strided_slice %19 {offsets = [0, 0], sizes = [8, 128], strides = [1, 1]} : vector<8x512xf32> to vector<8x128xf32>
    %21 = arith.negf %20 : vector<8x128xf32>
    %22 = math.exp %21 : vector<8x128xf32>
    %cst_20 = arith.constant 1.000000e+00 : f32
    %23 = vector.broadcast %cst_20 : f32 to vector<8x128xf32>
    %24 = arith.addf %23, %22 : vector<8x128xf32>
    %25 = arith.divf %23, %24 : vector<8x128xf32>
    %26 = vector.extract_strided_slice %19 {offsets = [0, 128], sizes = [8, 128], strides = [1, 1]} : vector<8x512xf32> to vector<8x128xf32>
    %27 = arith.negf %26 : vector<8x128xf32>
    %28 = math.exp %27 : vector<8x128xf32>
    %cst_21 = arith.constant 1.000000e+00 : f32
    %29 = vector.broadcast %cst_21 : f32 to vector<8x128xf32>
    %30 = arith.addf %29, %28 : vector<8x128xf32>
    %31 = arith.divf %29, %30 : vector<8x128xf32>
    %32 = vector.extract_strided_slice %19 {offsets = [0, 256], sizes = [8, 128], strides = [1, 1]} : vector<8x512xf32> to vector<8x128xf32>
    %33 = math.tanh %32 : vector<8x128xf32>
    %34 = vector.extract_strided_slice %19 {offsets = [0, 384], sizes = [8, 128], strides = [1, 1]} : vector<8x512xf32> to vector<8x128xf32>
    %35 = arith.negf %34 : vector<8x128xf32>
    %36 = math.exp %35 : vector<8x128xf32>
    %cst_22 = arith.constant 1.000000e+00 : f32
    %37 = vector.broadcast %cst_22 : f32 to vector<8x128xf32>
    %38 = arith.addf %37, %36 : vector<8x128xf32>
    %39 = arith.divf %37, %38 : vector<8x128xf32>
    %40 = arith.mulf %31, %14 : vector<8x128xf32>
    %41 = arith.mulf %25, %33 : vector<8x128xf32>
    %42 = arith.addf %40, %41 : vector<8x128xf32>
    %43 = math.tanh %42 : vector<8x128xf32>
    %44 = arith.mulf %39, %43 : vector<8x128xf32>
    %c1_i32 = arith.constant 1 : i32
    %45 = arith.index_cast %c1_i32 : i32 to index
    %c0_23 = arith.constant 0 : index
    %c0_24 = arith.constant 0 : index
    %46 = vector.load %arg9[%45, %c0_23, %c0_24] : memref<8x8x512xf32, #tpu.memory_space<vmem>>, vector<1x8x512xf32>
    %47 = vector.shape_cast %46 : vector<1x8x512xf32> to vector<8x512xf32>
    %cst_25 = arith.constant dense<0.000000e+00> : vector<8x512xf32>
    %48 = tpu.matmul %44, %12, %cst_25 {dimension_numbers = #tpu.dot_dimension_numbers<[1], [0], [0], [1], [0, 0, 1, 1], [], []>} : vector<8x128xf32>, vector<128x512xf32>, vector<8x512xf32> -> vector<8x512xf32>
    %49 = arith.addf %47, %48 : vector<8x512xf32>
    %50 = vector.extract_strided_slice %49 {offsets = [0, 0], sizes = [8, 128], strides = [1, 1]} : vector<8x512xf32> to vector<8x128xf32>
    %51 = arith.negf %50 : vector<8x128xf32>
    %52 = math.exp %51 : vector<8x128xf32>
    %cst_26 = arith.constant 1.000000e+00 : f32
    %53 = vector.broadcast %cst_26 : f32 to vector<8x128xf32>
    %54 = arith.addf %53, %52 : vector<8x128xf32>
    %55 = arith.divf %53, %54 : vector<8x128xf32>
    %56 = vector.extract_strided_slice %49 {offsets = [0, 128], sizes = [8, 128], strides = [1, 1]} : vector<8x512xf32> to vector<8x128xf32>
    %57 = arith.negf %56 : vector<8x128xf32>
    %58 = math.exp %57 : vector<8x128xf32>
    %cst_27 = arith.constant 1.000000e+00 : f32
    %59 = vector.broadcast %cst_27 : f32 to vector<8x128xf32>
    %60 = arith.addf %59, %58 : vector<8x128xf32>
    %61 = arith.divf %59, %60 : vector<8x128xf32>
    %62 = vector.extract_strided_slice %49 {offsets = [0, 256], sizes = [8, 128], strides = [1, 1]} : vector<8x512xf32> to vector<8x128xf32>
    %63 = math.tanh %62 : vector<8x128xf32>
    %64 = vector.extract_strided_slice %49 {offsets = [0, 384], sizes = [8, 128], strides = [1, 1]} : vector<8x512xf32> to vector<8x128xf32>
    %65 = arith.negf %64 : vector<8x128xf32>
    %66 = math.exp %65 : vector<8x128xf32>
    %cst_28 = arith.constant 1.000000e+00 : f32
    %67 = vector.broadcast %cst_28 : f32 to vector<8x128xf32>
    %68 = arith.addf %67, %66 : vector<8x128xf32>
    %69 = arith.divf %67, %68 : vector<8x128xf32>
    %70 = arith.mulf %61, %42 : vector<8x128xf32>
    %71 = arith.mulf %55, %63 : vector<8x128xf32>
    %72 = arith.addf %70, %71 : vector<8x128xf32>
    %73 = math.tanh %72 : vector<8x128xf32>
    %74 = arith.mulf %69, %73 : vector<8x128xf32>
    %c2_i32 = arith.constant 2 : i32
    %75 = arith.index_cast %c2_i32 : i32 to index
    %c0_29 = arith.constant 0 : index
    %c0_30 = arith.constant 0 : index
    %76 = vector.load %arg9[%75, %c0_29, %c0_30] : memref<8x8x512xf32, #tpu.memory_space<vmem>>, vector<1x8x512xf32>
    %77 = vector.shape_cast %76 : vector<1x8x512xf32> to vector<8x512xf32>
    %cst_31 = arith.constant dense<0.000000e+00> : vector<8x512xf32>
    %78 = tpu.matmul %74, %12, %cst_31 {dimension_numbers = #tpu.dot_dimension_numbers<[1], [0], [0], [1], [0, 0, 1, 1], [], []>} : vector<8x128xf32>, vector<128x512xf32>, vector<8x512xf32> -> vector<8x512xf32>
    %79 = arith.addf %77, %78 : vector<8x512xf32>
    %80 = vector.extract_strided_slice %79 {offsets = [0, 0], sizes = [8, 128], strides = [1, 1]} : vector<8x512xf32> to vector<8x128xf32>
    %81 = arith.negf %80 : vector<8x128xf32>
    %82 = math.exp %81 : vector<8x128xf32>
    %cst_32 = arith.constant 1.000000e+00 : f32
    %83 = vector.broadcast %cst_32 : f32 to vector<8x128xf32>
    %84 = arith.addf %83, %82 : vector<8x128xf32>
    %85 = arith.divf %83, %84 : vector<8x128xf32>
    %86 = vector.extract_strided_slice %79 {offsets = [0, 128], sizes = [8, 128], strides = [1, 1]} : vector<8x512xf32> to vector<8x128xf32>
    %87 = arith.negf %86 : vector<8x128xf32>
    %88 = math.exp %87 : vector<8x128xf32>
    %cst_33 = arith.constant 1.000000e+00 : f32
    %89 = vector.broadcast %cst_33 : f32 to vector<8x128xf32>
    %90 = arith.addf %89, %88 : vector<8x128xf32>
    %91 = arith.divf %89, %90 : vector<8x128xf32>
    %92 = vector.extract_strided_slice %79 {offsets = [0, 256], sizes = [8, 128], strides = [1, 1]} : vector<8x512xf32> to vector<8x128xf32>
    %93 = math.tanh %92 : vector<8x128xf32>
    %94 = vector.extract_strided_slice %79 {offsets = [0, 384], sizes = [8, 128], strides = [1, 1]} : vector<8x512xf32> to vector<8x128xf32>
    %95 = arith.negf %94 : vector<8x128xf32>
    %96 = math.exp %95 : vector<8x128xf32>
    %cst_34 = arith.constant 1.000000e+00 : f32
    %97 = vector.broadcast %cst_34 : f32 to vector<8x128xf32>
    %98 = arith.addf %97, %96 : vector<8x128xf32>
    %99 = arith.divf %97, %98 : vector<8x128xf32>
    %100 = arith.mulf %91, %72 : vector<8x128xf32>
    %101 = arith.mulf %85, %93 : vector<8x128xf32>
    %102 = arith.addf %100, %101 : vector<8x128xf32>
    %103 = math.tanh %102 : vector<8x128xf32>
    %104 = arith.mulf %99, %103 : vector<8x128xf32>
    %c3_i32 = arith.constant 3 : i32
    %105 = arith.index_cast %c3_i32 : i32 to index
    %c0_35 = arith.constant 0 : index
    %c0_36 = arith.constant 0 : index
    %106 = vector.load %arg9[%105, %c0_35, %c0_36] : memref<8x8x512xf32, #tpu.memory_space<vmem>>, vector<1x8x512xf32>
    %107 = vector.shape_cast %106 : vector<1x8x512xf32> to vector<8x512xf32>
    %cst_37 = arith.constant dense<0.000000e+00> : vector<8x512xf32>
    %108 = tpu.matmul %104, %12, %cst_37 {dimension_numbers = #tpu.dot_dimension_numbers<[1], [0], [0], [1], [0, 0, 1, 1], [], []>} : vector<8x128xf32>, vector<128x512xf32>, vector<8x512xf32> -> vector<8x512xf32>
    %109 = arith.addf %107, %108 : vector<8x512xf32>
    %110 = vector.extract_strided_slice %109 {offsets = [0, 0], sizes = [8, 128], strides = [1, 1]} : vector<8x512xf32> to vector<8x128xf32>
    %111 = arith.negf %110 : vector<8x128xf32>
    %112 = math.exp %111 : vector<8x128xf32>
    %cst_38 = arith.constant 1.000000e+00 : f32
    %113 = vector.broadcast %cst_38 : f32 to vector<8x128xf32>
    %114 = arith.addf %113, %112 : vector<8x128xf32>
    %115 = arith.divf %113, %114 : vector<8x128xf32>
    %116 = vector.extract_strided_slice %109 {offsets = [0, 128], sizes = [8, 128], strides = [1, 1]} : vector<8x512xf32> to vector<8x128xf32>
    %117 = arith.negf %116 : vector<8x128xf32>
    %118 = math.exp %117 : vector<8x128xf32>
    %cst_39 = arith.constant 1.000000e+00 : f32
    %119 = vector.broadcast %cst_39 : f32 to vector<8x128xf32>
    %120 = arith.addf %119, %118 : vector<8x128xf32>
    %121 = arith.divf %119, %120 : vector<8x128xf32>
    %122 = vector.extract_strided_slice %109 {offsets = [0, 256], sizes = [8, 128], strides = [1, 1]} : vector<8x512xf32> to vector<8x128xf32>
    %123 = math.tanh %122 : vector<8x128xf32>
    %124 = vector.extract_strided_slice %109 {offsets = [0, 384], sizes = [8, 128], strides = [1, 1]} : vector<8x512xf32> to vector<8x128xf32>
    %125 = arith.negf %124 : vector<8x128xf32>
    %126 = math.exp %125 : vector<8x128xf32>
    %cst_40 = arith.constant 1.000000e+00 : f32
    %127 = vector.broadcast %cst_40 : f32 to vector<8x128xf32>
    %128 = arith.addf %127, %126 : vector<8x128xf32>
    %129 = arith.divf %127, %128 : vector<8x128xf32>
    %130 = arith.mulf %121, %102 : vector<8x128xf32>
    %131 = arith.mulf %115, %123 : vector<8x128xf32>
    %132 = arith.addf %130, %131 : vector<8x128xf32>
    %133 = math.tanh %132 : vector<8x128xf32>
    %134 = arith.mulf %129, %133 : vector<8x128xf32>
    %c4_i32 = arith.constant 4 : i32
    %135 = arith.index_cast %c4_i32 : i32 to index
    %c0_41 = arith.constant 0 : index
    %c0_42 = arith.constant 0 : index
    %136 = vector.load %arg9[%135, %c0_41, %c0_42] : memref<8x8x512xf32, #tpu.memory_space<vmem>>, vector<1x8x512xf32>
    %137 = vector.shape_cast %136 : vector<1x8x512xf32> to vector<8x512xf32>
    %cst_43 = arith.constant dense<0.000000e+00> : vector<8x512xf32>
    %138 = tpu.matmul %134, %12, %cst_43 {dimension_numbers = #tpu.dot_dimension_numbers<[1], [0], [0], [1], [0, 0, 1, 1], [], []>} : vector<8x128xf32>, vector<128x512xf32>, vector<8x512xf32> -> vector<8x512xf32>
    %139 = arith.addf %137, %138 : vector<8x512xf32>
    %140 = vector.extract_strided_slice %139 {offsets = [0, 0], sizes = [8, 128], strides = [1, 1]} : vector<8x512xf32> to vector<8x128xf32>
    %141 = arith.negf %140 : vector<8x128xf32>
    %142 = math.exp %141 : vector<8x128xf32>
    %cst_44 = arith.constant 1.000000e+00 : f32
    %143 = vector.broadcast %cst_44 : f32 to vector<8x128xf32>
    %144 = arith.addf %143, %142 : vector<8x128xf32>
    %145 = arith.divf %143, %144 : vector<8x128xf32>
    %146 = vector.extract_strided_slice %139 {offsets = [0, 128], sizes = [8, 128], strides = [1, 1]} : vector<8x512xf32> to vector<8x128xf32>
    %147 = arith.negf %146 : vector<8x128xf32>
    %148 = math.exp %147 : vector<8x128xf32>
    %cst_45 = arith.constant 1.000000e+00 : f32
    %149 = vector.broadcast %cst_45 : f32 to vector<8x128xf32>
    %150 = arith.addf %149, %148 : vector<8x128xf32>
    %151 = arith.divf %149, %150 : vector<8x128xf32>
    %152 = vector.extract_strided_slice %139 {offsets = [0, 256], sizes = [8, 128], strides = [1, 1]} : vector<8x512xf32> to vector<8x128xf32>
    %153 = math.tanh %152 : vector<8x128xf32>
    %154 = vector.extract_strided_slice %139 {offsets = [0, 384], sizes = [8, 128], strides = [1, 1]} : vector<8x512xf32> to vector<8x128xf32>
    %155 = arith.negf %154 : vector<8x128xf32>
    %156 = math.exp %155 : vector<8x128xf32>
    %cst_46 = arith.constant 1.000000e+00 : f32
    %157 = vector.broadcast %cst_46 : f32 to vector<8x128xf32>
    %158 = arith.addf %157, %156 : vector<8x128xf32>
    %159 = arith.divf %157, %158 : vector<8x128xf32>
    %160 = arith.mulf %151, %132 : vector<8x128xf32>
    %161 = arith.mulf %145, %153 : vector<8x128xf32>
    %162 = arith.addf %160, %161 : vector<8x128xf32>
    %163 = math.tanh %162 : vector<8x128xf32>
    %164 = arith.mulf %159, %163 : vector<8x128xf32>
    %c5_i32 = arith.constant 5 : i32
    %165 = arith.index_cast %c5_i32 : i32 to index
    %c0_47 = arith.constant 0 : index
    %c0_48 = arith.constant 0 : index
    %166 = vector.load %arg9[%165, %c0_47, %c0_48] : memref<8x8x512xf32, #tpu.memory_space<vmem>>, vector<1x8x512xf32>
    %167 = vector.shape_cast %166 : vector<1x8x512xf32> to vector<8x512xf32>
    %cst_49 = arith.constant dense<0.000000e+00> : vector<8x512xf32>
    %168 = tpu.matmul %164, %12, %cst_49 {dimension_numbers = #tpu.dot_dimension_numbers<[1], [0], [0], [1], [0, 0, 1, 1], [], []>} : vector<8x128xf32>, vector<128x512xf32>, vector<8x512xf32> -> vector<8x512xf32>
    %169 = arith.addf %167, %168 : vector<8x512xf32>
    %170 = vector.extract_strided_slice %169 {offsets = [0, 0], sizes = [8, 128], strides = [1, 1]} : vector<8x512xf32> to vector<8x128xf32>
    %171 = arith.negf %170 : vector<8x128xf32>
    %172 = math.exp %171 : vector<8x128xf32>
    %cst_50 = arith.constant 1.000000e+00 : f32
    %173 = vector.broadcast %cst_50 : f32 to vector<8x128xf32>
    %174 = arith.addf %173, %172 : vector<8x128xf32>
    %175 = arith.divf %173, %174 : vector<8x128xf32>
    %176 = vector.extract_strided_slice %169 {offsets = [0, 128], sizes = [8, 128], strides = [1, 1]} : vector<8x512xf32> to vector<8x128xf32>
    %177 = arith.negf %176 : vector<8x128xf32>
    %178 = math.exp %177 : vector<8x128xf32>
    %cst_51 = arith.constant 1.000000e+00 : f32
    %179 = vector.broadcast %cst_51 : f32 to vector<8x128xf32>
    %180 = arith.addf %179, %178 : vector<8x128xf32>
    %181 = arith.divf %179, %180 : vector<8x128xf32>
    %182 = vector.extract_strided_slice %169 {offsets = [0, 256], sizes = [8, 128], strides = [1, 1]} : vector<8x512xf32> to vector<8x128xf32>
    %183 = math.tanh %182 : vector<8x128xf32>
    %184 = vector.extract_strided_slice %169 {offsets = [0, 384], sizes = [8, 128], strides = [1, 1]} : vector<8x512xf32> to vector<8x128xf32>
    %185 = arith.negf %184 : vector<8x128xf32>
    %186 = math.exp %185 : vector<8x128xf32>
    %cst_52 = arith.constant 1.000000e+00 : f32
    %187 = vector.broadcast %cst_52 : f32 to vector<8x128xf32>
    %188 = arith.addf %187, %186 : vector<8x128xf32>
    %189 = arith.divf %187, %188 : vector<8x128xf32>
    %190 = arith.mulf %181, %162 : vector<8x128xf32>
    %191 = arith.mulf %175, %183 : vector<8x128xf32>
    %192 = arith.addf %190, %191 : vector<8x128xf32>
    %193 = math.tanh %192 : vector<8x128xf32>
    %194 = arith.mulf %189, %193 : vector<8x128xf32>
    %c6_i32 = arith.constant 6 : i32
    %195 = arith.index_cast %c6_i32 : i32 to index
    %c0_53 = arith.constant 0 : index
    %c0_54 = arith.constant 0 : index
    %196 = vector.load %arg9[%195, %c0_53, %c0_54] : memref<8x8x512xf32, #tpu.memory_space<vmem>>, vector<1x8x512xf32>
    %197 = vector.shape_cast %196 : vector<1x8x512xf32> to vector<8x512xf32>
    %cst_55 = arith.constant dense<0.000000e+00> : vector<8x512xf32>
    %198 = tpu.matmul %194, %12, %cst_55 {dimension_numbers = #tpu.dot_dimension_numbers<[1], [0], [0], [1], [0, 0, 1, 1], [], []>} : vector<8x128xf32>, vector<128x512xf32>, vector<8x512xf32> -> vector<8x512xf32>
    %199 = arith.addf %197, %198 : vector<8x512xf32>
    %200 = vector.extract_strided_slice %199 {offsets = [0, 0], sizes = [8, 128], strides = [1, 1]} : vector<8x512xf32> to vector<8x128xf32>
    %201 = arith.negf %200 : vector<8x128xf32>
    %202 = math.exp %201 : vector<8x128xf32>
    %cst_56 = arith.constant 1.000000e+00 : f32
    %203 = vector.broadcast %cst_56 : f32 to vector<8x128xf32>
    %204 = arith.addf %203, %202 : vector<8x128xf32>
    %205 = arith.divf %203, %204 : vector<8x128xf32>
    %206 = vector.extract_strided_slice %199 {offsets = [0, 128], sizes = [8, 128], strides = [1, 1]} : vector<8x512xf32> to vector<8x128xf32>
    %207 = arith.negf %206 : vector<8x128xf32>
    %208 = math.exp %207 : vector<8x128xf32>
    %cst_57 = arith.constant 1.000000e+00 : f32
    %209 = vector.broadcast %cst_57 : f32 to vector<8x128xf32>
    %210 = arith.addf %209, %208 : vector<8x128xf32>
    %211 = arith.divf %209, %210 : vector<8x128xf32>
    %212 = vector.extract_strided_slice %199 {offsets = [0, 256], sizes = [8, 128], strides = [1, 1]} : vector<8x512xf32> to vector<8x128xf32>
    %213 = math.tanh %212 : vector<8x128xf32>
    %214 = vector.extract_strided_slice %199 {offsets = [0, 384], sizes = [8, 128], strides = [1, 1]} : vector<8x512xf32> to vector<8x128xf32>
    %215 = arith.negf %214 : vector<8x128xf32>
    %216 = math.exp %215 : vector<8x128xf32>
    %cst_58 = arith.constant 1.000000e+00 : f32
    %217 = vector.broadcast %cst_58 : f32 to vector<8x128xf32>
    %218 = arith.addf %217, %216 : vector<8x128xf32>
    %219 = arith.divf %217, %218 : vector<8x128xf32>
    %220 = arith.mulf %211, %192 : vector<8x128xf32>
    %221 = arith.mulf %205, %213 : vector<8x128xf32>
    %222 = arith.addf %220, %221 : vector<8x128xf32>
    %223 = math.tanh %222 : vector<8x128xf32>
    %224 = arith.mulf %219, %223 : vector<8x128xf32>
    %c7_i32 = arith.constant 7 : i32
    %225 = arith.index_cast %c7_i32 : i32 to index
    %c0_59 = arith.constant 0 : index
    %c0_60 = arith.constant 0 : index
    %226 = vector.load %arg9[%225, %c0_59, %c0_60] : memref<8x8x512xf32, #tpu.memory_space<vmem>>, vector<1x8x512xf32>
    %227 = vector.shape_cast %226 : vector<1x8x512xf32> to vector<8x512xf32>
    %cst_61 = arith.constant dense<0.000000e+00> : vector<8x512xf32>
    %228 = tpu.matmul %224, %12, %cst_61 {dimension_numbers = #tpu.dot_dimension_numbers<[1], [0], [0], [1], [0, 0, 1, 1], [], []>} : vector<8x128xf32>, vector<128x512xf32>, vector<8x512xf32> -> vector<8x512xf32>
    %229 = arith.addf %227, %228 : vector<8x512xf32>
    %230 = vector.extract_strided_slice %229 {offsets = [0, 0], sizes = [8, 128], strides = [1, 1]} : vector<8x512xf32> to vector<8x128xf32>
    %231 = arith.negf %230 : vector<8x128xf32>
    %232 = math.exp %231 : vector<8x128xf32>
    %cst_62 = arith.constant 1.000000e+00 : f32
    %233 = vector.broadcast %cst_62 : f32 to vector<8x128xf32>
    %234 = arith.addf %233, %232 : vector<8x128xf32>
    %235 = arith.divf %233, %234 : vector<8x128xf32>
    %236 = vector.extract_strided_slice %229 {offsets = [0, 128], sizes = [8, 128], strides = [1, 1]} : vector<8x512xf32> to vector<8x128xf32>
    %237 = arith.negf %236 : vector<8x128xf32>
    %238 = math.exp %237 : vector<8x128xf32>
    %cst_63 = arith.constant 1.000000e+00 : f32
    %239 = vector.broadcast %cst_63 : f32 to vector<8x128xf32>
    %240 = arith.addf %239, %238 : vector<8x128xf32>
    %241 = arith.divf %239, %240 : vector<8x128xf32>
    %242 = vector.extract_strided_slice %229 {offsets = [0, 256], sizes = [8, 128], strides = [1, 1]} : vector<8x512xf32> to vector<8x128xf32>
    %243 = math.tanh %242 : vector<8x128xf32>
    %244 = vector.extract_strided_slice %229 {offsets = [0, 384], sizes = [8, 128], strides = [1, 1]} : vector<8x512xf32> to vector<8x128xf32>
    %245 = arith.negf %244 : vector<8x128xf32>
    %246 = math.exp %245 : vector<8x128xf32>
    %cst_64 = arith.constant 1.000000e+00 : f32
    %247 = vector.broadcast %cst_64 : f32 to vector<8x128xf32>
    %248 = arith.addf %247, %246 : vector<8x128xf32>
    %249 = arith.divf %247, %248 : vector<8x128xf32>
    %250 = arith.mulf %241, %222 : vector<8x128xf32>
    %251 = arith.mulf %235, %243 : vector<8x128xf32>
    %252 = arith.addf %250, %251 : vector<8x128xf32>
    %253 = math.tanh %252 : vector<8x128xf32>
    %254 = arith.mulf %249, %253 : vector<8x128xf32>
    %c8_i32 = arith.constant 8 : i32
    %c0_65 = arith.constant 0 : index
    %c0_66 = arith.constant 0 : index
    %255 = vector.load %arg10[%c0_65, %c0_66] : memref<8x128xf32, #tpu.memory_space<vmem>>, vector<8x128xf32>
    tpu.vector_store %arg10[%c0_65, %c0_66], %254 {strides = array<i32>} : memref<8x128xf32, #tpu.memory_space<vmem>>, vector<8x128xf32>,
    %c0_67 = arith.constant 0 : index
    %c0_68 = arith.constant 0 : index
    %256 = vector.load %arg11[%c0_67, %c0_68] : memref<8x128xf32, #tpu.memory_space<vmem>>, vector<8x128xf32>
    tpu.vector_store %arg11[%c0_67, %c0_68], %252 {strides = array<i32>} : memref<8x128xf32, #tpu.memory_space<vmem>>, vector<8x128xf32>,
    %c0_i32_69 = arith.constant 0 : i32
    %257 = arith.cmpi eq, %arg1, %c0_i32_69 : i32
    %258 = arith.extui %257 : i1 to i32
    %c0_i32_70 = arith.constant 0 : i32
    %259 = arith.cmpi ne, %258, %c0_i32_70 : i32
    scf.if %259 {
      %c0_71 = arith.constant 0 : index
      %c0_72 = arith.constant 0 : index
      %260 = vector.load %arg6[%c0_71, %c0_72] : memref<128x128xf32, #tpu.memory_space<vmem>>, vector<128x128xf32>
      %cst_73 = arith.constant dense<0.000000e+00> : vector<8x128xf32>
      %261 = tpu.matmul %254, %260, %cst_73 {dimension_numbers = #tpu.dot_dimension_numbers<[1], [0], [0], [1], [0, 0, 1, 1], [], []>} : vector<8x128xf32>, vector<128x128xf32>, vector<8x128xf32> -> vector<8x128xf32>
      %c0_74 = arith.constant 0 : index
      %c0_75 = arith.constant 0 : index
      %262 = vector.load %arg7[%c0_74, %c0_75] : memref<1x128xf32, #tpu.memory_space<vmem>>, vector<1x128xf32>
      %263 = vector.broadcast %262 : vector<1x128xf32> to vector<8x128xf32>
      %264 = arith.addf %261, %263 : vector<8x128xf32>
      %c0_76 = arith.constant 0 : index
      %c0_77 = arith.constant 0 : index
      %265 = vector.load %arg8[%c0_76, %c0_77] : memref<8x128xf32, #tpu.memory_space<vmem>>, vector<8x128xf32>
      tpu.vector_store %arg8[%c0_76, %c0_77], %264 {strides = array<i32>} : memref<8x128xf32, #tpu.memory_space<vmem>>, vector<8x128xf32>,
    } else {
    }
    return
  }
  func.func @transform_0(%arg0: i32, %arg1: i32) -> (i32, i32, i32) {
    %c0_i32 = arith.constant 0 : i32
    %c0_i32_0 = arith.constant 0 : i32
    return %arg1, %arg0, %c0_i32 : i32, i32, i32
  }
  func.func @transform_1(%arg0: i32, %arg1: i32) -> (i32, i32) {
    %c0_i32 = arith.constant 0 : i32
    %c0_i32_0 = arith.constant 0 : i32
    %c0_i32_1 = arith.constant 0 : i32
    return %c0_i32, %c0_i32_0 : i32, i32
  }
  func.func @transform_2(%arg0: i32, %arg1: i32) -> (i32, i32) {
    %c0_i32 = arith.constant 0 : i32
    %c0_i32_0 = arith.constant 0 : i32
    %c0_i32_1 = arith.constant 0 : i32
    return %c0_i32, %c0_i32_0 : i32, i32
  }
  func.func @transform_3(%arg0: i32, %arg1: i32) -> (i32, i32) {
    %c0_i32 = arith.constant 0 : i32
    %c0_i32_0 = arith.constant 0 : i32
    %c0_i32_1 = arith.constant 0 : i32
    return %c0_i32, %c0_i32_0 : i32, i32
  }
  func.func @transform_4(%arg0: i32, %arg1: i32) -> (i32, i32) {
    %c0_i32 = arith.constant 0 : i32
    %c0_i32_0 = arith.constant 0 : i32
    %c0_i32_1 = arith.constant 0 : i32
    return %c0_i32, %c0_i32_0 : i32, i32
  }
  func.func @transform_5(%arg0: i32, %arg1: i32) -> (i32, i32) {
    %c0_i32 = arith.constant 0 : i32
    %c0_i32_0 = arith.constant 0 : i32
    %c0_i32_1 = arith.constant 0 : i32
    return %c0_i32, %c0_i32_0 : i32, i32
  }
  func.func @transform_6(%arg0: i32, %arg1: i32) -> (i32, i32) {
    %c0_i32 = arith.constant 0 : i32
    %c0_i32_0 = arith.constant 0 : i32
    return %arg0, %c0_i32 : i32, i32
  }
}

module attributes {stable_mosaic.version = 11 : i64} {
  func.func @kernel(%arg0: i32, %arg1: i32, %arg2: memref<8x8x128xf32, #tpu.memory_space<vmem>>, %arg3: memref<128x512xf32, #tpu.memory_space<vmem>>, %arg4: memref<128x512xf32, #tpu.memory_space<vmem>>, %arg5: memref<1x512xf32, #tpu.memory_space<vmem>>, %arg6: memref<8x8x128xf32, #tpu.memory_space<vmem>>, %arg7: memref<8x8x512xf32, #tpu.memory_space<vmem>>, %arg8: memref<8x128xf32, #tpu.memory_space<vmem>>, %arg9: memref<8x128xf32, #tpu.memory_space<vmem>>) attributes {dimension_semantics = [#tpu.dimension_semantics<parallel>, #tpu.dimension_semantics<arbitrary>], iteration_bounds = array<i64: 1, 1>, scalar_prefetch = 0 : i64, scratch_operands = 3 : i64, tpu.core_type = #tpu.core_type<tc>, window_params = [{transform_indices = @transform_0, window_bounds = array<i64: 8, 8, 128>}, {pipeline_mode = #tpu.pipeline_mode<synchronous>, transform_indices = @transform_1, window_bounds = array<i64: 128, 512>}, {pipeline_mode = #tpu.pipeline_mode<synchronous>, transform_indices = @transform_2, window_bounds = array<i64: 128, 512>}, {pipeline_mode = #tpu.pipeline_mode<synchronous>, transform_indices = @transform_3, window_bounds = array<i64: 1, 512>}, {transform_indices = @transform_4, window_bounds = array<i64: 8, 8, 128>}]} {
    %c0_i32 = arith.constant 0 : i32
    %0 = arith.cmpi eq, %arg1, %c0_i32 : i32
    %1 = arith.extui %0 : i1 to i32
    %c0_i32_0 = arith.constant 0 : i32
    %2 = arith.cmpi ne, %1, %c0_i32_0 : i32
    scf.if %2 {
      %cst_85 = arith.constant 0.000000e+00 : f32
      %289 = vector.broadcast %cst_85 : f32 to vector<8x128xf32>
      %c0_86 = arith.constant 0 : index
      %c0_87 = arith.constant 0 : index
      %290 = vector.load %arg8[%c0_86, %c0_87] : memref<8x128xf32, #tpu.memory_space<vmem>>, vector<8x128xf32>
      tpu.vector_store %arg8[%c0_86, %c0_87], %289 {strides = array<i32>} : memref<8x128xf32, #tpu.memory_space<vmem>>, vector<8x128xf32>,
      %cst_88 = arith.constant 0.000000e+00 : f32
      %291 = vector.broadcast %cst_88 : f32 to vector<8x128xf32>
      %c0_89 = arith.constant 0 : index
      %c0_90 = arith.constant 0 : index
      %292 = vector.load %arg9[%c0_89, %c0_90] : memref<8x128xf32, #tpu.memory_space<vmem>>, vector<8x128xf32>
      tpu.vector_store %arg9[%c0_89, %c0_90], %291 {strides = array<i32>} : memref<8x128xf32, #tpu.memory_space<vmem>>, vector<8x128xf32>,
    } else {
    }
    %c0 = arith.constant 0 : index
    %c0_1 = arith.constant 0 : index
    %c0_2 = arith.constant 0 : index
    %3 = vector.load %arg2[%c0, %c0_1, %c0_2] : memref<8x8x128xf32, #tpu.memory_space<vmem>>, vector<8x8x128xf32>
    %4 = vector.shape_cast %3 : vector<8x8x128xf32> to vector<64x128xf32>
    %c0_3 = arith.constant 0 : index
    %c0_4 = arith.constant 0 : index
    %5 = vector.load %arg3[%c0_3, %c0_4] : memref<128x512xf32, #tpu.memory_space<vmem>>, vector<128x512xf32>
    %cst = arith.constant dense<0.000000e+00> : vector<64x512xf32>
    %6 = tpu.matmul %4, %5, %cst {dimension_numbers = #tpu.dot_dimension_numbers<[1], [0], [0], [1], [0, 0, 1, 1], [], []>} : vector<64x128xf32>, vector<128x512xf32>, vector<64x512xf32> -> vector<64x512xf32>
    %c0_5 = arith.constant 0 : index
    %c0_6 = arith.constant 0 : index
    %7 = vector.load %arg5[%c0_5, %c0_6] : memref<1x512xf32, #tpu.memory_space<vmem>>, vector<1x512xf32>
    %8 = vector.broadcast %7 : vector<1x512xf32> to vector<64x512xf32>
    %9 = arith.addf %6, %8 : vector<64x512xf32>
    %10 = vector.shape_cast %9 : vector<64x512xf32> to vector<8x8x512xf32>
    %c0_7 = arith.constant 0 : index
    %c0_8 = arith.constant 0 : index
    %c0_9 = arith.constant 0 : index
    %11 = vector.load %arg7[%c0_7, %c0_8, %c0_9] : memref<8x8x512xf32, #tpu.memory_space<vmem>>, vector<8x8x512xf32>
    tpu.vector_store %arg7[%c0_7, %c0_8, %c0_9], %10 {strides = array<i32>} : memref<8x8x512xf32, #tpu.memory_space<vmem>>, vector<8x8x512xf32>,
    %c0_10 = arith.constant 0 : index
    %c0_11 = arith.constant 0 : index
    %12 = vector.load %arg4[%c0_10, %c0_11] : memref<128x512xf32, #tpu.memory_space<vmem>>, vector<128x512xf32>
    %c0_12 = arith.constant 0 : index
    %c0_13 = arith.constant 0 : index
    %13 = vector.load %arg8[%c0_12, %c0_13] : memref<8x128xf32, #tpu.memory_space<vmem>>, vector<8x128xf32>
    %c0_14 = arith.constant 0 : index
    %c0_15 = arith.constant 0 : index
    %14 = vector.load %arg9[%c0_14, %c0_15] : memref<8x128xf32, #tpu.memory_space<vmem>>, vector<8x128xf32>
    %c0_i32_16 = arith.constant 0 : i32
    %15 = arith.index_cast %c0_i32_16 : i32 to index
    %c0_17 = arith.constant 0 : index
    %c0_18 = arith.constant 0 : index
    %16 = vector.load %arg7[%15, %c0_17, %c0_18] : memref<8x8x512xf32, #tpu.memory_space<vmem>>, vector<1x8x512xf32>
    %17 = vector.shape_cast %16 : vector<1x8x512xf32> to vector<8x512xf32>
    %cst_19 = arith.constant dense<0.000000e+00> : vector<8x512xf32>
    %18 = tpu.matmul %13, %12, %cst_19 {dimension_numbers = #tpu.dot_dimension_numbers<[1], [0], [0], [1], [0, 0, 1, 1], [], []>} : vector<8x128xf32>, vector<128x512xf32>, vector<8x512xf32> -> vector<8x512xf32>
    %19 = arith.addf %17, %18 : vector<8x512xf32>
    %20 = vector.extract_strided_slice %19 {offsets = [0, 0], sizes = [8, 128], strides = [1, 1]} : vector<8x512xf32> to vector<8x128xf32>
    %21 = arith.negf %20 : vector<8x128xf32>
    %22 = math.exp %21 : vector<8x128xf32>
    %cst_20 = arith.constant 1.000000e+00 : f32
    %23 = vector.broadcast %cst_20 : f32 to vector<8x128xf32>
    %24 = arith.addf %23, %22 : vector<8x128xf32>
    %25 = arith.divf %23, %24 : vector<8x128xf32>
    %26 = vector.extract_strided_slice %19 {offsets = [0, 128], sizes = [8, 128], strides = [1, 1]} : vector<8x512xf32> to vector<8x128xf32>
    %27 = arith.negf %26 : vector<8x128xf32>
    %28 = math.exp %27 : vector<8x128xf32>
    %cst_21 = arith.constant 1.000000e+00 : f32
    %29 = vector.broadcast %cst_21 : f32 to vector<8x128xf32>
    %30 = arith.addf %29, %28 : vector<8x128xf32>
    %31 = arith.divf %29, %30 : vector<8x128xf32>
    %32 = vector.extract_strided_slice %19 {offsets = [0, 256], sizes = [8, 128], strides = [1, 1]} : vector<8x512xf32> to vector<8x128xf32>
    %33 = math.tanh %32 : vector<8x128xf32>
    %34 = vector.extract_strided_slice %19 {offsets = [0, 384], sizes = [8, 128], strides = [1, 1]} : vector<8x512xf32> to vector<8x128xf32>
    %35 = arith.negf %34 : vector<8x128xf32>
    %36 = math.exp %35 : vector<8x128xf32>
    %cst_22 = arith.constant 1.000000e+00 : f32
    %37 = vector.broadcast %cst_22 : f32 to vector<8x128xf32>
    %38 = arith.addf %37, %36 : vector<8x128xf32>
    %39 = arith.divf %37, %38 : vector<8x128xf32>
    %40 = arith.mulf %31, %14 : vector<8x128xf32>
    %41 = arith.mulf %25, %33 : vector<8x128xf32>
    %42 = arith.addf %40, %41 : vector<8x128xf32>
    %43 = math.tanh %42 : vector<8x128xf32>
    %44 = arith.mulf %39, %43 : vector<8x128xf32>
    %45 = arith.index_cast %c0_i32_16 : i32 to index
    %c0_23 = arith.constant 0 : index
    %c0_24 = arith.constant 0 : index
    %46 = vector.load %arg6[%45, %c0_23, %c0_24] : memref<8x8x128xf32, #tpu.memory_space<vmem>>, vector<1x8x128xf32>
    %47 = vector.shape_cast %46 : vector<1x8x128xf32> to vector<8x128xf32>
    %48 = vector.shape_cast %44 : vector<8x128xf32> to vector<1x8x128xf32>
    tpu.vector_store %arg6[%45, %c0_23, %c0_24], %48 {strides = array<i32>} : memref<8x8x128xf32, #tpu.memory_space<vmem>>, vector<1x8x128xf32>,
    %c1_i32 = arith.constant 1 : i32
    %49 = arith.index_cast %c1_i32 : i32 to index
    %c0_25 = arith.constant 0 : index
    %c0_26 = arith.constant 0 : index
    %50 = vector.load %arg7[%49, %c0_25, %c0_26] : memref<8x8x512xf32, #tpu.memory_space<vmem>>, vector<1x8x512xf32>
    %51 = vector.shape_cast %50 : vector<1x8x512xf32> to vector<8x512xf32>
    %cst_27 = arith.constant dense<0.000000e+00> : vector<8x512xf32>
    %52 = tpu.matmul %44, %12, %cst_27 {dimension_numbers = #tpu.dot_dimension_numbers<[1], [0], [0], [1], [0, 0, 1, 1], [], []>} : vector<8x128xf32>, vector<128x512xf32>, vector<8x512xf32> -> vector<8x512xf32>
    %53 = arith.addf %51, %52 : vector<8x512xf32>
    %54 = vector.extract_strided_slice %53 {offsets = [0, 0], sizes = [8, 128], strides = [1, 1]} : vector<8x512xf32> to vector<8x128xf32>
    %55 = arith.negf %54 : vector<8x128xf32>
    %56 = math.exp %55 : vector<8x128xf32>
    %cst_28 = arith.constant 1.000000e+00 : f32
    %57 = vector.broadcast %cst_28 : f32 to vector<8x128xf32>
    %58 = arith.addf %57, %56 : vector<8x128xf32>
    %59 = arith.divf %57, %58 : vector<8x128xf32>
    %60 = vector.extract_strided_slice %53 {offsets = [0, 128], sizes = [8, 128], strides = [1, 1]} : vector<8x512xf32> to vector<8x128xf32>
    %61 = arith.negf %60 : vector<8x128xf32>
    %62 = math.exp %61 : vector<8x128xf32>
    %cst_29 = arith.constant 1.000000e+00 : f32
    %63 = vector.broadcast %cst_29 : f32 to vector<8x128xf32>
    %64 = arith.addf %63, %62 : vector<8x128xf32>
    %65 = arith.divf %63, %64 : vector<8x128xf32>
    %66 = vector.extract_strided_slice %53 {offsets = [0, 256], sizes = [8, 128], strides = [1, 1]} : vector<8x512xf32> to vector<8x128xf32>
    %67 = math.tanh %66 : vector<8x128xf32>
    %68 = vector.extract_strided_slice %53 {offsets = [0, 384], sizes = [8, 128], strides = [1, 1]} : vector<8x512xf32> to vector<8x128xf32>
    %69 = arith.negf %68 : vector<8x128xf32>
    %70 = math.exp %69 : vector<8x128xf32>
    %cst_30 = arith.constant 1.000000e+00 : f32
    %71 = vector.broadcast %cst_30 : f32 to vector<8x128xf32>
    %72 = arith.addf %71, %70 : vector<8x128xf32>
    %73 = arith.divf %71, %72 : vector<8x128xf32>
    %74 = arith.mulf %65, %42 : vector<8x128xf32>
    %75 = arith.mulf %59, %67 : vector<8x128xf32>
    %76 = arith.addf %74, %75 : vector<8x128xf32>
    %77 = math.tanh %76 : vector<8x128xf32>
    %78 = arith.mulf %73, %77 : vector<8x128xf32>
    %79 = arith.index_cast %c1_i32 : i32 to index
    %c0_31 = arith.constant 0 : index
    %c0_32 = arith.constant 0 : index
    %80 = vector.load %arg6[%79, %c0_31, %c0_32] : memref<8x8x128xf32, #tpu.memory_space<vmem>>, vector<1x8x128xf32>
    %81 = vector.shape_cast %80 : vector<1x8x128xf32> to vector<8x128xf32>
    %82 = vector.shape_cast %78 : vector<8x128xf32> to vector<1x8x128xf32>
    tpu.vector_store %arg6[%79, %c0_31, %c0_32], %82 {strides = array<i32>} : memref<8x8x128xf32, #tpu.memory_space<vmem>>, vector<1x8x128xf32>,
    %c2_i32 = arith.constant 2 : i32
    %83 = arith.index_cast %c2_i32 : i32 to index
    %c0_33 = arith.constant 0 : index
    %c0_34 = arith.constant 0 : index
    %84 = vector.load %arg7[%83, %c0_33, %c0_34] : memref<8x8x512xf32, #tpu.memory_space<vmem>>, vector<1x8x512xf32>
    %85 = vector.shape_cast %84 : vector<1x8x512xf32> to vector<8x512xf32>
    %cst_35 = arith.constant dense<0.000000e+00> : vector<8x512xf32>
    %86 = tpu.matmul %78, %12, %cst_35 {dimension_numbers = #tpu.dot_dimension_numbers<[1], [0], [0], [1], [0, 0, 1, 1], [], []>} : vector<8x128xf32>, vector<128x512xf32>, vector<8x512xf32> -> vector<8x512xf32>
    %87 = arith.addf %85, %86 : vector<8x512xf32>
    %88 = vector.extract_strided_slice %87 {offsets = [0, 0], sizes = [8, 128], strides = [1, 1]} : vector<8x512xf32> to vector<8x128xf32>
    %89 = arith.negf %88 : vector<8x128xf32>
    %90 = math.exp %89 : vector<8x128xf32>
    %cst_36 = arith.constant 1.000000e+00 : f32
    %91 = vector.broadcast %cst_36 : f32 to vector<8x128xf32>
    %92 = arith.addf %91, %90 : vector<8x128xf32>
    %93 = arith.divf %91, %92 : vector<8x128xf32>
    %94 = vector.extract_strided_slice %87 {offsets = [0, 128], sizes = [8, 128], strides = [1, 1]} : vector<8x512xf32> to vector<8x128xf32>
    %95 = arith.negf %94 : vector<8x128xf32>
    %96 = math.exp %95 : vector<8x128xf32>
    %cst_37 = arith.constant 1.000000e+00 : f32
    %97 = vector.broadcast %cst_37 : f32 to vector<8x128xf32>
    %98 = arith.addf %97, %96 : vector<8x128xf32>
    %99 = arith.divf %97, %98 : vector<8x128xf32>
    %100 = vector.extract_strided_slice %87 {offsets = [0, 256], sizes = [8, 128], strides = [1, 1]} : vector<8x512xf32> to vector<8x128xf32>
    %101 = math.tanh %100 : vector<8x128xf32>
    %102 = vector.extract_strided_slice %87 {offsets = [0, 384], sizes = [8, 128], strides = [1, 1]} : vector<8x512xf32> to vector<8x128xf32>
    %103 = arith.negf %102 : vector<8x128xf32>
    %104 = math.exp %103 : vector<8x128xf32>
    %cst_38 = arith.constant 1.000000e+00 : f32
    %105 = vector.broadcast %cst_38 : f32 to vector<8x128xf32>
    %106 = arith.addf %105, %104 : vector<8x128xf32>
    %107 = arith.divf %105, %106 : vector<8x128xf32>
    %108 = arith.mulf %99, %76 : vector<8x128xf32>
    %109 = arith.mulf %93, %101 : vector<8x128xf32>
    %110 = arith.addf %108, %109 : vector<8x128xf32>
    %111 = math.tanh %110 : vector<8x128xf32>
    %112 = arith.mulf %107, %111 : vector<8x128xf32>
    %113 = arith.index_cast %c2_i32 : i32 to index
    %c0_39 = arith.constant 0 : index
    %c0_40 = arith.constant 0 : index
    %114 = vector.load %arg6[%113, %c0_39, %c0_40] : memref<8x8x128xf32, #tpu.memory_space<vmem>>, vector<1x8x128xf32>
    %115 = vector.shape_cast %114 : vector<1x8x128xf32> to vector<8x128xf32>
    %116 = vector.shape_cast %112 : vector<8x128xf32> to vector<1x8x128xf32>
    tpu.vector_store %arg6[%113, %c0_39, %c0_40], %116 {strides = array<i32>} : memref<8x8x128xf32, #tpu.memory_space<vmem>>, vector<1x8x128xf32>,
    %c3_i32 = arith.constant 3 : i32
    %117 = arith.index_cast %c3_i32 : i32 to index
    %c0_41 = arith.constant 0 : index
    %c0_42 = arith.constant 0 : index
    %118 = vector.load %arg7[%117, %c0_41, %c0_42] : memref<8x8x512xf32, #tpu.memory_space<vmem>>, vector<1x8x512xf32>
    %119 = vector.shape_cast %118 : vector<1x8x512xf32> to vector<8x512xf32>
    %cst_43 = arith.constant dense<0.000000e+00> : vector<8x512xf32>
    %120 = tpu.matmul %112, %12, %cst_43 {dimension_numbers = #tpu.dot_dimension_numbers<[1], [0], [0], [1], [0, 0, 1, 1], [], []>} : vector<8x128xf32>, vector<128x512xf32>, vector<8x512xf32> -> vector<8x512xf32>
    %121 = arith.addf %119, %120 : vector<8x512xf32>
    %122 = vector.extract_strided_slice %121 {offsets = [0, 0], sizes = [8, 128], strides = [1, 1]} : vector<8x512xf32> to vector<8x128xf32>
    %123 = arith.negf %122 : vector<8x128xf32>
    %124 = math.exp %123 : vector<8x128xf32>
    %cst_44 = arith.constant 1.000000e+00 : f32
    %125 = vector.broadcast %cst_44 : f32 to vector<8x128xf32>
    %126 = arith.addf %125, %124 : vector<8x128xf32>
    %127 = arith.divf %125, %126 : vector<8x128xf32>
    %128 = vector.extract_strided_slice %121 {offsets = [0, 128], sizes = [8, 128], strides = [1, 1]} : vector<8x512xf32> to vector<8x128xf32>
    %129 = arith.negf %128 : vector<8x128xf32>
    %130 = math.exp %129 : vector<8x128xf32>
    %cst_45 = arith.constant 1.000000e+00 : f32
    %131 = vector.broadcast %cst_45 : f32 to vector<8x128xf32>
    %132 = arith.addf %131, %130 : vector<8x128xf32>
    %133 = arith.divf %131, %132 : vector<8x128xf32>
    %134 = vector.extract_strided_slice %121 {offsets = [0, 256], sizes = [8, 128], strides = [1, 1]} : vector<8x512xf32> to vector<8x128xf32>
    %135 = math.tanh %134 : vector<8x128xf32>
    %136 = vector.extract_strided_slice %121 {offsets = [0, 384], sizes = [8, 128], strides = [1, 1]} : vector<8x512xf32> to vector<8x128xf32>
    %137 = arith.negf %136 : vector<8x128xf32>
    %138 = math.exp %137 : vector<8x128xf32>
    %cst_46 = arith.constant 1.000000e+00 : f32
    %139 = vector.broadcast %cst_46 : f32 to vector<8x128xf32>
    %140 = arith.addf %139, %138 : vector<8x128xf32>
    %141 = arith.divf %139, %140 : vector<8x128xf32>
    %142 = arith.mulf %133, %110 : vector<8x128xf32>
    %143 = arith.mulf %127, %135 : vector<8x128xf32>
    %144 = arith.addf %142, %143 : vector<8x128xf32>
    %145 = math.tanh %144 : vector<8x128xf32>
    %146 = arith.mulf %141, %145 : vector<8x128xf32>
    %147 = arith.index_cast %c3_i32 : i32 to index
    %c0_47 = arith.constant 0 : index
    %c0_48 = arith.constant 0 : index
    %148 = vector.load %arg6[%147, %c0_47, %c0_48] : memref<8x8x128xf32, #tpu.memory_space<vmem>>, vector<1x8x128xf32>
    %149 = vector.shape_cast %148 : vector<1x8x128xf32> to vector<8x128xf32>
    %150 = vector.shape_cast %146 : vector<8x128xf32> to vector<1x8x128xf32>
    tpu.vector_store %arg6[%147, %c0_47, %c0_48], %150 {strides = array<i32>} : memref<8x8x128xf32, #tpu.memory_space<vmem>>, vector<1x8x128xf32>,
    %c4_i32 = arith.constant 4 : i32
    %151 = arith.index_cast %c4_i32 : i32 to index
    %c0_49 = arith.constant 0 : index
    %c0_50 = arith.constant 0 : index
    %152 = vector.load %arg7[%151, %c0_49, %c0_50] : memref<8x8x512xf32, #tpu.memory_space<vmem>>, vector<1x8x512xf32>
    %153 = vector.shape_cast %152 : vector<1x8x512xf32> to vector<8x512xf32>
    %cst_51 = arith.constant dense<0.000000e+00> : vector<8x512xf32>
    %154 = tpu.matmul %146, %12, %cst_51 {dimension_numbers = #tpu.dot_dimension_numbers<[1], [0], [0], [1], [0, 0, 1, 1], [], []>} : vector<8x128xf32>, vector<128x512xf32>, vector<8x512xf32> -> vector<8x512xf32>
    %155 = arith.addf %153, %154 : vector<8x512xf32>
    %156 = vector.extract_strided_slice %155 {offsets = [0, 0], sizes = [8, 128], strides = [1, 1]} : vector<8x512xf32> to vector<8x128xf32>
    %157 = arith.negf %156 : vector<8x128xf32>
    %158 = math.exp %157 : vector<8x128xf32>
    %cst_52 = arith.constant 1.000000e+00 : f32
    %159 = vector.broadcast %cst_52 : f32 to vector<8x128xf32>
    %160 = arith.addf %159, %158 : vector<8x128xf32>
    %161 = arith.divf %159, %160 : vector<8x128xf32>
    %162 = vector.extract_strided_slice %155 {offsets = [0, 128], sizes = [8, 128], strides = [1, 1]} : vector<8x512xf32> to vector<8x128xf32>
    %163 = arith.negf %162 : vector<8x128xf32>
    %164 = math.exp %163 : vector<8x128xf32>
    %cst_53 = arith.constant 1.000000e+00 : f32
    %165 = vector.broadcast %cst_53 : f32 to vector<8x128xf32>
    %166 = arith.addf %165, %164 : vector<8x128xf32>
    %167 = arith.divf %165, %166 : vector<8x128xf32>
    %168 = vector.extract_strided_slice %155 {offsets = [0, 256], sizes = [8, 128], strides = [1, 1]} : vector<8x512xf32> to vector<8x128xf32>
    %169 = math.tanh %168 : vector<8x128xf32>
    %170 = vector.extract_strided_slice %155 {offsets = [0, 384], sizes = [8, 128], strides = [1, 1]} : vector<8x512xf32> to vector<8x128xf32>
    %171 = arith.negf %170 : vector<8x128xf32>
    %172 = math.exp %171 : vector<8x128xf32>
    %cst_54 = arith.constant 1.000000e+00 : f32
    %173 = vector.broadcast %cst_54 : f32 to vector<8x128xf32>
    %174 = arith.addf %173, %172 : vector<8x128xf32>
    %175 = arith.divf %173, %174 : vector<8x128xf32>
    %176 = arith.mulf %167, %144 : vector<8x128xf32>
    %177 = arith.mulf %161, %169 : vector<8x128xf32>
    %178 = arith.addf %176, %177 : vector<8x128xf32>
    %179 = math.tanh %178 : vector<8x128xf32>
    %180 = arith.mulf %175, %179 : vector<8x128xf32>
    %181 = arith.index_cast %c4_i32 : i32 to index
    %c0_55 = arith.constant 0 : index
    %c0_56 = arith.constant 0 : index
    %182 = vector.load %arg6[%181, %c0_55, %c0_56] : memref<8x8x128xf32, #tpu.memory_space<vmem>>, vector<1x8x128xf32>
    %183 = vector.shape_cast %182 : vector<1x8x128xf32> to vector<8x128xf32>
    %184 = vector.shape_cast %180 : vector<8x128xf32> to vector<1x8x128xf32>
    tpu.vector_store %arg6[%181, %c0_55, %c0_56], %184 {strides = array<i32>} : memref<8x8x128xf32, #tpu.memory_space<vmem>>, vector<1x8x128xf32>,
    %c5_i32 = arith.constant 5 : i32
    %185 = arith.index_cast %c5_i32 : i32 to index
    %c0_57 = arith.constant 0 : index
    %c0_58 = arith.constant 0 : index
    %186 = vector.load %arg7[%185, %c0_57, %c0_58] : memref<8x8x512xf32, #tpu.memory_space<vmem>>, vector<1x8x512xf32>
    %187 = vector.shape_cast %186 : vector<1x8x512xf32> to vector<8x512xf32>
    %cst_59 = arith.constant dense<0.000000e+00> : vector<8x512xf32>
    %188 = tpu.matmul %180, %12, %cst_59 {dimension_numbers = #tpu.dot_dimension_numbers<[1], [0], [0], [1], [0, 0, 1, 1], [], []>} : vector<8x128xf32>, vector<128x512xf32>, vector<8x512xf32> -> vector<8x512xf32>
    %189 = arith.addf %187, %188 : vector<8x512xf32>
    %190 = vector.extract_strided_slice %189 {offsets = [0, 0], sizes = [8, 128], strides = [1, 1]} : vector<8x512xf32> to vector<8x128xf32>
    %191 = arith.negf %190 : vector<8x128xf32>
    %192 = math.exp %191 : vector<8x128xf32>
    %cst_60 = arith.constant 1.000000e+00 : f32
    %193 = vector.broadcast %cst_60 : f32 to vector<8x128xf32>
    %194 = arith.addf %193, %192 : vector<8x128xf32>
    %195 = arith.divf %193, %194 : vector<8x128xf32>
    %196 = vector.extract_strided_slice %189 {offsets = [0, 128], sizes = [8, 128], strides = [1, 1]} : vector<8x512xf32> to vector<8x128xf32>
    %197 = arith.negf %196 : vector<8x128xf32>
    %198 = math.exp %197 : vector<8x128xf32>
    %cst_61 = arith.constant 1.000000e+00 : f32
    %199 = vector.broadcast %cst_61 : f32 to vector<8x128xf32>
    %200 = arith.addf %199, %198 : vector<8x128xf32>
    %201 = arith.divf %199, %200 : vector<8x128xf32>
    %202 = vector.extract_strided_slice %189 {offsets = [0, 256], sizes = [8, 128], strides = [1, 1]} : vector<8x512xf32> to vector<8x128xf32>
    %203 = math.tanh %202 : vector<8x128xf32>
    %204 = vector.extract_strided_slice %189 {offsets = [0, 384], sizes = [8, 128], strides = [1, 1]} : vector<8x512xf32> to vector<8x128xf32>
    %205 = arith.negf %204 : vector<8x128xf32>
    %206 = math.exp %205 : vector<8x128xf32>
    %cst_62 = arith.constant 1.000000e+00 : f32
    %207 = vector.broadcast %cst_62 : f32 to vector<8x128xf32>
    %208 = arith.addf %207, %206 : vector<8x128xf32>
    %209 = arith.divf %207, %208 : vector<8x128xf32>
    %210 = arith.mulf %201, %178 : vector<8x128xf32>
    %211 = arith.mulf %195, %203 : vector<8x128xf32>
    %212 = arith.addf %210, %211 : vector<8x128xf32>
    %213 = math.tanh %212 : vector<8x128xf32>
    %214 = arith.mulf %209, %213 : vector<8x128xf32>
    %215 = arith.index_cast %c5_i32 : i32 to index
    %c0_63 = arith.constant 0 : index
    %c0_64 = arith.constant 0 : index
    %216 = vector.load %arg6[%215, %c0_63, %c0_64] : memref<8x8x128xf32, #tpu.memory_space<vmem>>, vector<1x8x128xf32>
    %217 = vector.shape_cast %216 : vector<1x8x128xf32> to vector<8x128xf32>
    %218 = vector.shape_cast %214 : vector<8x128xf32> to vector<1x8x128xf32>
    tpu.vector_store %arg6[%215, %c0_63, %c0_64], %218 {strides = array<i32>} : memref<8x8x128xf32, #tpu.memory_space<vmem>>, vector<1x8x128xf32>,
    %c6_i32 = arith.constant 6 : i32
    %219 = arith.index_cast %c6_i32 : i32 to index
    %c0_65 = arith.constant 0 : index
    %c0_66 = arith.constant 0 : index
    %220 = vector.load %arg7[%219, %c0_65, %c0_66] : memref<8x8x512xf32, #tpu.memory_space<vmem>>, vector<1x8x512xf32>
    %221 = vector.shape_cast %220 : vector<1x8x512xf32> to vector<8x512xf32>
    %cst_67 = arith.constant dense<0.000000e+00> : vector<8x512xf32>
    %222 = tpu.matmul %214, %12, %cst_67 {dimension_numbers = #tpu.dot_dimension_numbers<[1], [0], [0], [1], [0, 0, 1, 1], [], []>} : vector<8x128xf32>, vector<128x512xf32>, vector<8x512xf32> -> vector<8x512xf32>
    %223 = arith.addf %221, %222 : vector<8x512xf32>
    %224 = vector.extract_strided_slice %223 {offsets = [0, 0], sizes = [8, 128], strides = [1, 1]} : vector<8x512xf32> to vector<8x128xf32>
    %225 = arith.negf %224 : vector<8x128xf32>
    %226 = math.exp %225 : vector<8x128xf32>
    %cst_68 = arith.constant 1.000000e+00 : f32
    %227 = vector.broadcast %cst_68 : f32 to vector<8x128xf32>
    %228 = arith.addf %227, %226 : vector<8x128xf32>
    %229 = arith.divf %227, %228 : vector<8x128xf32>
    %230 = vector.extract_strided_slice %223 {offsets = [0, 128], sizes = [8, 128], strides = [1, 1]} : vector<8x512xf32> to vector<8x128xf32>
    %231 = arith.negf %230 : vector<8x128xf32>
    %232 = math.exp %231 : vector<8x128xf32>
    %cst_69 = arith.constant 1.000000e+00 : f32
    %233 = vector.broadcast %cst_69 : f32 to vector<8x128xf32>
    %234 = arith.addf %233, %232 : vector<8x128xf32>
    %235 = arith.divf %233, %234 : vector<8x128xf32>
    %236 = vector.extract_strided_slice %223 {offsets = [0, 256], sizes = [8, 128], strides = [1, 1]} : vector<8x512xf32> to vector<8x128xf32>
    %237 = math.tanh %236 : vector<8x128xf32>
    %238 = vector.extract_strided_slice %223 {offsets = [0, 384], sizes = [8, 128], strides = [1, 1]} : vector<8x512xf32> to vector<8x128xf32>
    %239 = arith.negf %238 : vector<8x128xf32>
    %240 = math.exp %239 : vector<8x128xf32>
    %cst_70 = arith.constant 1.000000e+00 : f32
    %241 = vector.broadcast %cst_70 : f32 to vector<8x128xf32>
    %242 = arith.addf %241, %240 : vector<8x128xf32>
    %243 = arith.divf %241, %242 : vector<8x128xf32>
    %244 = arith.mulf %235, %212 : vector<8x128xf32>
    %245 = arith.mulf %229, %237 : vector<8x128xf32>
    %246 = arith.addf %244, %245 : vector<8x128xf32>
    %247 = math.tanh %246 : vector<8x128xf32>
    %248 = arith.mulf %243, %247 : vector<8x128xf32>
    %249 = arith.index_cast %c6_i32 : i32 to index
    %c0_71 = arith.constant 0 : index
    %c0_72 = arith.constant 0 : index
    %250 = vector.load %arg6[%249, %c0_71, %c0_72] : memref<8x8x128xf32, #tpu.memory_space<vmem>>, vector<1x8x128xf32>
    %251 = vector.shape_cast %250 : vector<1x8x128xf32> to vector<8x128xf32>
    %252 = vector.shape_cast %248 : vector<8x128xf32> to vector<1x8x128xf32>
    tpu.vector_store %arg6[%249, %c0_71, %c0_72], %252 {strides = array<i32>} : memref<8x8x128xf32, #tpu.memory_space<vmem>>, vector<1x8x128xf32>,
    %c7_i32 = arith.constant 7 : i32
    %253 = arith.index_cast %c7_i32 : i32 to index
    %c0_73 = arith.constant 0 : index
    %c0_74 = arith.constant 0 : index
    %254 = vector.load %arg7[%253, %c0_73, %c0_74] : memref<8x8x512xf32, #tpu.memory_space<vmem>>, vector<1x8x512xf32>
    %255 = vector.shape_cast %254 : vector<1x8x512xf32> to vector<8x512xf32>
    %cst_75 = arith.constant dense<0.000000e+00> : vector<8x512xf32>
    %256 = tpu.matmul %248, %12, %cst_75 {dimension_numbers = #tpu.dot_dimension_numbers<[1], [0], [0], [1], [0, 0, 1, 1], [], []>} : vector<8x128xf32>, vector<128x512xf32>, vector<8x512xf32> -> vector<8x512xf32>
    %257 = arith.addf %255, %256 : vector<8x512xf32>
    %258 = vector.extract_strided_slice %257 {offsets = [0, 0], sizes = [8, 128], strides = [1, 1]} : vector<8x512xf32> to vector<8x128xf32>
    %259 = arith.negf %258 : vector<8x128xf32>
    %260 = math.exp %259 : vector<8x128xf32>
    %cst_76 = arith.constant 1.000000e+00 : f32
    %261 = vector.broadcast %cst_76 : f32 to vector<8x128xf32>
    %262 = arith.addf %261, %260 : vector<8x128xf32>
    %263 = arith.divf %261, %262 : vector<8x128xf32>
    %264 = vector.extract_strided_slice %257 {offsets = [0, 128], sizes = [8, 128], strides = [1, 1]} : vector<8x512xf32> to vector<8x128xf32>
    %265 = arith.negf %264 : vector<8x128xf32>
    %266 = math.exp %265 : vector<8x128xf32>
    %cst_77 = arith.constant 1.000000e+00 : f32
    %267 = vector.broadcast %cst_77 : f32 to vector<8x128xf32>
    %268 = arith.addf %267, %266 : vector<8x128xf32>
    %269 = arith.divf %267, %268 : vector<8x128xf32>
    %270 = vector.extract_strided_slice %257 {offsets = [0, 256], sizes = [8, 128], strides = [1, 1]} : vector<8x512xf32> to vector<8x128xf32>
    %271 = math.tanh %270 : vector<8x128xf32>
    %272 = vector.extract_strided_slice %257 {offsets = [0, 384], sizes = [8, 128], strides = [1, 1]} : vector<8x512xf32> to vector<8x128xf32>
    %273 = arith.negf %272 : vector<8x128xf32>
    %274 = math.exp %273 : vector<8x128xf32>
    %cst_78 = arith.constant 1.000000e+00 : f32
    %275 = vector.broadcast %cst_78 : f32 to vector<8x128xf32>
    %276 = arith.addf %275, %274 : vector<8x128xf32>
    %277 = arith.divf %275, %276 : vector<8x128xf32>
    %278 = arith.mulf %269, %246 : vector<8x128xf32>
    %279 = arith.mulf %263, %271 : vector<8x128xf32>
    %280 = arith.addf %278, %279 : vector<8x128xf32>
    %281 = math.tanh %280 : vector<8x128xf32>
    %282 = arith.mulf %277, %281 : vector<8x128xf32>
    %283 = arith.index_cast %c7_i32 : i32 to index
    %c0_79 = arith.constant 0 : index
    %c0_80 = arith.constant 0 : index
    %284 = vector.load %arg6[%283, %c0_79, %c0_80] : memref<8x8x128xf32, #tpu.memory_space<vmem>>, vector<1x8x128xf32>
    %285 = vector.shape_cast %284 : vector<1x8x128xf32> to vector<8x128xf32>
    %286 = vector.shape_cast %282 : vector<8x128xf32> to vector<1x8x128xf32>
    tpu.vector_store %arg6[%283, %c0_79, %c0_80], %286 {strides = array<i32>} : memref<8x8x128xf32, #tpu.memory_space<vmem>>, vector<1x8x128xf32>,
    %c8_i32 = arith.constant 8 : i32
    %c0_81 = arith.constant 0 : index
    %c0_82 = arith.constant 0 : index
    %287 = vector.load %arg8[%c0_81, %c0_82] : memref<8x128xf32, #tpu.memory_space<vmem>>, vector<8x128xf32>
    tpu.vector_store %arg8[%c0_81, %c0_82], %282 {strides = array<i32>} : memref<8x128xf32, #tpu.memory_space<vmem>>, vector<8x128xf32>,
    %c0_83 = arith.constant 0 : index
    %c0_84 = arith.constant 0 : index
    %288 = vector.load %arg9[%c0_83, %c0_84] : memref<8x128xf32, #tpu.memory_space<vmem>>, vector<8x128xf32>
    tpu.vector_store %arg9[%c0_83, %c0_84], %280 {strides = array<i32>} : memref<8x128xf32, #tpu.memory_space<vmem>>, vector<8x128xf32>,
    return
  }
  func.func @transform_0(%arg0: i32, %arg1: i32) -> (i32, i32, i32) {
    %c0_i32 = arith.constant 0 : i32
    %c0_i32_0 = arith.constant 0 : i32
    return %arg1, %arg0, %c0_i32 : i32, i32, i32
  }
  func.func @transform_1(%arg0: i32, %arg1: i32) -> (i32, i32) {
    %c0_i32 = arith.constant 0 : i32
    %c0_i32_0 = arith.constant 0 : i32
    %c0_i32_1 = arith.constant 0 : i32
    return %c0_i32, %c0_i32_0 : i32, i32
  }
  func.func @transform_2(%arg0: i32, %arg1: i32) -> (i32, i32) {
    %c0_i32 = arith.constant 0 : i32
    %c0_i32_0 = arith.constant 0 : i32
    %c0_i32_1 = arith.constant 0 : i32
    return %c0_i32, %c0_i32_0 : i32, i32
  }
  func.func @transform_3(%arg0: i32, %arg1: i32) -> (i32, i32) {
    %c0_i32 = arith.constant 0 : i32
    %c0_i32_0 = arith.constant 0 : i32
    %c0_i32_1 = arith.constant 0 : i32
    return %c0_i32, %c0_i32_0 : i32, i32
  }
  func.func @transform_4(%arg0: i32, %arg1: i32) -> (i32, i32, i32) {
    %c0_i32 = arith.constant 0 : i32
    %c0_i32_0 = arith.constant 0 : i32
    return %arg1, %arg0, %c0_i32 : i32, i32, i32
  }
}

</mosaic_0001>

<llo_original>
// kernel: tpu_custom_call.1
$region0: #{tpu_custom_call.1}
  #allocation0 [shape = 'u32[]', space=smem, size = 0x4, offset = 0x4, fixed_abs, tag = 'smem constant byte address 0x4 - core index']
  #allocation1 [shape = 'u32[144,128]{1,0:T(1,128)}', space=vmem, size = 0x12000, scoped, tag = 'internal scratch']
  %s0 = inlined_call_operand.hbm [shape: f32[8,128], index: 0, kind: input, shape index: {}]
  %s1 = inlined_call_operand.hbm [shape: f32[8,128], index: 1, kind: output, shape index: {}]
  %s2 = sld [smem:[#allocation0]]
  $region41: #{tpu_custom_call.1} parent=0
    _
  %s4 = ssub.s32 1, %s2
  %s5 = scalar_select 0, %s4, %s2
  $region1: #{tpu_custom_call.1} parent=0
    #allocation2 [shape = 'u8[4096]{0}', space=vmem, size = 0x1000, scoped, tag = 'input window, operand 0, single buffered']
    #allocation3 [shape = 's32[2]{0}', space=sflag, size = 0x8, scoped, tag = 'scoped memory for tpu_custom_call.1']
    #allocation4 [shape = 's32[2]{0}', space=sflag, size = 0x8, scoped, tag = 'scoped memory for tpu_custom_call.1']
    #allocation5 [shape = 'u8[4096]{0}', space=vmem, size = 0x1000, scoped, tag = 'output window, operand 0, single buffered']
    %6 = vsyncpa [#allocation3], 0
    %7 = vsyncpa [#allocation4], 0
    loop: start=0, step=1, limit=4
    $region2: #{tpu_custom_call.1} parent=1 // loop_pre_header
      _
    $region3: #{tpu_custom_call.1} parent=1 // loop_header
      %s9 = sphi 0, %s13
      %p10 = scmp.ge.s32.totalorder %s9, 4
      %s17 = sphi 0, %s17
      %s19 = sphi 0, %s17
      %s20 = sphi 0, %s19
      %s34 = sphi 0, %s20
      %s38 = sphi 0, %s38
      %s40 = sphi 0, %s38
      %s41 = sphi 0, %s40
      %s55 = sphi 0, %s41
    $region4: #{tpu_custom_call.1} parent=1 // loop_header_branch
      %12 = sbr.rel (%p10) target = $region8
    $region5: #{tpu_custom_call.1} parent=1 // loop_body
      %s14 = ssub.s32 %s9, 1
      %s15 = ssub.s32 %s9, 2
      %s16 = sadd.s32 %s9, 1
      %s18 = sadd.s32 %s17, 1
      %p21 = scmp.eq.s32.totalorder %s9, 1
      %p22 = scmp.ne.s32.totalorder %s17, %s19
      %p23 = scmp.eq.s32.totalorder %s9, 0
      %p24 = por %p22, %p23
      %p25 = scmp.ne.s32.totalorder %s17, %s19
      %p26 = scmp.eq.s32.totalorder %s14, 1
      %p27 = por %p25, %p26
      %p28 = scmp.ne.s32.totalorder %s19, %s20
      %p29 = scmp.eq.s32.totalorder %s14, 0
      %p30 = por %p28, %p29
      %p31 = scmp.ne.s32.totalorder %s19, %s20
      %p32 = scmp.eq.s32.totalorder %s15, 1
      %p33 = por %p31, %p32
      %p35 = scmp.ne.s32.totalorder %s20, %s34
      %p36 = scmp.eq.s32.totalorder %s15, 0
      %p37 = por %p35, %p36
      %s39 = sadd.s32 %s38, 1
      %p42 = scmp.eq.s32.totalorder %s9, 1
      %p43 = scmp.ne.s32.totalorder %s38, %s40
      %p44 = scmp.eq.s32.totalorder %s9, 0
      %p45 = por %p43, %p44
      %p46 = scmp.ne.s32.totalorder %s38, %s40
      %p47 = scmp.eq.s32.totalorder %s14, 1
      %p48 = por %p46, %p47
      %p49 = scmp.ne.s32.totalorder %s40, %s41
      %p50 = scmp.eq.s32.totalorder %s14, 0
      %p51 = por %p49, %p50
      %p52 = scmp.ne.s32.totalorder %s40, %s41
      %p53 = scmp.eq.s32.totalorder %s15, 1
      %p54 = por %p52, %p53
      %p56 = scmp.ne.s32.totalorder %s41, %s55
      %p57 = scmp.eq.s32.totalorder %s15, 0
      %p58 = por %p56, %p57
      %p59 = scmp.le.s32.totalorder 1, %s9
      %p60 = scmp.lt.s32.totalorder %s9, 3
      %p61 = pnand %p59, %p60
      %p62 = pneg %p61
      // Predicated region
      $region9: #{tpu_custom_call.1} parent=5 // pred_check
        _
      $region10: #{tpu_custom_call.1} parent=5 // pred_check_branch
        %64 = sbr.rel (%p61) target = $region12
      $region11: #{tpu_custom_call.1} parent=5 // pred_region
        %s65 = ssub.s32 %s9, 1
        // Predicated region
        $region13: #{tpu_custom_call.1} parent=11 // pred_check
          %p66 = pneg %p30
        $region14: #{tpu_custom_call.1} parent=11 // pred_check_branch
          %68 = sbr.rel (%p66) target = $region16
        $region15: #{tpu_custom_call.1} parent=11 // pred_region
          %s70 = ssub.s32 128, 128
          %71 = vsyncadd [#allocation3], %s70
          %s73 = sshll.u32 [#allocation2], 4
          %s74 = int_to_ptr.vmem [resolvable:$true] %s73
          %76 = dma.hbm_to_vmem [thread:$0]  %s0, 128, %s74, [#allocation3]
        $region16: #{tpu_custom_call.1} parent=11 // pred_fallthru
          _
      $region12: #{tpu_custom_call.1} parent=5 // pred_fallthru
        _
      %p77 = scmp.lt.s32.totalorder %s9, 2
      // Predicated region
      $region17: #{tpu_custom_call.1} parent=5 // pred_check
        %p78 = pneg %p77
      $region18: #{tpu_custom_call.1} parent=5 // pred_check_branch
        %80 = sbr.rel (%p78) target = $region20
      $region19: #{tpu_custom_call.1} parent=5 // pred_region
        _
      $region20: #{tpu_custom_call.1} parent=5 // pred_fallthru
        _
      %p81 = scmp.le.s32.totalorder 1, %s9
      %p82 = scmp.lt.s32.totalorder %s9, 3
      %p83 = pnand %p81, %p82
      %p84 = pneg %p83
      // Predicated region
      $region21: #{tpu_custom_call.1} parent=5 // pred_check
        _
      $region22: #{tpu_custom_call.1} parent=5 // pred_check_branch
        %86 = sbr.rel (%p83) target = $region24
      $region23: #{tpu_custom_call.1} parent=5 // pred_region
        %s87 = ssub.s32 %s9, 1
        // Predicated region
        $region25: #{tpu_custom_call.1} parent=23 // pred_check
          %p88 = pneg %p30
        $region26: #{tpu_custom_call.1} parent=23 // pred_check_branch
          %90 = sbr.rel (%p88) target = $region28
        $region27: #{tpu_custom_call.1} parent=23 // pred_region
          %91 = dma.done [#allocation3], 128
        $region28: #{tpu_custom_call.1} parent=23 // pred_fallthru
          _
        %p92 = pneg %p30
        %p93 = pneg %p27
        %p94 = pneg %p51
        %p95 = pneg %p48
        %v96 = vld [vmem:[#allocation2] sm:$0xff]
        %v97 = vadd.f32 %v96, 1.0
        %98 = vst [vmem:[#allocation5] sm:$0xff] %v97
        // Predicated region
        $region29: #{tpu_custom_call.1} parent=23 // pred_check
          %p99 = pneg %p48
        $region30: #{tpu_custom_call.1} parent=23 // pred_check_branch
          %101 = sbr.rel (%p99) target = $region32
        $region31: #{tpu_custom_call.1} parent=23 // pred_region
          %s103 = ssub.s32 128, 128
          %104 = vsyncadd [#allocation4], %s103
          %s106 = sshll.u32 [#allocation5], 4
          %s107 = int_to_ptr.vmem [resolvable:$true] %s106
          %109 = dma.vmem_to_hbm [thread:$0]  %s107, 128, %s1, [#allocation4]
        $region32: #{tpu_custom_call.1} parent=23 // pred_fallthru
          _
        // Predicated region
        $region33: #{tpu_custom_call.1} parent=23 // pred_check
          %p110 = pneg %p48
        $region34: #{tpu_custom_call.1} parent=23 // pred_check_branch
          %112 = sbr.rel (%p110) target = $region36
        $region35: #{tpu_custom_call.1} parent=23 // pred_region
          %113 = dma.done [#allocation4], 128
        $region36: #{tpu_custom_call.1} parent=23 // pred_fallthru
          _
      $region24: #{tpu_custom_call.1} parent=5 // pred_fallthru
        _
      %p114 = scmp.le.s32.totalorder 2, %s9
      // Predicated region
      $region37: #{tpu_custom_call.1} parent=5 // pred_check
        %p115 = pneg %p114
      $region38: #{tpu_custom_call.1} parent=5 // pred_check_branch
        %117 = sbr.rel (%p115) target = $region40
      $region39: #{tpu_custom_call.1} parent=5 // pred_region
        %s118 = ssub.s32 %s9, 2
      $region40: #{tpu_custom_call.1} parent=5 // pred_fallthru
        _
    $region6: #{tpu_custom_call.1} parent=1 // loop_footer
      %s13 = sadd.s32 1, %s9
    $region7: #{tpu_custom_call.1} parent=1 // loop_footer_branch
      %8 = sbr.rel target = $region3
    $region8: #{tpu_custom_call.1} parent=1 // loop_exit
      _
    %119 = vsyncpa [#allocation3], 1
    %s120 = scalar_lea.sflag [#allocation3], 1
    %121 = vsyncpa %s120, 1
    %122 = vsyncpa [#allocation4], 1
    %s123 = scalar_lea.sflag [#allocation4], 1
    %124 = vsyncpa %s123, 1

// kernel: _rnn_forward_impl.3
$region0: #{_rnn_forward_impl.3}
  #allocation0 [shape = 'u32[]', space=smem, size = 0x4, offset = 0x4, fixed_abs, tag = 'smem constant byte address 0x4 - core index']
  #allocation1 [shape = 'u32[144,128]{1,0:T(1,128)}', space=vmem, size = 0x12000, scoped, tag = 'internal scratch']
  #allocation2 [shape = 'f32[8,8,512]{2,1,0:T(8,128)}', space=vmem, size = 0x20000, scoped, tag = 'scratch operand']
  #allocation3 [shape = 'f32[8,128]{1,0:T(8,128)}', space=vmem, size = 0x1000, scoped, tag = 'scratch operand']
  #allocation4 [shape = 'f32[8,128]{1,0:T(8,128)}', space=vmem, size = 0x1000, scoped, tag = 'scratch operand']
  %s0 = inlined_call_operand.vmem [shape: f32[8,8,128], index: 0, kind: input, shape index: {}]
  %s1 = inlined_call_operand.vmem [shape: f32[128,512], index: 1, kind: input, shape index: {}]
  %s2 = inlined_call_operand.vmem [shape: f32[128,512], index: 2, kind: input, shape index: {}]
  %s3 = inlined_call_operand.vmem [shape: f32[1,512], index: 3, kind: input, shape index: {}]
  %s4 = inlined_call_operand.vmem [shape: f32[128,128], index: 4, kind: input, shape index: {}]
  %s5 = inlined_call_operand.vmem [shape: f32[1,128], index: 5, kind: input, shape index: {}]
  %s6 = inlined_call_operand.vmem [shape: f32[8,128], index: 6, kind: output, shape index: {}]
  %s7 = sld [smem:[#allocation0]]
  $region42: #{_rnn_forward_impl.3} parent=0
    _
  %s9 = ssub.s32 1, %s7
  %s10 = scalar_select 0, %s9, %s7
  // Predicated region
  $region2: #{_rnn_forward_impl.3} parent=0 // pred_check
    _
  $region3: #{_rnn_forward_impl.3} parent=0 // pred_check_branch
    %12 = sbr.rel (0) target = $region5
  $region4: #{_rnn_forward_impl.3} parent=0 // pred_region
    _
  $region5: #{_rnn_forward_impl.3} parent=0 // pred_fallthru
    _
  // Predicated region
  $region6: #{_rnn_forward_impl.3} parent=0 // pred_check
    _
  $region7: #{_rnn_forward_impl.3} parent=0 // pred_check_branch
    %14 = sbr.rel (0) target = $region9
  $region8: #{_rnn_forward_impl.3} parent=0 // pred_region
    _
  $region9: #{_rnn_forward_impl.3} parent=0 // pred_fallthru
    _
  // Predicated region
  $region10: #{_rnn_forward_impl.3} parent=0 // pred_check
    _
  $region11: #{_rnn_forward_impl.3} parent=0 // pred_check_branch
    %16 = sbr.rel (0) target = $region13
  $region12: #{_rnn_forward_impl.3} parent=0 // pred_region
    _
  $region13: #{_rnn_forward_impl.3} parent=0 // pred_fallthru
    _
  // Predicated region
  $region14: #{_rnn_forward_impl.3} parent=0 // pred_check
    _
  $region15: #{_rnn_forward_impl.3} parent=0 // pred_check_branch
    %18 = sbr.rel (0) target = $region17
  $region16: #{_rnn_forward_impl.3} parent=0 // pred_region
    _
  $region17: #{_rnn_forward_impl.3} parent=0 // pred_fallthru
    _
  // Predicated region
  $region18: #{_rnn_forward_impl.3} parent=0 // pred_check
    _
  $region19: #{_rnn_forward_impl.3} parent=0 // pred_check_branch
    %20 = sbr.rel (0) target = $region21
  $region20: #{_rnn_forward_impl.3} parent=0 // pred_region
    _
  $region21: #{_rnn_forward_impl.3} parent=0 // pred_fallthru
    _
  // Predicated region
  $region22: #{_rnn_forward_impl.3} parent=0 // pred_check
    _
  $region23: #{_rnn_forward_impl.3} parent=0 // pred_check_branch
    %22 = sbr.rel (0) target = $region25
  $region24: #{_rnn_forward_impl.3} parent=0 // pred_region
    _
  $region25: #{_rnn_forward_impl.3} parent=0 // pred_fallthru
    _
  %p23 = scmp.eq.s32.totalorder 0, 0
  // Predicated region
  $region26: #{_rnn_forward_impl.3} parent=0 // pred_check
    %p24 = pneg %p23
  $region27: #{_rnn_forward_impl.3} parent=0 // pred_check_branch
    %26 = sbr.rel (%p24) target = $region29
  $region28: #{_rnn_forward_impl.3} parent=0 // pred_region
    %27 = vst [vmem:[#allocation3] sm:$0xff] 0.0
    %28 = vst [vmem:[#allocation4] sm:$0xff] 0.0
    %29 = vst [vmem:[%s6] sm:$0xff] 0.0
  $region29: #{_rnn_forward_impl.3} parent=0 // pred_fallthru
    _
  %v30 = vld [vmem:[%s0] sm:$0xff]
  %v31 = vld [vmem:[%s0 + $0x8] sm:$0xff]
  %v32 = vld [vmem:[%s0 + $0x10] sm:$0xff]
  %v33 = vld [vmem:[%s0 + $0x18] sm:$0xff]
  %v34 = vld [vmem:[%s0 + $0x20] sm:$0xff]
  %v35 = vld [vmem:[%s0 + $0x28] sm:$0xff]
  %v36 = vld [vmem:[%s0 + $0x30] sm:$0xff]
  %v37 = vld [vmem:[%s0 + $0x38] sm:$0xff]
  %v38 = vld [vmem:[%s1] sm:$0xff]
  %v39 = vld [vmem:[%s1 + $0x8] sm:$0xff]
  %v40 = vld [vmem:[%s1 + $0x10] sm:$0xff]
  %v41 = vld [vmem:[%s1 + $0x18] sm:$0xff]
  %v42 = vld [vmem:[%s1 + $0x20] sm:$0xff]
  %v43 = vld [vmem:[%s1 + $0x28] sm:$0xff]
  %v44 = vld [vmem:[%s1 + $0x30] sm:$0xff]
  %v45 = vld [vmem:[%s1 + $0x38] sm:$0xff]
  %v46 = vld [vmem:[%s1 + $0x40] sm:$0xff]
  %v47 = vld [vmem:[%s1 + $0x48] sm:$0xff]
  %v48 = vld [vmem:[%s1 + $0x50] sm:$0xff]
  %v49 = vld [vmem:[%s1 + $0x58] sm:$0xff]
  %v50 = vld [vmem:[%s1 + $0x60] sm:$0xff]
  %v51 = vld [vmem:[%s1 + $0x68] sm:$0xff]
  %v52 = vld [vmem:[%s1 + $0x70] sm:$0xff]
  %v53 = vld [vmem:[%s1 + $0x78] sm:$0xff]
  %v54 = vld [vmem:[%s1 + $0x80] sm:$0xff]
  %v55 = vld [vmem:[%s1 + $0x88] sm:$0xff]
  %v56 = vld [vmem:[%s1 + $0x90] sm:$0xff]
  %v57 = vld [vmem:[%s1 + $0x98] sm:$0xff]
  %v58 = vld [vmem:[%s1 + $0xa0] sm:$0xff]
  %v59 = vld [vmem:[%s1 + $0xa8] sm:$0xff]
  %v60 = vld [vmem:[%s1 + $0xb0] sm:$0xff]
  %v61 = vld [vmem:[%s1 + $0xb8] sm:$0xff]
  %v62 = vld [vmem:[%s1 + $0xc0] sm:$0xff]
  %v63 = vld [vmem:[%s1 + $0xc8] sm:$0xff]
  %v64 = vld [vmem:[%s1 + $0xd0] sm:$0xff]
  %v65 = vld [vmem:[%s1 + $0xd8] sm:$0xff]
  %v66 = vld [vmem:[%s1 + $0xe0] sm:$0xff]
  %v67 = vld [vmem:[%s1 + $0xe8] sm:$0xff]
  %v68 = vld [vmem:[%s1 + $0xf0] sm:$0xff]
  %v69 = vld [vmem:[%s1 + $0xf8] sm:$0xff]
  %v70 = vld [vmem:[%s1 + $0x100] sm:$0xff]
  %v71 = vld [vmem:[%s1 + $0x108] sm:$0xff]
  %v72 = vld [vmem:[%s1 + $0x110] sm:$0xff]
  %v73 = vld [vmem:[%s1 + $0x118] sm:$0xff]
  %v74 = vld [vmem:[%s1 + $0x120] sm:$0xff]
  %v75 = vld [vmem:[%s1 + $0x128] sm:$0xff]
  %v76 = vld [vmem:[%s1 + $0x130] sm:$0xff]
  %v77 = vld [vmem:[%s1 + $0x138] sm:$0xff]
  %v78 = vld [vmem:[%s1 + $0x140] sm:$0xff]
  %v79 = vld [vmem:[%s1 + $0x148] sm:$0xff]
  %v80 = vld [vmem:[%s1 + $0x150] sm:$0xff]
  %v81 = vld [vmem:[%s1 + $0x158] sm:$0xff]
  %v82 = vld [vmem:[%s1 + $0x160] sm:$0xff]
  %v83 = vld [vmem:[%s1 + $0x168] sm:$0xff]
  %v84 = vld [vmem:[%s1 + $0x170] sm:$0xff]
  %v85 = vld [vmem:[%s1 + $0x178] sm:$0xff]
  %v86 = vld [vmem:[%s1 + $0x180] sm:$0xff]
  %v87 = vld [vmem:[%s1 + $0x188] sm:$0xff]
  %v88 = vld [vmem:[%s1 + $0x190] sm:$0xff]
  %v89 = vld [vmem:[%s1 + $0x198] sm:$0xff]
  %v90 = vld [vmem:[%s1 + $0x1a0] sm:$0xff]
  %v91 = vld [vmem:[%s1 + $0x1a8] sm:$0xff]
  %v92 = vld [vmem:[%s1 + $0x1b0] sm:$0xff]
  %v93 = vld [vmem:[%s1 + $0x1b8] sm:$0xff]
  %v94 = vld [vmem:[%s1 + $0x1c0] sm:$0xff]
  %v95 = vld [vmem:[%s1 + $0x1c8] sm:$0xff]
  %v96 = vld [vmem:[%s1 + $0x1d0] sm:$0xff]
  %v97 = vld [vmem:[%s1 + $0x1d8] sm:$0xff]
  %v98 = vld [vmem:[%s1 + $0x1e0] sm:$0xff]
  %v99 = vld [vmem:[%s1 + $0x1e8] sm:$0xff]
  %v100 = vld [vmem:[%s1 + $0x1f0] sm:$0xff]
  %v101 = vld [vmem:[%s1 + $0x1f8] sm:$0xff]
  %v102 = vld [vmem:[%s3] sm:$0xf]
  %v104 = vlaneseq
  %v105 = vshrl.u32 %v104, 7
  %v106 = vsub.s32 0, %v105
  %v107 = vrot.slane %v102, %v106
  %v108 = vlaneseq
  %v109 = vshrl.u32 %v108, 7
  %v110 = vsub.s32 1, %v109
  %v111 = vrot.slane %v102, %v110
  %v112 = vlaneseq
  %v113 = vshrl.u32 %v112, 7
  %v114 = vsub.s32 2, %v113
  %v115 = vrot.slane %v102, %v114
  %v116 = vlaneseq
  %v117 = vshrl.u32 %v116, 7
  %v118 = vsub.s32 3, %v117
  %v119 = vrot.slane %v102, %v118
  %124 = vmatprep.subr.mxu0 %v99
  %125 = vmatpush1.msra.mxu0 %v98
  %126 = vmatprep.subr.mxu0 %v95
  %127 = vmatpush1.msra.mxu0 %v94
  %128 = vmatprep.subr.mxu0 %v91
  %129 = vmatpush1.msra.mxu0 %v90
  %130 = vmatprep.subr.mxu0 %v87
  %131 = vmatpush1.msra.mxu0 %v86
  %132 = vmatprep.subr.mxu0 %v83
  %133 = vmatpush1.msra.mxu0 %v82
  %134 = vmatprep.subr.mxu0 %v79
  %135 = vmatpush1.msra.mxu0 %v78
  %136 = vmatprep.subr.mxu0 %v75
  %137 = vmatpush1.msra.mxu0 %v74
  %138 = vmatprep.subr.mxu0 %v71
  %139 = vmatpush1.msra.mxu0 %v70
  %140 = vmatprep.subr.mxu0 %v67
  %141 = vmatpush1.msra.mxu0 %v66
  %142 = vmatprep.subr.mxu0 %v63
  %143 = vmatpush1.msra.mxu0 %v62
  %144 = vmatprep.subr.mxu0 %v59
  %145 = vmatpush1.msra.mxu0 %v58
  %146 = vmatprep.subr.mxu0 %v55
  %147 = vmatpush1.msra.mxu0 %v54
  %148 = vmatprep.subr.mxu0 %v51
  %149 = vmatpush1.msra.mxu0 %v50
  %150 = vmatprep.subr.mxu0 %v47
  %151 = vmatpush1.msra.mxu0 %v46
  %152 = vmatprep.subr.mxu0 %v43
  %153 = vmatpush1.msra.mxu0 %v42
  %154 = vmatprep.subr.mxu0 %v39
  %155 = vmatpush1.msra.mxu0 %v38
  %156 = vmatprep.subr.mxu0 0.0
  %157 = vmatpush2.msra.mxu0 0.0
  %158 = vmatprep.subr.mxu0 0.0
  %159 = vmatpush2.msra.mxu0 0.0
  %160 = vmatprep.subr.mxu0 0.0
  %161 = vmatpush2.msra.mxu0 0.0
  %162 = vmatprep.subr.mxu0 0.0
  %163 = vmatpush2.msra.mxu0 0.0
  %164 = vmatprep.subr.mxu0 0.0
  %165 = vmatpush2.msra.mxu0 0.0
  %166 = vmatprep.subr.mxu0 0.0
  %167 = vmatpush2.msra.mxu0 0.0
  %168 = vmatprep.subr.mxu0 0.0
  %169 = vmatpush2.msra.mxu0 0.0
  %170 = vmatprep.subr.mxu0 0.0
  %171 = vmatpush2.msra.mxu0 0.0
  %172 = vmatprep.subr.mxu0 0.0
  %173 = vmatpush2.msra.mxu0 0.0
  %174 = vmatprep.subr.mxu0 0.0
  %175 = vmatpush2.msra.mxu0 0.0
  %176 = vmatprep.subr.mxu0 0.0
  %177 = vmatpush2.msra.mxu0 0.0
  %178 = vmatprep.subr.mxu0 0.0
  %179 = vmatpush2.msra.mxu0 0.0
  %180 = vmatprep.subr.mxu0 0.0
  %181 = vmatpush2.msra.mxu0 0.0
  %182 = vmatprep.subr.mxu0 0.0
  %183 = vmatpush2.msra.mxu0 0.0
  %184 = vmatprep.subr.mxu0 0.0
  %185 = vmatpush2.msra.mxu0 0.0
  %186 = vmatprep.subr.mxu0 0.0
  %187 = vmatpush2.msra.mxu0 0.0
  %188 = vmatprep.mubr.f32.mxu0 0.0
  %189 = vmatmul.mubr.f32.gmra.mxu0 %v30
  %v190 = vpop.f32.mrf.mxu0
  %v191 = vadd.f32 %v107, %v190
  %v192 = vpop.f32.mrf.mxu0
  %v193 = vadd.f32 %v111, %v192
  %194 = vmatprep.mubr.f32.mxu0 0.0
  %195 = vmatmul.mubr.f32.gmra.mxu0 %v31
  %v196 = vpop.f32.mrf.mxu0
  %v197 = vadd.f32 %v107, %v196
  %v198 = vpop.f32.mrf.mxu0
  %v199 = vadd.f32 %v111, %v198
  %200 = vmatprep.mubr.f32.mxu0 0.0
  %201 = vmatmul.mubr.f32.gmra.mxu0 %v32
  %v202 = vpop.f32.mrf.mxu0
  %v203 = vadd.f32 %v107, %v202
  %v204 = vpop.f32.mrf.mxu0
  %v205 = vadd.f32 %v111, %v204
  %206 = vmatprep.mubr.f32.mxu0 0.0
  %207 = vmatmul.mubr.f32.gmra.mxu0 %v33
  %v208 = vpop.f32.mrf.mxu0
  %v209 = vadd.f32 %v107, %v208
  %v210 = vpop.f32.mrf.mxu0
  %v211 = vadd.f32 %v111, %v210
  %212 = vmatprep.mubr.f32.mxu0 0.0
  %213 = vmatmul.mubr.f32.gmra.mxu0 %v34
  %v214 = vpop.f32.mrf.mxu0
  %v215 = vadd.f32 %v107, %v214
  %v216 = vpop.f32.mrf.mxu0
  %v217 = vadd.f32 %v111, %v216
  %218 = vmatprep.mubr.f32.mxu0 0.0
  %219 = vmatmul.mubr.f32.gmra.mxu0 %v35
  %v220 = vpop.f32.mrf.mxu0
  %v221 = vadd.f32 %v107, %v220
  %v222 = vpop.f32.mrf.mxu0
  %v223 = vadd.f32 %v111, %v222
  %224 = vmatprep.mubr.f32.mxu0 0.0
  %225 = vmatmul.mubr.f32.gmra.mxu0 %v36
  %v226 = vpop.f32.mrf.mxu0
  %v227 = vadd.f32 %v107, %v226
  %v228 = vpop.f32.mrf.mxu0
  %v229 = vadd.f32 %v111, %v228
  %230 = vmatprep.mubr.f32.mxu0 0.0
  %231 = vmatmul.mubr.f32.gmra.mxu0 %v37
  %v232 = vpop.f32.mrf.mxu0
  %v233 = vadd.f32 %v107, %v232
  %v234 = vpop.f32.mrf.mxu0
  %v235 = vadd.f32 %v111, %v234
  %236 = vdwg.mxu0
  %237 = vmatprep.subr.mxu0 %v101
  %238 = vmatpush1.msra.mxu0 %v100
  %239 = vmatprep.subr.mxu0 %v97
  %240 = vmatpush1.msra.mxu0 %v96
  %241 = vmatprep.subr.mxu0 %v93
  %242 = vmatpush1.msra.mxu0 %v92
  %243 = vmatprep.subr.mxu0 %v89
  %244 = vmatpush1.msra.mxu0 %v88
  %245 = vmatprep.subr.mxu0 %v85
  %246 = vmatpush1.msra.mxu0 %v84
  %247 = vmatprep.subr.mxu0 %v81
  %248 = vmatpush1.msra.mxu0 %v80
  %249 = vmatprep.subr.mxu0 %v77
  %250 = vmatpush1.msra.mxu0 %v76
  %251 = vmatprep.subr.mxu0 %v73
  %252 = vmatpush1.msra.mxu0 %v72
  %253 = vmatprep.subr.mxu0 %v69
  %254 = vmatpush1.msra.mxu0 %v68
  %255 = vmatprep.subr.mxu0 %v65
  %256 = vmatpush1.msra.mxu0 %v64
  %257 = vmatprep.subr.mxu0 %v61
  %258 = vmatpush1.msra.mxu0 %v60
  %259 = vmatprep.subr.mxu0 %v57
  %260 = vmatpush1.msra.mxu0 %v56
  %261 = vmatprep.subr.mxu0 %v53
  %262 = vmatpush1.msra.mxu0 %v52
  %263 = vmatprep.subr.mxu0 %v49
  %264 = vmatpush1.msra.mxu0 %v48
  %265 = vmatprep.subr.mxu0 %v45
  %266 = vmatpush1.msra.mxu0 %v44
  %267 = vmatprep.subr.mxu0 %v41
  %268 = vmatpush1.msra.mxu0 %v40
  %269 = vmatprep.subr.mxu0 0.0
  %270 = vmatpush2.msra.mxu0 0.0
  %271 = vmatprep.subr.mxu0 0.0
  %272 = vmatpush2.msra.mxu0 0.0
  %273 = vmatprep.subr.mxu0 0.0
  %274 = vmatpush2.msra.mxu0 0.0
  %275 = vmatprep.subr.mxu0 0.0
  %276 = vmatpush2.msra.mxu0 0.0
  %277 = vmatprep.subr.mxu0 0.0
  %278 = vmatpush2.msra.mxu0 0.0
  %279 = vmatprep.subr.mxu0 0.0
  %280 = vmatpush2.msra.mxu0 0.0
  %281 = vmatprep.subr.mxu0 0.0
  %282 = vmatpush2.msra.mxu0 0.0
  %283 = vmatprep.subr.mxu0 0.0
  %284 = vmatpush2.msra.mxu0 0.0
  %285 = vmatprep.subr.mxu0 0.0
  %286 = vmatpush2.msra.mxu0 0.0
  %287 = vmatprep.subr.mxu0 0.0
  %288 = vmatpush2.msra.mxu0 0.0
  %289 = vmatprep.subr.mxu0 0.0
  %290 = vmatpush2.msra.mxu0 0.0
  %291 = vmatprep.subr.mxu0 0.0
  %292 = vmatpush2.msra.mxu0 0.0
  %293 = vmatprep.subr.mxu0 0.0
  %294 = vmatpush2.msra.mxu0 0.0
  %295 = vmatprep.subr.mxu0 0.0
  %296 = vmatpush2.msra.mxu0 0.0
  %297 = vmatprep.subr.mxu0 0.0
  %298 = vmatpush2.msra.mxu0 0.0
  %299 = vmatprep.subr.mxu0 0.0
  %300 = vmatpush2.msra.mxu0 0.0
  %301 = vmatprep.mubr.f32.mxu0 0.0
  %302 = vmatmul.mubr.f32.gmra.mxu0 %v30
  %v303 = vpop.f32.mrf.mxu0
  %v304 = vadd.f32 %v115, %v303
  %v305 = vpop.f32.mrf.mxu0
  %v306 = vadd.f32 %v119, %v305
  %307 = vmatprep.mubr.f32.mxu0 0.0
  %308 = vmatmul.mubr.f32.gmra.mxu0 %v31
  %v309 = vpop.f32.mrf.mxu0
  %v310 = vadd.f32 %v115, %v309
  %v311 = vpop.f32.mrf.mxu0
  %v312 = vadd.f32 %v119, %v311
  %313 = vmatprep.mubr.f32.mxu0 0.0
  %314 = vmatmul.mubr.f32.gmra.mxu0 %v32
  %v315 = vpop.f32.mrf.mxu0
  %v316 = vadd.f32 %v115, %v315
  %v317 = vpop.f32.mrf.mxu0
  %v318 = vadd.f32 %v119, %v317
  %319 = vmatprep.mubr.f32.mxu0 0.0
  %320 = vmatmul.mubr.f32.gmra.mxu0 %v33
  %v321 = vpop.f32.mrf.mxu0
  %v322 = vadd.f32 %v115, %v321
  %v323 = vpop.f32.mrf.mxu0
  %v324 = vadd.f32 %v119, %v323
  %325 = vmatprep.mubr.f32.mxu0 0.0
  %326 = vmatmul.mubr.f32.gmra.mxu0 %v34
  %v327 = vpop.f32.mrf.mxu0
  %v328 = vadd.f32 %v115, %v327
  %v329 = vpop.f32.mrf.mxu0
  %v330 = vadd.f32 %v119, %v329
  %331 = vmatprep.mubr.f32.mxu0 0.0
  %332 = vmatmul.mubr.f32.gmra.mxu0 %v35
  %v333 = vpop.f32.mrf.mxu0
  %v334 = vadd.f32 %v115, %v333
  %v335 = vpop.f32.mrf.mxu0
  %v336 = vadd.f32 %v119, %v335
  %337 = vmatprep.mubr.f32.mxu0 0.0
  %338 = vmatmul.mubr.f32.gmra.mxu0 %v36
  %v339 = vpop.f32.mrf.mxu0
  %v340 = vadd.f32 %v115, %v339
  %v341 = vpop.f32.mrf.mxu0
  %v342 = vadd.f32 %v119, %v341
  %343 = vmatprep.mubr.f32.mxu0 0.0
  %344 = vmatmul.mubr.f32.gmra.mxu0 %v37
  %v345 = vpop.f32.mrf.mxu0
  %v346 = vadd.f32 %v115, %v345
  %v347 = vpop.f32.mrf.mxu0
  %v348 = vadd.f32 %v119, %v347
  %349 = vdwg.mxu0
  %350 = vst [vmem:[#allocation2] sm:$0xff] %v191
  %351 = vst [vmem:[#allocation2 + $0x8] sm:$0xff] %v193
  %352 = vst [vmem:[#allocation2 + $0x10] sm:$0xff] %v304
  %353 = vst [vmem:[#allocation2 + $0x18] sm:$0xff] %v306
  %354 = vst [vmem:[#allocation2 + $0x20] sm:$0xff] %v197
  %355 = vst [vmem:[#allocation2 + $0x28] sm:$0xff] %v199
  %356 = vst [vmem:[#allocation2 + $0x30] sm:$0xff] %v310
  %357 = vst [vmem:[#allocation2 + $0x38] sm:$0xff] %v312
  %358 = vst [vmem:[#allocation2 + $0x40] sm:$0xff] %v203
  %359 = vst [vmem:[#allocation2 + $0x48] sm:$0xff] %v205
  %360 = vst [vmem:[#allocation2 + $0x50] sm:$0xff] %v316
  %361 = vst [vmem:[#allocation2 + $0x58] sm:$0xff] %v318
  %362 = vst [vmem:[#allocation2 + $0x60] sm:$0xff] %v209
  %363 = vst [vmem:[#allocation2 + $0x68] sm:$0xff] %v211
  %364 = vst [vmem:[#allocation2 + $0x70] sm:$0xff] %v322
  %365 = vst [vmem:[#allocation2 + $0x78] sm:$0xff] %v324
  %366 = vst [vmem:[#allocation2 + $0x80] sm:$0xff] %v215
  %367 = vst [vmem:[#allocation2 + $0x88] sm:$0xff] %v217
  %368 = vst [vmem:[#allocation2 + $0x90] sm:$0xff] %v328
  %369 = vst [vmem:[#allocation2 + $0x98] sm:$0xff] %v330
  %370 = vst [vmem:[#allocation2 + $0xa0] sm:$0xff] %v221
  %371 = vst [vmem:[#allocation2 + $0xa8] sm:$0xff] %v223
  %372 = vst [vmem:[#allocation2 + $0xb0] sm:$0xff] %v334
  %373 = vst [vmem:[#allocation2 + $0xb8] sm:$0xff] %v336
  %374 = vst [vmem:[#allocation2 + $0xc0] sm:$0xff] %v227
  %375 = vst [vmem:[#allocation2 + $0xc8] sm:$0xff] %v229
  %376 = vst [vmem:[#allocation2 + $0xd0] sm:$0xff] %v340
  %377 = vst [vmem:[#allocation2 + $0xd8] sm:$0xff] %v342
  %378 = vst [vmem:[#allocation2 + $0xe0] sm:$0xff] %v233
  %379 = vst [vmem:[#allocation2 + $0xe8] sm:$0xff] %v235
  %380 = vst [vmem:[#allocation2 + $0xf0] sm:$0xff] %v346
  %381 = vst [vmem:[#allocation2 + $0xf8] sm:$0xff] %v348
  %v382 = vld [vmem:[%s2] sm:$0xff]
  %v383 = vld [vmem:[%s2 + $0x8] sm:$0xff]
  %v384 = vld [vmem:[%s2 + $0x10] sm:$0xff]
  %v385 = vld [vmem:[%s2 + $0x18] sm:$0xff]
  %v386 = vld [vmem:[%s2 + $0x20] sm:$0xff]
  %v387 = vld [vmem:[%s2 + $0x28] sm:$0xff]
  %v388 = vld [vmem:[%s2 + $0x30] sm:$0xff]
  %v389 = vld [vmem:[%s2 + $0x38] sm:$0xff]
  %v390 = vld [vmem:[%s2 + $0x40] sm:$0xff]
  %v391 = vld [vmem:[%s2 + $0x48] sm:$0xff]
  %v392 = vld [vmem:[%s2 + $0x50] sm:$0xff]
  %v393 = vld [vmem:[%s2 + $0x58] sm:$0xff]
  %v394 = vld [vmem:[%s2 + $0x60] sm:$0xff]
  %v395 = vld [vmem:[%s2 + $0x68] sm:$0xff]
  %v396 = vld [vmem:[%s2 + $0x70] sm:$0xff]
  %v397 = vld [vmem:[%s2 + $0x78] sm:$0xff]
  %v398 = vld [vmem:[%s2 + $0x80] sm:$0xff]
  %v399 = vld [vmem:[%s2 + $0x88] sm:$0xff]
  %v400 = vld [vmem:[%s2 + $0x90] sm:$0xff]
  %v401 = vld [vmem:[%s2 + $0x98] sm:$0xff]
  %v402 = vld [vmem:[%s2 + $0xa0] sm:$0xff]
  %v403 = vld [vmem:[%s2 + $0xa8] sm:$0xff]
  %v404 = vld [vmem:[%s2 + $0xb0] sm:$0xff]
  %v405 = vld [vmem:[%s2 + $0xb8] sm:$0xff]
  %v406 = vld [vmem:[%s2 + $0xc0] sm:$0xff]
  %v407 = vld [vmem:[%s2 + $0xc8] sm:$0xff]
  %v408 = vld [vmem:[%s2 + $0xd0] sm:$0xff]
  %v409 = vld [vmem:[%s2 + $0xd8] sm:$0xff]
  %v410 = vld [vmem:[%s2 + $0xe0] sm:$0xff]
  %v411 = vld [vmem:[%s2 + $0xe8] sm:$0xff]
  %v412 = vld [vmem:[%s2 + $0xf0] sm:$0xff]
  %v413 = vld [vmem:[%s2 + $0xf8] sm:$0xff]
  %v414 = vld [vmem:[%s2 + $0x100] sm:$0xff]
  %v415 = vld [vmem:[%s2 + $0x108] sm:$0xff]
  %v416 = vld [vmem:[%s2 + $0x110] sm:$0xff]
  %v417 = vld [vmem:[%s2 + $0x118] sm:$0xff]
  %v418 = vld [vmem:[%s2 + $0x120] sm:$0xff]
  %v419 = vld [vmem:[%s2 + $0x128] sm:$0xff]
  %v420 = vld [vmem:[%s2 + $0x130] sm:$0xff]
  %v421 = vld [vmem:[%s2 + $0x138] sm:$0xff]
  %v422 = vld [vmem:[%s2 + $0x140] sm:$0xff]
  %v423 = vld [vmem:[%s2 + $0x148] sm:$0xff]
  %v424 = vld [vmem:[%s2 + $0x150] sm:$0xff]
  %v425 = vld [vmem:[%s2 + $0x158] sm:$0xff]
  %v426 = vld [vmem:[%s2 + $0x160] sm:$0xff]
  %v427 = vld [vmem:[%s2 + $0x168] sm:$0xff]
  %v428 = vld [vmem:[%s2 + $0x170] sm:$0xff]
  %v429 = vld [vmem:[%s2 + $0x178] sm:$0xff]
  %v430 = vld [vmem:[%s2 + $0x180] sm:$0xff]
  %v431 = vld [vmem:[%s2 + $0x188] sm:$0xff]
  %v432 = vld [vmem:[%s2 + $0x190] sm:$0xff]
  %v433 = vld [vmem:[%s2 + $0x198] sm:$0xff]
  %v434 = vld [vmem:[%s2 + $0x1a0] sm:$0xff]
  %v435 = vld [vmem:[%s2 + $0x1a8] sm:$0xff]
  %v436 = vld [vmem:[%s2 + $0x1b0] sm:$0xff]
  %v437 = vld [vmem:[%s2 + $0x1b8] sm:$0xff]
  %v438 = vld [vmem:[%s2 + $0x1c0] sm:$0xff]
  %v439 = vld [vmem:[%s2 + $0x1c8] sm:$0xff]
  %v440 = vld [vmem:[%s2 + $0x1d0] sm:$0xff]
  %v441 = vld [vmem:[%s2 + $0x1d8] sm:$0xff]
  %v442 = vld [vmem:[%s2 + $0x1e0] sm:$0xff]
  %v443 = vld [vmem:[%s2 + $0x1e8] sm:$0xff]
  %v444 = vld [vmem:[%s2 + $0x1f0] sm:$0xff]
  %v445 = vld [vmem:[%s2 + $0x1f8] sm:$0xff]
  %v446 = vld [vmem:[#allocation3] sm:$0xff]
  %v447 = vld [vmem:[#allocation4] sm:$0xff]
  %v448 = vld [vmem:[#allocation2] sm:$0xff]
  %v449 = vld [vmem:[#allocation2 + $0x8] sm:$0xff]
  %v450 = vld [vmem:[#allocation2 + $0x10] sm:$0xff]
  %v451 = vld [vmem:[#allocation2 + $0x18] sm:$0xff]
  %452 = vmatprep.subr.mxu0 %v443
  %453 = vmatpush1.msra.mxu0 %v442
  %454 = vmatprep.subr.mxu0 %v439
  %455 = vmatpush1.msra.mxu0 %v438
  %456 = vmatprep.subr.mxu0 %v435
  %457 = vmatpush1.msra.mxu0 %v434
  %458 = vmatprep.subr.mxu0 %v431
  %459 = vmatpush1.msra.mxu0 %v430
  %460 = vmatprep.subr.mxu0 %v427
  %461 = vmatpush1.msra.mxu0 %v426
  %462 = vmatprep.subr.mxu0 %v423
  %463 = vmatpush1.msra.mxu0 %v422
  %464 = vmatprep.subr.mxu0 %v419
  %465 = vmatpush1.msra.mxu0 %v418
  %466 = vmatprep.subr.mxu0 %v415
  %467 = vmatpush1.msra.mxu0 %v414
  %468 = vmatprep.subr.mxu0 %v411
  %469 = vmatpush1.msra.mxu0 %v410
  %470 = vmatprep.subr.mxu0 %v407
  %471 = vmatpush1.msra.mxu0 %v406
  %472 = vmatprep.subr.mxu0 %v403
  %473 = vmatpush1.msra.mxu0 %v402
  %474 = vmatprep.subr.mxu0 %v399
  %475 = vmatpush1.msra.mxu0 %v398
  %476 = vmatprep.subr.mxu0 %v395
  %477 = vmatpush1.msra.mxu0 %v394
  %478 = vmatprep.subr.mxu0 %v391
  %479 = vmatpush1.msra.mxu0 %v390
  %480 = vmatprep.subr.mxu0 %v387
  %481 = vmatpush1.msra.mxu0 %v386
  %482 = vmatprep.subr.mxu0 %v383
  %483 = vmatpush1.msra.mxu0 %v382
  %484 = vmatprep.subr.mxu0 0.0
  %485 = vmatpush2.msra.mxu0 0.0
  %486 = vmatprep.subr.mxu0 0.0
  %487 = vmatpush2.msra.mxu0 0.0
  %488 = vmatprep.subr.mxu0 0.0
  %489 = vmatpush2.msra.mxu0 0.0
  %490 = vmatprep.subr.mxu0 0.0
  %491 = vmatpush2.msra.mxu0 0.0
  %492 = vmatprep.subr.mxu0 0.0
  %493 = vmatpush2.msra.mxu0 0.0
  %494 = vmatprep.subr.mxu0 0.0
  %495 = vmatpush2.msra.mxu0 0.0
  %496 = vmatprep.subr.mxu0 0.0
  %497 = vmatpush2.msra.mxu0 0.0
  %498 = vmatprep.subr.mxu0 0.0
  %499 = vmatpush2.msra.mxu0 0.0
  %500 = vmatprep.subr.mxu0 0.0
  %501 = vmatpush2.msra.mxu0 0.0
  %502 = vmatprep.subr.mxu0 0.0
  %503 = vmatpush2.msra.mxu0 0.0
  %504 = vmatprep.subr.mxu0 0.0
  %505 = vmatpush2.msra.mxu0 0.0
  %506 = vmatprep.subr.mxu0 0.0
  %507 = vmatpush2.msra.mxu0 0.0
  %508 = vmatprep.subr.mxu0 0.0
  %509 = vmatpush2.msra.mxu0 0.0
  %510 = vmatprep.subr.mxu0 0.0
  %511 = vmatpush2.msra.mxu0 0.0
  %512 = vmatprep.subr.mxu0 0.0
  %513 = vmatpush2.msra.mxu0 0.0
  %514 = vmatprep.subr.mxu0 0.0
  %515 = vmatpush2.msra.mxu0 0.0
  %516 = vmatprep.mubr.f32.mxu0 0.0
  %517 = vmatmul.mubr.f32.gmra.mxu0 %v446
  %v518 = vpop.f32.mrf.mxu0
  %v519 = vadd.f32 0.0, %v518
  %v520 = vpop.f32.mrf.mxu0
  %v521 = vadd.f32 0.0, %v520
  %522 = vdwg.mxu0
  %523 = vmatprep.subr.mxu0 %v445
  %524 = vmatpush1.msra.mxu0 %v444
  %525 = vmatprep.subr.mxu0 %v441
  %526 = vmatpush1.msra.mxu0 %v440
  %527 = vmatprep.subr.mxu0 %v437
  %528 = vmatpush1.msra.mxu0 %v436
  %529 = vmatprep.subr.mxu0 %v433
  %530 = vmatpush1.msra.mxu0 %v432
  %531 = vmatprep.subr.mxu0 %v429
  %532 = vmatpush1.msra.mxu0 %v428
  %533 = vmatprep.subr.mxu0 %v425
  %534 = vmatpush1.msra.mxu0 %v424
  %535 = vmatprep.subr.mxu0 %v421
  %536 = vmatpush1.msra.mxu0 %v420
  %537 = vmatprep.subr.mxu0 %v417
  %538 = vmatpush1.msra.mxu0 %v416
  %539 = vmatprep.subr.mxu0 %v413
  %540 = vmatpush1.msra.mxu0 %v412
  %541 = vmatprep.subr.mxu0 %v409
  %542 = vmatpush1.msra.mxu0 %v408
  %543 = vmatprep.subr.mxu0 %v405
  %544 = vmatpush1.msra.mxu0 %v404
  %545 = vmatprep.subr.mxu0 %v401
  %546 = vmatpush1.msra.mxu0 %v400
  %547 = vmatprep.subr.mxu0 %v397
  %548 = vmatpush1.msra.mxu0 %v396
  %549 = vmatprep.subr.mxu0 %v393
  %550 = vmatpush1.msra.mxu0 %v392
  %551 = vmatprep.subr.mxu0 %v389
  %552 = vmatpush1.msra.mxu0 %v388
  %553 = vmatprep.subr.mxu0 %v385
  %554 = vmatpush1.msra.mxu0 %v384
  %555 = vmatprep.subr.mxu0 0.0
  %556 = vmatpush2.msra.mxu0 0.0
  %557 = vmatprep.subr.mxu0 0.0
  %558 = vmatpush2.msra.mxu0 0.0
  %559 = vmatprep.subr.mxu0 0.0
  %560 = vmatpush2.msra.mxu0 0.0
  %561 = vmatprep.subr.mxu0 0.0
  %562 = vmatpush2.msra.mxu0 0.0
  %563 = vmatprep.subr.mxu0 0.0
  %564 = vmatpush2.msra.mxu0 0.0
  %565 = vmatprep.subr.mxu0 0.0
  %566 = vmatpush2.msra.mxu0 0.0
  %567 = vmatprep.subr.mxu0 0.0
  %568 = vmatpush2.msra.mxu0 0.0
  %569 = vmatprep.subr.mxu0 0.0
  %570 = vmatpush2.msra.mxu0 0.0
  %571 = vmatprep.subr.mxu0 0.0
  %572 = vmatpush2.msra.mxu0 0.0
  %573 = vmatprep.subr.mxu0 0.0
  %574 = vmatpush2.msra.mxu0 0.0
  %575 = vmatprep.subr.mxu0 0.0
  %576 = vmatpush2.msra.mxu0 0.0
  %577 = vmatprep.subr.mxu0 0.0
  %578 = vmatpush2.msra.mxu0 0.0
  %579 = vmatprep.subr.mxu0 0.0
  %580 = vmatpush2.msra.mxu0 0.0
  %581 = vmatprep.subr.mxu0 0.0
  %582 = vmatpush2.msra.mxu0 0.0
  %583 = vmatprep.subr.mxu0 0.0
  %584 = vmatpush2.msra.mxu0 0.0
  %585 = vmatprep.subr.mxu0 0.0
  %586 = vmatpush2.msra.mxu0 0.0
  %587 = vmatprep.mubr.f32.mxu0 0.0
  %588 = vmatmul.mubr.f32.gmra.mxu0 %v446
  %v589 = vpop.f32.mrf.mxu0
  %v590 = vadd.f32 0.0, %v589
  %v591 = vpop.f32.mrf.mxu0
  %v592 = vadd.f32 0.0, %v591
  %593 = vdwg.mxu0
  %v594 = vadd.f32 %v448, %v519
  %v595 = vadd.f32 %v449, %v521
  %v596 = vadd.f32 %v450, %v590
  %v597 = vadd.f32 %v451, %v592
  %v598 = vxor.u32 %v594, 2147483648
  %v599 = vmul.f32 %v598, 1.442695
  %v600 = vpow.pop %v599
  %v601 = vadd.f32 %v600, 1.0
  %v602 = vrcp.pop %v601
  %v603 = vmul.f32 1.0, %v602
  %v604 = vxor.u32 %v595, 2147483648
  %v605 = vmul.f32 %v604, 1.442695
  %v606 = vpow.pop %v605
  %v607 = vadd.f32 %v606, 1.0
  %v608 = vrcp.pop %v607
  %v609 = vmul.f32 1.0, %v608
  %v610 = vtanh.pop %v596
  %v611 = vxor.u32 %v597, 2147483648
  %v612 = vmul.f32 %v611, 1.442695
  %v613 = vpow.pop %v612
  %v614 = vadd.f32 %v613, 1.0
  %v615 = vrcp.pop %v614
  %v616 = vmul.f32 1.0, %v615
  %v617 = vmul.f32 %v609, %v447
  %v618 = vmul.f32 %v603, %v610
  %v619 = vadd.f32 %v617, %v618
  %v620 = vtanh.pop %v619
  %v621 = vmul.f32 %v616, %v620
  %s622 = scalar_lea.vmem [#allocation2], 32
  %v623 = vld [vmem:[%s622] sm:$0xff]
  %v624 = vld [vmem:[%s622 + $0x8] sm:$0xff]
  %v625 = vld [vmem:[%s622 + $0x10] sm:$0xff]
  %v626 = vld [vmem:[%s622 + $0x18] sm:$0xff]
  %627 = vmatprep.subr.mxu0 %v443
  %628 = vmatpush1.msra.mxu0 %v442
  %629 = vmatprep.subr.mxu0 %v439
  %630 = vmatpush1.msra.mxu0 %v438
  %631 = vmatprep.subr.mxu0 %v435
  %632 = vmatpush1.msra.mxu0 %v434
  %633 = vmatprep.subr.mxu0 %v431
  %634 = vmatpush1.msra.mxu0 %v430
  %635 = vmatprep.subr.mxu0 %v427
  %636 = vmatpush1.msra.mxu0 %v426
  %637 = vmatprep.subr.mxu0 %v423
  %638 = vmatpush1.msra.mxu0 %v422
  %639 = vmatprep.subr.mxu0 %v419
  %640 = vmatpush1.msra.mxu0 %v418
  %641 = vmatprep.subr.mxu0 %v415
  %642 = vmatpush1.msra.mxu0 %v414
  %643 = vmatprep.subr.mxu0 %v411
  %644 = vmatpush1.msra.mxu0 %v410
  %645 = vmatprep.subr.mxu0 %v407
  %646 = vmatpush1.msra.mxu0 %v406
  %647 = vmatprep.subr.mxu0 %v403
  %648 = vmatpush1.msra.mxu0 %v402
  %649 = vmatprep.subr.mxu0 %v399
  %650 = vmatpush1.msra.mxu0 %v398
  %651 = vmatprep.subr.mxu0 %v395
  %652 = vmatpush1.msra.mxu0 %v394
  %653 = vmatprep.subr.mxu0 %v391
  %654 = vmatpush1.msra.mxu0 %v390
  %655 = vmatprep.subr.mxu0 %v387
  %656 = vmatpush1.msra.mxu0 %v386
  %657 = vmatprep.subr.mxu0 %v383
  %658 = vmatpush1.msra.mxu0 %v382
  %659 = vmatprep.subr.mxu0 0.0
  %660 = vmatpush2.msra.mxu0 0.0
  %661 = vmatprep.subr.mxu0 0.0
  %662 = vmatpush2.msra.mxu0 0.0
  %663 = vmatprep.subr.mxu0 0.0
  %664 = vmatpush2.msra.mxu0 0.0
  %665 = vmatprep.subr.mxu0 0.0
  %666 = vmatpush2.msra.mxu0 0.0
  %667 = vmatprep.subr.mxu0 0.0
  %668 = vmatpush2.msra.mxu0 0.0
  %669 = vmatprep.subr.mxu0 0.0
  %670 = vmatpush2.msra.mxu0 0.0
  %671 = vmatprep.subr.mxu0 0.0
  %672 = vmatpush2.msra.mxu0 0.0
  %673 = vmatprep.subr.mxu0 0.0
  %674 = vmatpush2.msra.mxu0 0.0
  %675 = vmatprep.subr.mxu0 0.0
  %676 = vmatpush2.msra.mxu0 0.0
  %677 = vmatprep.subr.mxu0 0.0
  %678 = vmatpush2.msra.mxu0 0.0
  %679 = vmatprep.subr.mxu0 0.0
  %680 = vmatpush2.msra.mxu0 0.0
  %681 = vmatprep.subr.mxu0 0.0
  %682 = vmatpush2.msra.mxu0 0.0
  %683 = vmatprep.subr.mxu0 0.0
  %684 = vmatpush2.msra.mxu0 0.0
  %685 = vmatprep.subr.mxu0 0.0
  %686 = vmatpush2.msra.mxu0 0.0
  %687 = vmatprep.subr.mxu0 0.0
  %688 = vmatpush2.msra.mxu0 0.0
  %689 = vmatprep.subr.mxu0 0.0
  %690 = vmatpush2.msra.mxu0 0.0
  %691 = vmatprep.mubr.f32.mxu0 0.0
  %692 = vmatmul.mubr.f32.gmra.mxu0 %v621
  %v693 = vpop.f32.mrf.mxu0
  %v694 = vadd.f32 0.0, %v693
  %v695 = vpop.f32.mrf.mxu0
  %v696 = vadd.f32 0.0, %v695
  %697 = vdwg.mxu0
  %698 = vmatprep.subr.mxu0 %v445
  %699 = vmatpush1.msra.mxu0 %v444
  %700 = vmatprep.subr.mxu0 %v441
  %701 = vmatpush1.msra.mxu0 %v440
  %702 = vmatprep.subr.mxu0 %v437
  %703 = vmatpush1.msra.mxu0 %v436
  %704 = vmatprep.subr.mxu0 %v433
  %705 = vmatpush1.msra.mxu0 %v432
  %706 = vmatprep.subr.mxu0 %v429
  %707 = vmatpush1.msra.mxu0 %v428
  %708 = vmatprep.subr.mxu0 %v425
  %709 = vmatpush1.msra.mxu0 %v424
  %710 = vmatprep.subr.mxu0 %v421
  %711 = vmatpush1.msra.mxu0 %v420
  %712 = vmatprep.subr.mxu0 %v417
  %713 = vmatpush1.msra.mxu0 %v416
  %714 = vmatprep.subr.mxu0 %v413
  %715 = vmatpush1.msra.mxu0 %v412
  %716 = vmatprep.subr.mxu0 %v409
  %717 = vmatpush1.msra.mxu0 %v408
  %718 = vmatprep.subr.mxu0 %v405
  %719 = vmatpush1.msra.mxu0 %v404
  %720 = vmatprep.subr.mxu0 %v401
  %721 = vmatpush1.msra.mxu0 %v400
  %722 = vmatprep.subr.mxu0 %v397
  %723 = vmatpush1.msra.mxu0 %v396
  %724 = vmatprep.subr.mxu0 %v393
  %725 = vmatpush1.msra.mxu0 %v392
  %726 = vmatprep.subr.mxu0 %v389
  %727 = vmatpush1.msra.mxu0 %v388
  %728 = vmatprep.subr.mxu0 %v385
  %729 = vmatpush1.msra.mxu0 %v384
  %730 = vmatprep.subr.mxu0 0.0
  %731 = vmatpush2.msra.mxu0 0.0
  %732 = vmatprep.subr.mxu0 0.0
  %733 = vmatpush2.msra.mxu0 0.0
  %734 = vmatprep.subr.mxu0 0.0
  %735 = vmatpush2.msra.mxu0 0.0
  %736 = vmatprep.subr.mxu0 0.0
  %737 = vmatpush2.msra.mxu0 0.0
  %738 = vmatprep.subr.mxu0 0.0
  %739 = vmatpush2.msra.mxu0 0.0
  %740 = vmatprep.subr.mxu0 0.0
  %741 = vmatpush2.msra.mxu0 0.0
  %742 = vmatprep.subr.mxu0 0.0
  %743 = vmatpush2.msra.mxu0 0.0
  %744 = vmatprep.subr.mxu0 0.0
  %745 = vmatpush2.msra.mxu0 0.0
  %746 = vmatprep.subr.mxu0 0.0
  %747 = vmatpush2.msra.mxu0 0.0
  %748 = vmatprep.subr.mxu0 0.0
  %749 = vmatpush2.msra.mxu0 0.0
  %750 = vmatprep.subr.mxu0 0.0
  %751 = vmatpush2.msra.mxu0 0.0
  %752 = vmatprep.subr.mxu0 0.0
  %753 = vmatpush2.msra.mxu0 0.0
  %754 = vmatprep.subr.mxu0 0.0
  %755 = vmatpush2.msra.mxu0 0.0
  %756 = vmatprep.subr.mxu0 0.0
  %757 = vmatpush2.msra.mxu0 0.0
  %758 = vmatprep.subr.mxu0 0.0
  %759 = vmatpush2.msra.mxu0 0.0
  %760 = vmatprep.subr.mxu0 0.0
  %761 = vmatpush2.msra.mxu0 0.0
  %762 = vmatprep.mubr.f32.mxu0 0.0
  %763 = vmatmul.mubr.f32.gmra.mxu0 %v621
  %v764 = vpop.f32.mrf.mxu0
  %v765 = vadd.f32 0.0, %v764
  %v766 = vpop.f32.mrf.mxu0
  %v767 = vadd.f32 0.0, %v766
  %768 = vdwg.mxu0
  %v769 = vadd.f32 %v623, %v694
  %v770 = vadd.f32 %v624, %v696
  %v771 = vadd.f32 %v625, %v765
  %v772 = vadd.f32 %v626, %v767
  %v773 = vxor.u32 %v769, 2147483648
  %v774 = vmul.f32 %v773, 1.442695
  %v775 = vpow.pop %v774
  %v776 = vadd.f32 %v775, 1.0
  %v777 = vrcp.pop %v776
  %v778 = vmul.f32 1.0, %v777
  %v779 = vxor.u32 %v770, 2147483648
  %v780 = vmul.f32 %v779, 1.442695
  %v781 = vpow.pop %v780
  %v782 = vadd.f32 %v781, 1.0
  %v783 = vrcp.pop %v782
  %v784 = vmul.f32 1.0, %v783
  %v785 = vtanh.pop %v771
  %v786 = vxor.u32 %v772, 2147483648
  %v787 = vmul.f32 %v786, 1.442695
  %v788 = vpow.pop %v787
  %v789 = vadd.f32 %v788, 1.0
  %v790 = vrcp.pop %v789
  %v791 = vmul.f32 1.0, %v790
  %v792 = vmul.f32 %v784, %v619
  %v793 = vmul.f32 %v778, %v785
  %v794 = vadd.f32 %v792, %v793
  %v795 = vtanh.pop %v794
  %v796 = vmul.f32 %v791, %v795
  %s797 = scalar_lea.vmem [#allocation2], 64
  %v798 = vld [vmem:[%s797] sm:$0xff]
  %v799 = vld [vmem:[%s797 + $0x8] sm:$0xff]
  %v800 = vld [vmem:[%s797 + $0x10] sm:$0xff]
  %v801 = vld [vmem:[%s797 + $0x18] sm:$0xff]
  %802 = vmatprep.subr.mxu0 %v443
  %803 = vmatpush1.msra.mxu0 %v442
  %804 = vmatprep.subr.mxu0 %v439
  %805 = vmatpush1.msra.mxu0 %v438
  %806 = vmatprep.subr.mxu0 %v435
  %807 = vmatpush1.msra.mxu0 %v434
  %808 = vmatprep.subr.mxu0 %v431
  %809 = vmatpush1.msra.mxu0 %v430
  %810 = vmatprep.subr.mxu0 %v427
  %811 = vmatpush1.msra.mxu0 %v426
  %812 = vmatprep.subr.mxu0 %v423
  %813 = vmatpush1.msra.mxu0 %v422
  %814 = vmatprep.subr.mxu0 %v419
  %815 = vmatpush1.msra.mxu0 %v418
  %816 = vmatprep.subr.mxu0 %v415
  %817 = vmatpush1.msra.mxu0 %v414
  %818 = vmatprep.subr.mxu0 %v411
  %819 = vmatpush1.msra.mxu0 %v410
  %820 = vmatprep.subr.mxu0 %v407
  %821 = vmatpush1.msra.mxu0 %v406
  %822 = vmatprep.subr.mxu0 %v403
  %823 = vmatpush1.msra.mxu0 %v402
  %824 = vmatprep.subr.mxu0 %v399
  %825 = vmatpush1.msra.mxu0 %v398
  %826 = vmatprep.subr.mxu0 %v395
  %827 = vmatpush1.msra.mxu0 %v394
  %828 = vmatprep.subr.mxu0 %v391
  %829 = vmatpush1.msra.mxu0 %v390
  %830 = vmatprep.subr.mxu0 %v387
  %831 = vmatpush1.msra.mxu0 %v386
  %832 = vmatprep.subr.mxu0 %v383
  %833 = vmatpush1.msra.mxu0 %v382
  %834 = vmatprep.subr.mxu0 0.0
  %835 = vmatpush2.msra.mxu0 0.0
  %836 = vmatprep.subr.mxu0 0.0
  %837 = vmatpush2.msra.mxu0 0.0
  %838 = vmatprep.subr.mxu0 0.0
  %839 = vmatpush2.msra.mxu0 0.0
  %840 = vmatprep.subr.mxu0 0.0
  %841 = vmatpush2.msra.mxu0 0.0
  %842 = vmatprep.subr.mxu0 0.0
  %843 = vmatpush2.msra.mxu0 0.0
  %844 = vmatprep.subr.mxu0 0.0
  %845 = vmatpush2.msra.mxu0 0.0
  %846 = vmatprep.subr.mxu0 0.0
  %847 = vmatpush2.msra.mxu0 0.0
  %848 = vmatprep.subr.mxu0 0.0
  %849 = vmatpush2.msra.mxu0 0.0
  %850 = vmatprep.subr.mxu0 0.0
  %851 = vmatpush2.msra.mxu0 0.0
  %852 = vmatprep.subr.mxu0 0.0
  %853 = vmatpush2.msra.mxu0 0.0
  %854 = vmatprep.subr.mxu0 0.0
  %855 = vmatpush2.msra.mxu0 0.0
  %856 = vmatprep.subr.mxu0 0.0
  %857 = vmatpush2.msra.mxu0 0.0
  %858 = vmatprep.subr.mxu0 0.0
  %859 = vmatpush2.msra.mxu0 0.0
  %860 = vmatprep.subr.mxu0 0.0
  %861 = vmatpush2.msra.mxu0 0.0
  %862 = vmatprep.subr.mxu0 0.0
  %863 = vmatpush2.msra.mxu0 0.0
  %864 = vmatprep.subr.mxu0 0.0
  %865 = vmatpush2.msra.mxu0 0.0
  %866 = vmatprep.mubr.f32.mxu0 0.0
  %867 = vmatmul.mubr.f32.gmra.mxu0 %v796
  %v868 = vpop.f32.mrf.mxu0
  %v869 = vadd.f32 0.0, %v868
  %v870 = vpop.f32.mrf.mxu0
  %v871 = vadd.f32 0.0, %v870
  %872 = vdwg.mxu0
  %873 = vmatprep.subr.mxu0 %v445
  %874 = vmatpush1.msra.mxu0 %v444
  %875 = vmatprep.subr.mxu0 %v441
  %876 = vmatpush1.msra.mxu0 %v440
  %877 = vmatprep.subr.mxu0 %v437
  %878 = vmatpush1.msra.mxu0 %v436
  %879 = vmatprep.subr.mxu0 %v433
  %880 = vmatpush1.msra.mxu0 %v432
  %881 = vmatprep.subr.mxu0 %v429
  %882 = vmatpush1.msra.mxu0 %v428
  %883 = vmatprep.subr.mxu0 %v425
  %884 = vmatpush1.msra.mxu0 %v424
  %885 = vmatprep.subr.mxu0 %v421
  %886 = vmatpush1.msra.mxu0 %v420
  %887 = vmatprep.subr.mxu0 %v417
  %888 = vmatpush1.msra.mxu0 %v416
  %889 = vmatprep.subr.mxu0 %v413
  %890 = vmatpush1.msra.mxu0 %v412
  %891 = vmatprep.subr.mxu0 %v409
  %892 = vmatpush1.msra.mxu0 %v408
  %893 = vmatprep.subr.mxu0 %v405
  %894 = vmatpush1.msra.mxu0 %v404
  %895 = vmatprep.subr.mxu0 %v401
  %896 = vmatpush1.msra.mxu0 %v400
  %897 = vmatprep.subr.mxu0 %v397
  %898 = vmatpush1.msra.mxu0 %v396
  %899 = vmatprep.subr.mxu0 %v393
  %900 = vmatpush1.msra.mxu0 %v392
  %901 = vmatprep.subr.mxu0 %v389
  %902 = vmatpush1.msra.mxu0 %v388
  %903 = vmatprep.subr.mxu0 %v385
  %904 = vmatpush1.msra.mxu0 %v384
  %905 = vmatprep.subr.mxu0 0.0
  %906 = vmatpush2.msra.mxu0 0.0
  %907 = vmatprep.subr.mxu0 0.0
  %908 = vmatpush2.msra.mxu0 0.0
  %909 = vmatprep.subr.mxu0 0.0
  %910 = vmatpush2.msra.mxu0 0.0
  %911 = vmatprep.subr.mxu0 0.0
  %912 = vmatpush2.msra.mxu0 0.0
  %913 = vmatprep.subr.mxu0 0.0
  %914 = vmatpush2.msra.mxu0 0.0
  %915 = vmatprep.subr.mxu0 0.0
  %916 = vmatpush2.msra.mxu0 0.0
  %917 = vmatprep.subr.mxu0 0.0
  %918 = vmatpush2.msra.mxu0 0.0
  %919 = vmatprep.subr.mxu0 0.0
  %920 = vmatpush2.msra.mxu0 0.0
  %921 = vmatprep.subr.mxu0 0.0
  %922 = vmatpush2.msra.mxu0 0.0
  %923 = vmatprep.subr.mxu0 0.0
  %924 = vmatpush2.msra.mxu0 0.0
  %925 = vmatprep.subr.mxu0 0.0
  %926 = vmatpush2.msra.mxu0 0.0
  %927 = vmatprep.subr.mxu0 0.0
  %928 = vmatpush2.msra.mxu0 0.0
  %929 = vmatprep.subr.mxu0 0.0
  %930 = vmatpush2.msra.mxu0 0.0
  %931 = vmatprep.subr.mxu0 0.0
  %932 = vmatpush2.msra.mxu0 0.0
  %933 = vmatprep.subr.mxu0 0.0
  %934 = vmatpush2.msra.mxu0 0.0
  %935 = vmatprep.subr.mxu0 0.0
  %936 = vmatpush2.msra.mxu0 0.0
  %937 = vmatprep.mubr.f32.mxu0 0.0
  %938 = vmatmul.mubr.f32.gmra.mxu0 %v796
  %v939 = vpop.f32.mrf.mxu0
  %v940 = vadd.f32 0.0, %v939
  %v941 = vpop.f32.mrf.mxu0
  %v942 = vadd.f32 0.0, %v941
  %943 = vdwg.mxu0
  %v944 = vadd.f32 %v798, %v869
  %v945 = vadd.f32 %v799, %v871
  %v946 = vadd.f32 %v800, %v940
  %v947 = vadd.f32 %v801, %v942
  %v948 = vxor.u32 %v944, 2147483648
  %v949 = vmul.f32 %v948, 1.442695
  %v950 = vpow.pop %v949
  %v951 = vadd.f32 %v950, 1.0
  %v952 = vrcp.pop %v951
  %v953 = vmul.f32 1.0, %v952
  %v954 = vxor.u32 %v945, 2147483648
  %v955 = vmul.f32 %v954, 1.442695
  %v956 = vpow.pop %v955
  %v957 = vadd.f32 %v956, 1.0
  %v958 = vrcp.pop %v957
  %v959 = vmul.f32 1.0, %v958
  %v960 = vtanh.pop %v946
  %v961 = vxor.u32 %v947, 2147483648
  %v962 = vmul.f32 %v961, 1.442695
  %v963 = vpow.pop %v962
  %v964 = vadd.f32 %v963, 1.0
  %v965 = vrcp.pop %v964
  %v966 = vmul.f32 1.0, %v965
  %v967 = vmul.f32 %v959, %v794
  %v968 = vmul.f32 %v953, %v960
  %v969 = vadd.f32 %v967, %v968
  %v970 = vtanh.pop %v969
  %v971 = vmul.f32 %v966, %v970
  %s972 = scalar_lea.vmem [#allocation2], 96
  %v973 = vld [vmem:[%s972] sm:$0xff]
  %v974 = vld [vmem:[%s972 + $0x8] sm:$0xff]
  %v975 = vld [vmem:[%s972 + $0x10] sm:$0xff]
  %v976 = vld [vmem:[%s972 + $0x18] sm:$0xff]
  %977 = vmatprep.subr.mxu0 %v443
  %978 = vmatpush1.msra.mxu0 %v442
  %979 = vmatprep.subr.mxu0 %v439
  %980 = vmatpush1.msra.mxu0 %v438
  %981 = vmatprep.subr.mxu0 %v435
  %982 = vmatpush1.msra.mxu0 %v434
  %983 = vmatprep.subr.mxu0 %v431
  %984 = vmatpush1.msra.mxu0 %v430
  %985 = vmatprep.subr.mxu0 %v427
  %986 = vmatpush1.msra.mxu0 %v426
  %987 = vmatprep.subr.mxu0 %v423
  %988 = vmatpush1.msra.mxu0 %v422
  %989 = vmatprep.subr.mxu0 %v419
  %990 = vmatpush1.msra.mxu0 %v418
  %991 = vmatprep.subr.mxu0 %v415
  %992 = vmatpush1.msra.mxu0 %v414
  %993 = vmatprep.subr.mxu0 %v411
  %994 = vmatpush1.msra.mxu0 %v410
  %995 = vmatprep.subr.mxu0 %v407
  %996 = vmatpush1.msra.mxu0 %v406
  %997 = vmatprep.subr.mxu0 %v403
  %998 = vmatpush1.msra.mxu0 %v402
  %999 = vmatprep.subr.mxu0 %v399
  %1000 = vmatpush1.msra.mxu0 %v398
  %1001 = vmatprep.subr.mxu0 %v395
  %1002 = vmatpush1.msra.mxu0 %v394
  %1003 = vmatprep.subr.mxu0 %v391
  %1004 = vmatpush1.msra.mxu0 %v390
  %1005 = vmatprep.subr.mxu0 %v387
  %1006 = vmatpush1.msra.mxu0 %v386
  %1007 = vmatprep.subr.mxu0 %v383
  %1008 = vmatpush1.msra.mxu0 %v382
  %1009 = vmatprep.subr.mxu0 0.0
  %1010 = vmatpush2.msra.mxu0 0.0
  %1011 = vmatprep.subr.mxu0 0.0
  %1012 = vmatpush2.msra.mxu0 0.0
  %1013 = vmatprep.subr.mxu0 0.0
  %1014 = vmatpush2.msra.mxu0 0.0
  %1015 = vmatprep.subr.mxu0 0.0
  %1016 = vmatpush2.msra.mxu0 0.0
  %1017 = vmatprep.subr.mxu0 0.0
  %1018 = vmatpush2.msra.mxu0 0.0
  %1019 = vmatprep.subr.mxu0 0.0
  %1020 = vmatpush2.msra.mxu0 0.0
  %1021 = vmatprep.subr.mxu0 0.0
  %1022 = vmatpush2.msra.mxu0 0.0
  %1023 = vmatprep.subr.mxu0 0.0
  %1024 = vmatpush2.msra.mxu0 0.0
  %1025 = vmatprep.subr.mxu0 0.0
  %1026 = vmatpush2.msra.mxu0 0.0
  %1027 = vmatprep.subr.mxu0 0.0
  %1028 = vmatpush2.msra.mxu0 0.0
  %1029 = vmatprep.subr.mxu0 0.0
  %1030 = vmatpush2.msra.mxu0 0.0
  %1031 = vmatprep.subr.mxu0 0.0
  %1032 = vmatpush2.msra.mxu0 0.0
  %1033 = vmatprep.subr.mxu0 0.0
  %1034 = vmatpush2.msra.mxu0 0.0
  %1035 = vmatprep.subr.mxu0 0.0
  %1036 = vmatpush2.msra.mxu0 0.0
  %1037 = vmatprep.subr.mxu0 0.0
  %1038 = vmatpush2.msra.mxu0 0.0
  %1039 = vmatprep.subr.mxu0 0.0
  %1040 = vmatpush2.msra.mxu0 0.0
  %1041 = vmatprep.mubr.f32.mxu0 0.0
  %1042 = vmatmul.mubr.f32.gmra.mxu0 %v971
  %v1043 = vpop.f32.mrf.mxu0
  %v1044 = vadd.f32 0.0, %v1043
  %v1045 = vpop.f32.mrf.mxu0
  %v1046 = vadd.f32 0.0, %v1045
  %1047 = vdwg.mxu0
  %1048 = vmatprep.subr.mxu0 %v445
  %1049 = vmatpush1.msra.mxu0 %v444
  %1050 = vmatprep.subr.mxu0 %v441
  %1051 = vmatpush1.msra.mxu0 %v440
  %1052 = vmatprep.subr.mxu0 %v437
  %1053 = vmatpush1.msra.mxu0 %v436
  %1054 = vmatprep.subr.mxu0 %v433
  %1055 = vmatpush1.msra.mxu0 %v432
  %1056 = vmatprep.subr.mxu0 %v429
  %1057 = vmatpush1.msra.mxu0 %v428
  %1058 = vmatprep.subr.mxu0 %v425
  %1059 = vmatpush1.msra.mxu0 %v424
  %1060 = vmatprep.subr.mxu0 %v421
  %1061 = vmatpush1.msra.mxu0 %v420
  %1062 = vmatprep.subr.mxu0 %v417
  %1063 = vmatpush1.msra.mxu0 %v416
  %1064 = vmatprep.subr.mxu0 %v413
  %1065 = vmatpush1.msra.mxu0 %v412
  %1066 = vmatprep.subr.mxu0 %v409
  %1067 = vmatpush1.msra.mxu0 %v408
  %1068 = vmatprep.subr.mxu0 %v405
  %1069 = vmatpush1.msra.mxu0 %v404
  %1070 = vmatprep.subr.mxu0 %v401
  %1071 = vmatpush1.msra.mxu0 %v400
  %1072 = vmatprep.subr.mxu0 %v397
  %1073 = vmatpush1.msra.mxu0 %v396
  %1074 = vmatprep.subr.mxu0 %v393
  %1075 = vmatpush1.msra.mxu0 %v392
  %1076 = vmatprep.subr.mxu0 %v389
  %1077 = vmatpush1.msra.mxu0 %v388
  %1078 = vmatprep.subr.mxu0 %v385
  %1079 = vmatpush1.msra.mxu0 %v384
  %1080 = vmatprep.subr.mxu0 0.0
  %1081 = vmatpush2.msra.mxu0 0.0
  %1082 = vmatprep.subr.mxu0 0.0
  %1083 = vmatpush2.msra.mxu0 0.0
  %1084 = vmatprep.subr.mxu0 0.0
  %1085 = vmatpush2.msra.mxu0 0.0
  %1086 = vmatprep.subr.mxu0 0.0
  %1087 = vmatpush2.msra.mxu0 0.0
  %1088 = vmatprep.subr.mxu0 0.0
  %1089 = vmatpush2.msra.mxu0 0.0
  %1090 = vmatprep.subr.mxu0 0.0
  %1091 = vmatpush2.msra.mxu0 0.0
  %1092 = vmatprep.subr.mxu0 0.0
  %1093 = vmatpush2.msra.mxu0 0.0
  %1094 = vmatprep.subr.mxu0 0.0
  %1095 = vmatpush2.msra.mxu0 0.0
  %1096 = vmatprep.subr.mxu0 0.0
  %1097 = vmatpush2.msra.mxu0 0.0
  %1098 = vmatprep.subr.mxu0 0.0
  %1099 = vmatpush2.msra.mxu0 0.0
  %1100 = vmatprep.subr.mxu0 0.0
  %1101 = vmatpush2.msra.mxu0 0.0
  %1102 = vmatprep.subr.mxu0 0.0
  %1103 = vmatpush2.msra.mxu0 0.0
  %1104 = vmatprep.subr.mxu0 0.0
  %1105 = vmatpush2.msra.mxu0 0.0
  %1106 = vmatprep.subr.mxu0 0.0
  %1107 = vmatpush2.msra.mxu0 0.0
  %1108 = vmatprep.subr.mxu0 0.0
  %1109 = vmatpush2.msra.mxu0 0.0
  %1110 = vmatprep.subr.mxu0 0.0
  %1111 = vmatpush2.msra.mxu0 0.0
  %1112 = vmatprep.mubr.f32.mxu0 0.0
  %1113 = vmatmul.mubr.f32.gmra.mxu0 %v971
  %v1114 = vpop.f32.mrf.mxu0
  %v1115 = vadd.f32 0.0, %v1114
  %v1116 = vpop.f32.mrf.mxu0
  %v1117 = vadd.f32 0.0, %v1116
  %1118 = vdwg.mxu0
  %v1119 = vadd.f32 %v973, %v1044
  %v1120 = vadd.f32 %v974, %v1046
  %v1121 = vadd.f32 %v975, %v1115
  %v1122 = vadd.f32 %v976, %v1117
  %v1123 = vxor.u32 %v1119, 2147483648
  %v1124 = vmul.f32 %v1123, 1.442695
  %v1125 = vpow.pop %v1124
  %v1126 = vadd.f32 %v1125, 1.0
  %v1127 = vrcp.pop %v1126
  %v1128 = vmul.f32 1.0, %v1127
  %v1129 = vxor.u32 %v1120, 2147483648
  %v1130 = vmul.f32 %v1129, 1.442695
  %v1131 = vpow.pop %v1130
  %v1132 = vadd.f32 %v1131, 1.0
  %v1133 = vrcp.pop %v1132
  %v1134 = vmul.f32 1.0, %v1133
  %v1135 = vtanh.pop %v1121
  %v1136 = vxor.u32 %v1122, 2147483648
  %v1137 = vmul.f32 %v1136, 1.442695
  %v1138 = vpow.pop %v1137
  %v1139 = vadd.f32 %v1138, 1.0
  %v1140 = vrcp.pop %v1139
  %v1141 = vmul.f32 1.0, %v1140
  %v1142 = vmul.f32 %v1134, %v969
  %v1143 = vmul.f32 %v1128, %v1135
  %v1144 = vadd.f32 %v1142, %v1143
  %v1145 = vtanh.pop %v1144
  %v1146 = vmul.f32 %v1141, %v1145
  %s1147 = scalar_lea.vmem [#allocation2], 128
  %v1148 = vld [vmem:[%s1147] sm:$0xff]
  %v1149 = vld [vmem:[%s1147 + $0x8] sm:$0xff]
  %v1150 = vld [vmem:[%s1147 + $0x10] sm:$0xff]
  %v1151 = vld [vmem:[%s1147 + $0x18] sm:$0xff]
  %1152 = vmatprep.subr.mxu0 %v443
  %1153 = vmatpush1.msra.mxu0 %v442
  %1154 = vmatprep.subr.mxu0 %v439
  %1155 = vmatpush1.msra.mxu0 %v438
  %1156 = vmatprep.subr.mxu0 %v435
  %1157 = vmatpush1.msra.mxu0 %v434
  %1158 = vmatprep.subr.mxu0 %v431
  %1159 = vmatpush1.msra.mxu0 %v430
  %1160 = vmatprep.subr.mxu0 %v427
  %1161 = vmatpush1.msra.mxu0 %v426
  %1162 = vmatprep.subr.mxu0 %v423
  %1163 = vmatpush1.msra.mxu0 %v422
  %1164 = vmatprep.subr.mxu0 %v419
  %1165 = vmatpush1.msra.mxu0 %v418
  %1166 = vmatprep.subr.mxu0 %v415
  %1167 = vmatpush1.msra.mxu0 %v414
  %1168 = vmatprep.subr.mxu0 %v411
  %1169 = vmatpush1.msra.mxu0 %v410
  %1170 = vmatprep.subr.mxu0 %v407
  %1171 = vmatpush1.msra.mxu0 %v406
  %1172 = vmatprep.subr.mxu0 %v403
  %1173 = vmatpush1.msra.mxu0 %v402
  %1174 = vmatprep.subr.mxu0 %v399
  %1175 = vmatpush1.msra.mxu0 %v398
  %1176 = vmatprep.subr.mxu0 %v395
  %1177 = vmatpush1.msra.mxu0 %v394
  %1178 = vmatprep.subr.mxu0 %v391
  %1179 = vmatpush1.msra.mxu0 %v390
  %1180 = vmatprep.subr.mxu0 %v387
  %1181 = vmatpush1.msra.mxu0 %v386
  %1182 = vmatprep.subr.mxu0 %v383
  %1183 = vmatpush1.msra.mxu0 %v382
  %1184 = vmatprep.subr.mxu0 0.0
  %1185 = vmatpush2.msra.mxu0 0.0
  %1186 = vmatprep.subr.mxu0 0.0
  %1187 = vmatpush2.msra.mxu0 0.0
  %1188 = vmatprep.subr.mxu0 0.0
  %1189 = vmatpush2.msra.mxu0 0.0
  %1190 = vmatprep.subr.mxu0 0.0
  %1191 = vmatpush2.msra.mxu0 0.0
  %1192 = vmatprep.subr.mxu0 0.0
  %1193 = vmatpush2.msra.mxu0 0.0
  %1194 = vmatprep.subr.mxu0 0.0
  %1195 = vmatpush2.msra.mxu0 0.0
  %1196 = vmatprep.subr.mxu0 0.0
  %1197 = vmatpush2.msra.mxu0 0.0
  %1198 = vmatprep.subr.mxu0 0.0
  %1199 = vmatpush2.msra.mxu0 0.0
  %1200 = vmatprep.subr.mxu0 0.0
  %1201 = vmatpush2.msra.mxu0 0.0
  %1202 = vmatprep.subr.mxu0 0.0
  %1203 = vmatpush2.msra.mxu0 0.0
  %1204 = vmatprep.subr.mxu0 0.0
  %1205 = vmatpush2.msra.mxu0 0.0
  %1206 = vmatprep.subr.mxu0 0.0
  %1207 = vmatpush2.msra.mxu0 0.0
  %1208 = vmatprep.subr.mxu0 0.0
  %1209 = vmatpush2.msra.mxu0 0.0
  %1210 = vmatprep.subr.mxu0 0.0
  %1211 = vmatpush2.msra.mxu0 0.0
  %1212 = vmatprep.subr.mxu0 0.0
  %1213 = vmatpush2.msra.mxu0 0.0
  %1214 = vmatprep.subr.mxu0 0.0
  %1215 = vmatpush2.msra.mxu0 0.0
  %1216 = vmatprep.mubr.f32.mxu0 0.0
  %1217 = vmatmul.mubr.f32.gmra.mxu0 %v1146
  %v1218 = vpop.f32.mrf.mxu0
  %v1219 = vadd.f32 0.0, %v1218
  %v1220 = vpop.f32.mrf.mxu0
  %v1221 = vadd.f32 0.0, %v1220
  %1222 = vdwg.mxu0
  %1223 = vmatprep.subr.mxu0 %v445
  %1224 = vmatpush1.msra.mxu0 %v444
  %1225 = vmatprep.subr.mxu0 %v441
  %1226 = vmatpush1.msra.mxu0 %v440
  %1227 = vmatprep.subr.mxu0 %v437
  %1228 = vmatpush1.msra.mxu0 %v436
  %1229 = vmatprep.subr.mxu0 %v433
  %1230 = vmatpush1.msra.mxu0 %v432
  %1231 = vmatprep.subr.mxu0 %v429
  %1232 = vmatpush1.msra.mxu0 %v428
  %1233 = vmatprep.subr.mxu0 %v425
  %1234 = vmatpush1.msra.mxu0 %v424
  %1235 = vmatprep.subr.mxu0 %v421
  %1236 = vmatpush1.msra.mxu0 %v420
  %1237 = vmatprep.subr.mxu0 %v417
  %1238 = vmatpush1.msra.mxu0 %v416
  %1239 = vmatprep.subr.mxu0 %v413
  %1240 = vmatpush1.msra.mxu0 %v412
  %1241 = vmatprep.subr.mxu0 %v409
  %1242 = vmatpush1.msra.mxu0 %v408
  %1243 = vmatprep.subr.mxu0 %v405
  %1244 = vmatpush1.msra.mxu0 %v404
  %1245 = vmatprep.subr.mxu0 %v401
  %1246 = vmatpush1.msra.mxu0 %v400
  %1247 = vmatprep.subr.mxu0 %v397
  %1248 = vmatpush1.msra.mxu0 %v396
  %1249 = vmatprep.subr.mxu0 %v393
  %1250 = vmatpush1.msra.mxu0 %v392
  %1251 = vmatprep.subr.mxu0 %v389
  %1252 = vmatpush1.msra.mxu0 %v388
  %1253 = vmatprep.subr.mxu0 %v385
  %1254 = vmatpush1.msra.mxu0 %v384
  %1255 = vmatprep.subr.mxu0 0.0
  %1256 = vmatpush2.msra.mxu0 0.0
  %1257 = vmatprep.subr.mxu0 0.0
  %1258 = vmatpush2.msra.mxu0 0.0
  %1259 = vmatprep.subr.mxu0 0.0
  %1260 = vmatpush2.msra.mxu0 0.0
  %1261 = vmatprep.subr.mxu0 0.0
  %1262 = vmatpush2.msra.mxu0 0.0
  %1263 = vmatprep.subr.mxu0 0.0
  %1264 = vmatpush2.msra.mxu0 0.0
  %1265 = vmatprep.subr.mxu0 0.0
  %1266 = vmatpush2.msra.mxu0 0.0
  %1267 = vmatprep.subr.mxu0 0.0
  %1268 = vmatpush2.msra.mxu0 0.0
  %1269 = vmatprep.subr.mxu0 0.0
  %1270 = vmatpush2.msra.mxu0 0.0
  %1271 = vmatprep.subr.mxu0 0.0
  %1272 = vmatpush2.msra.mxu0 0.0
  %1273 = vmatprep.subr.mxu0 0.0
  %1274 = vmatpush2.msra.mxu0 0.0
  %1275 = vmatprep.subr.mxu0 0.0
  %1276 = vmatpush2.msra.mxu0 0.0
  %1277 = vmatprep.subr.mxu0 0.0
  %1278 = vmatpush2.msra.mxu0 0.0
  %1279 = vmatprep.subr.mxu0 0.0
  %1280 = vmatpush2.msra.mxu0 0.0
  %1281 = vmatprep.subr.mxu0 0.0
  %1282 = vmatpush2.msra.mxu0 0.0
  %1283 = vmatprep.subr.mxu0 0.0
  %1284 = vmatpush2.msra.mxu0 0.0
  %1285 = vmatprep.subr.mxu0 0.0
  %1286 = vmatpush2.msra.mxu0 0.0
  %1287 = vmatprep.mubr.f32.mxu0 0.0
  %1288 = vmatmul.mubr.f32.gmra.mxu0 %v1146
  %v1289 = vpop.f32.mrf.mxu0
  %v1290 = vadd.f32 0.0, %v1289
  %v1291 = vpop.f32.mrf.mxu0
  %v1292 = vadd.f32 0.0, %v1291
  %1293 = vdwg.mxu0
  %v1294 = vadd.f32 %v1148, %v1219
  %v1295 = vadd.f32 %v1149, %v1221
  %v1296 = vadd.f32 %v1150, %v1290
  %v1297 = vadd.f32 %v1151, %v1292
  %v1298 = vxor.u32 %v1294, 2147483648
  %v1299 = vmul.f32 %v1298, 1.442695
  %v1300 = vpow.pop %v1299
  %v1301 = vadd.f32 %v1300, 1.0
  %v1302 = vrcp.pop %v1301
  %v1303 = vmul.f32 1.0, %v1302
  %v1304 = vxor.u32 %v1295, 2147483648
  %v1305 = vmul.f32 %v1304, 1.442695
  %v1306 = vpow.pop %v1305
  %v1307 = vadd.f32 %v1306, 1.0
  %v1308 = vrcp.pop %v1307
  %v1309 = vmul.f32 1.0, %v1308
  %v1310 = vtanh.pop %v1296
  %v1311 = vxor.u32 %v1297, 2147483648
  %v1312 = vmul.f32 %v1311, 1.442695
  %v1313 = vpow.pop %v1312
  %v1314 = vadd.f32 %v1313, 1.0
  %v1315 = vrcp.pop %v1314
  %v1316 = vmul.f32 1.0, %v1315
  %v1317 = vmul.f32 %v1309, %v1144
  %v1318 = vmul.f32 %v1303, %v1310
  %v1319 = vadd.f32 %v1317, %v1318
  %v1320 = vtanh.pop %v1319
  %v1321 = vmul.f32 %v1316, %v1320
  %s1322 = scalar_lea.vmem [#allocation2], 160
  %v1323 = vld [vmem:[%s1322] sm:$0xff]
  %v1324 = vld [vmem:[%s1322 + $0x8] sm:$0xff]
  %v1325 = vld [vmem:[%s1322 + $0x10] sm:$0xff]
  %v1326 = vld [vmem:[%s1322 + $0x18] sm:$0xff]
  %1327 = vmatprep.subr.mxu0 %v443
  %1328 = vmatpush1.msra.mxu0 %v442
  %1329 = vmatprep.subr.mxu0 %v439
  %1330 = vmatpush1.msra.mxu0 %v438
  %1331 = vmatprep.subr.mxu0 %v435
  %1332 = vmatpush1.msra.mxu0 %v434
  %1333 = vmatprep.subr.mxu0 %v431
  %1334 = vmatpush1.msra.mxu0 %v430
  %1335 = vmatprep.subr.mxu0 %v427
  %1336 = vmatpush1.msra.mxu0 %v426
  %1337 = vmatprep.subr.mxu0 %v423
  %1338 = vmatpush1.msra.mxu0 %v422
  %1339 = vmatprep.subr.mxu0 %v419
  %1340 = vmatpush1.msra.mxu0 %v418
  %1341 = vmatprep.subr.mxu0 %v415
  %1342 = vmatpush1.msra.mxu0 %v414
  %1343 = vmatprep.subr.mxu0 %v411
  %1344 = vmatpush1.msra.mxu0 %v410
  %1345 = vmatprep.subr.mxu0 %v407
  %1346 = vmatpush1.msra.mxu0 %v406
  %1347 = vmatprep.subr.mxu0 %v403
  %1348 = vmatpush1.msra.mxu0 %v402
  %1349 = vmatprep.subr.mxu0 %v399
  %1350 = vmatpush1.msra.mxu0 %v398
  %1351 = vmatprep.subr.mxu0 %v395
  %1352 = vmatpush1.msra.mxu0 %v394
  %1353 = vmatprep.subr.mxu0 %v391
  %1354 = vmatpush1.msra.mxu0 %v390
  %1355 = vmatprep.subr.mxu0 %v387
  %1356 = vmatpush1.msra.mxu0 %v386
  %1357 = vmatprep.subr.mxu0 %v383
  %1358 = vmatpush1.msra.mxu0 %v382
  %1359 = vmatprep.subr.mxu0 0.0
  %1360 = vmatpush2.msra.mxu0 0.0
  %1361 = vmatprep.subr.mxu0 0.0
  %1362 = vmatpush2.msra.mxu0 0.0
  %1363 = vmatprep.subr.mxu0 0.0
  %1364 = vmatpush2.msra.mxu0 0.0
  %1365 = vmatprep.subr.mxu0 0.0
  %1366 = vmatpush2.msra.mxu0 0.0
  %1367 = vmatprep.subr.mxu0 0.0
  %1368 = vmatpush2.msra.mxu0 0.0
  %1369 = vmatprep.subr.mxu0 0.0
  %1370 = vmatpush2.msra.mxu0 0.0
  %1371 = vmatprep.subr.mxu0 0.0
  %1372 = vmatpush2.msra.mxu0 0.0
  %1373 = vmatprep.subr.mxu0 0.0
  %1374 = vmatpush2.msra.mxu0 0.0
  %1375 = vmatprep.subr.mxu0 0.0
  %1376 = vmatpush2.msra.mxu0 0.0
  %1377 = vmatprep.subr.mxu0 0.0
  %1378 = vmatpush2.msra.mxu0 0.0
  %1379 = vmatprep.subr.mxu0 0.0
  %1380 = vmatpush2.msra.mxu0 0.0
  %1381 = vmatprep.subr.mxu0 0.0
  %1382 = vmatpush2.msra.mxu0 0.0
  %1383 = vmatprep.subr.mxu0 0.0
  %1384 = vmatpush2.msra.mxu0 0.0
  %1385 = vmatprep.subr.mxu0 0.0
  %1386 = vmatpush2.msra.mxu0 0.0
  %1387 = vmatprep.subr.mxu0 0.0
  %1388 = vmatpush2.msra.mxu0 0.0
  %1389 = vmatprep.subr.mxu0 0.0
  %1390 = vmatpush2.msra.mxu0 0.0
  %1391 = vmatprep.mubr.f32.mxu0 0.0
  %1392 = vmatmul.mubr.f32.gmra.mxu0 %v1321
  %v1393 = vpop.f32.mrf.mxu0
  %v1394 = vadd.f32 0.0, %v1393
  %v1395 = vpop.f32.mrf.mxu0
  %v1396 = vadd.f32 0.0, %v1395
  %1397 = vdwg.mxu0
  %1398 = vmatprep.subr.mxu0 %v445
  %1399 = vmatpush1.msra.mxu0 %v444
  %1400 = vmatprep.subr.mxu0 %v441
  %1401 = vmatpush1.msra.mxu0 %v440
  %1402 = vmatprep.subr.mxu0 %v437
  %1403 = vmatpush1.msra.mxu0 %v436
  %1404 = vmatprep.subr.mxu0 %v433
  %1405 = vmatpush1.msra.mxu0 %v432
  %1406 = vmatprep.subr.mxu0 %v429
  %1407 = vmatpush1.msra.mxu0 %v428
  %1408 = vmatprep.subr.mxu0 %v425
  %1409 = vmatpush1.msra.mxu0 %v424
  %1410 = vmatprep.subr.mxu0 %v421
  %1411 = vmatpush1.msra.mxu0 %v420
  %1412 = vmatprep.subr.mxu0 %v417
  %1413 = vmatpush1.msra.mxu0 %v416
  %1414 = vmatprep.subr.mxu0 %v413
  %1415 = vmatpush1.msra.mxu0 %v412
  %1416 = vmatprep.subr.mxu0 %v409
  %1417 = vmatpush1.msra.mxu0 %v408
  %1418 = vmatprep.subr.mxu0 %v405
  %1419 = vmatpush1.msra.mxu0 %v404
  %1420 = vmatprep.subr.mxu0 %v401
  %1421 = vmatpush1.msra.mxu0 %v400
  %1422 = vmatprep.subr.mxu0 %v397
  %1423 = vmatpush1.msra.mxu0 %v396
  %1424 = vmatprep.subr.mxu0 %v393
  %1425 = vmatpush1.msra.mxu0 %v392
  %1426 = vmatprep.subr.mxu0 %v389
  %1427 = vmatpush1.msra.mxu0 %v388
  %1428 = vmatprep.subr.mxu0 %v385
  %1429 = vmatpush1.msra.mxu0 %v384
  %1430 = vmatprep.subr.mxu0 0.0
  %1431 = vmatpush2.msra.mxu0 0.0
  %1432 = vmatprep.subr.mxu0 0.0
  %1433 = vmatpush2.msra.mxu0 0.0
  %1434 = vmatprep.subr.mxu0 0.0
  %1435 = vmatpush2.msra.mxu0 0.0
  %1436 = vmatprep.subr.mxu0 0.0
  %1437 = vmatpush2.msra.mxu0 0.0
  %1438 = vmatprep.subr.mxu0 0.0
  %1439 = vmatpush2.msra.mxu0 0.0
  %1440 = vmatprep.subr.mxu0 0.0
  %1441 = vmatpush2.msra.mxu0 0.0
  %1442 = vmatprep.subr.mxu0 0.0
  %1443 = vmatpush2.msra.mxu0 0.0
  %1444 = vmatprep.subr.mxu0 0.0
  %1445 = vmatpush2.msra.mxu0 0.0
  %1446 = vmatprep.subr.mxu0 0.0
  %1447 = vmatpush2.msra.mxu0 0.0
  %1448 = vmatprep.subr.mxu0 0.0
  %1449 = vmatpush2.msra.mxu0 0.0
  %1450 = vmatprep.subr.mxu0 0.0
  %1451 = vmatpush2.msra.mxu0 0.0
  %1452 = vmatprep.subr.mxu0 0.0
  %1453 = vmatpush2.msra.mxu0 0.0
  %1454 = vmatprep.subr.mxu0 0.0
  %1455 = vmatpush2.msra.mxu0 0.0
  %1456 = vmatprep.subr.mxu0 0.0
  %1457 = vmatpush2.msra.mxu0 0.0
  %1458 = vmatprep.subr.mxu0 0.0
  %1459 = vmatpush2.msra.mxu0 0.0
  %1460 = vmatprep.subr.mxu0 0.0
  %1461 = vmatpush2.msra.mxu0 0.0
  %1462 = vmatprep.mubr.f32.mxu0 0.0
  %1463 = vmatmul.mubr.f32.gmra.mxu0 %v1321
  %v1464 = vpop.f32.mrf.mxu0
  %v1465 = vadd.f32 0.0, %v1464
  %v1466 = vpop.f32.mrf.mxu0
  %v1467 = vadd.f32 0.0, %v1466
  %1468 = vdwg.mxu0
  %v1469 = vadd.f32 %v1323, %v1394
  %v1470 = vadd.f32 %v1324, %v1396
  %v1471 = vadd.f32 %v1325, %v1465
  %v1472 = vadd.f32 %v1326, %v1467
  %v1473 = vxor.u32 %v1469, 2147483648
  %v1474 = vmul.f32 %v1473, 1.442695
  %v1475 = vpow.pop %v1474
  %v1476 = vadd.f32 %v1475, 1.0
  %v1477 = vrcp.pop %v1476
  %v1478 = vmul.f32 1.0, %v1477
  %v1479 = vxor.u32 %v1470, 2147483648
  %v1480 = vmul.f32 %v1479, 1.442695
  %v1481 = vpow.pop %v1480
  %v1482 = vadd.f32 %v1481, 1.0
  %v1483 = vrcp.pop %v1482
  %v1484 = vmul.f32 1.0, %v1483
  %v1485 = vtanh.pop %v1471
  %v1486 = vxor.u32 %v1472, 2147483648
  %v1487 = vmul.f32 %v1486, 1.442695
  %v1488 = vpow.pop %v1487
  %v1489 = vadd.f32 %v1488, 1.0
  %v1490 = vrcp.pop %v1489
  %v1491 = vmul.f32 1.0, %v1490
  %v1492 = vmul.f32 %v1484, %v1319
  %v1493 = vmul.f32 %v1478, %v1485
  %v1494 = vadd.f32 %v1492, %v1493
  %v1495 = vtanh.pop %v1494
  %v1496 = vmul.f32 %v1491, %v1495
  %s1497 = scalar_lea.vmem [#allocation2], 192
  %v1498 = vld [vmem:[%s1497] sm:$0xff]
  %v1499 = vld [vmem:[%s1497 + $0x8] sm:$0xff]
  %v1500 = vld [vmem:[%s1497 + $0x10] sm:$0xff]
  %v1501 = vld [vmem:[%s1497 + $0x18] sm:$0xff]
  %1502 = vmatprep.subr.mxu0 %v443
  %1503 = vmatpush1.msra.mxu0 %v442
  %1504 = vmatprep.subr.mxu0 %v439
  %1505 = vmatpush1.msra.mxu0 %v438
  %1506 = vmatprep.subr.mxu0 %v435
  %1507 = vmatpush1.msra.mxu0 %v434
  %1508 = vmatprep.subr.mxu0 %v431
  %1509 = vmatpush1.msra.mxu0 %v430
  %1510 = vmatprep.subr.mxu0 %v427
  %1511 = vmatpush1.msra.mxu0 %v426
  %1512 = vmatprep.subr.mxu0 %v423
  %1513 = vmatpush1.msra.mxu0 %v422
  %1514 = vmatprep.subr.mxu0 %v419
  %1515 = vmatpush1.msra.mxu0 %v418
  %1516 = vmatprep.subr.mxu0 %v415
  %1517 = vmatpush1.msra.mxu0 %v414
  %1518 = vmatprep.subr.mxu0 %v411
  %1519 = vmatpush1.msra.mxu0 %v410
  %1520 = vmatprep.subr.mxu0 %v407
  %1521 = vmatpush1.msra.mxu0 %v406
  %1522 = vmatprep.subr.mxu0 %v403
  %1523 = vmatpush1.msra.mxu0 %v402
  %1524 = vmatprep.subr.mxu0 %v399
  %1525 = vmatpush1.msra.mxu0 %v398
  %1526 = vmatprep.subr.mxu0 %v395
  %1527 = vmatpush1.msra.mxu0 %v394
  %1528 = vmatprep.subr.mxu0 %v391
  %1529 = vmatpush1.msra.mxu0 %v390
  %1530 = vmatprep.subr.mxu0 %v387
  %1531 = vmatpush1.msra.mxu0 %v386
  %1532 = vmatprep.subr.mxu0 %v383
  %1533 = vmatpush1.msra.mxu0 %v382
  %1534 = vmatprep.subr.mxu0 0.0
  %1535 = vmatpush2.msra.mxu0 0.0
  %1536 = vmatprep.subr.mxu0 0.0
  %1537 = vmatpush2.msra.mxu0 0.0
  %1538 = vmatprep.subr.mxu0 0.0
  %1539 = vmatpush2.msra.mxu0 0.0
  %1540 = vmatprep.subr.mxu0 0.0
  %1541 = vmatpush2.msra.mxu0 0.0
  %1542 = vmatprep.subr.mxu0 0.0
  %1543 = vmatpush2.msra.mxu0 0.0
  %1544 = vmatprep.subr.mxu0 0.0
  %1545 = vmatpush2.msra.mxu0 0.0
  %1546 = vmatprep.subr.mxu0 0.0
  %1547 = vmatpush2.msra.mxu0 0.0
  %1548 = vmatprep.subr.mxu0 0.0
  %1549 = vmatpush2.msra.mxu0 0.0
  %1550 = vmatprep.subr.mxu0 0.0
  %1551 = vmatpush2.msra.mxu0 0.0
  %1552 = vmatprep.subr.mxu0 0.0
  %1553 = vmatpush2.msra.mxu0 0.0
  %1554 = vmatprep.subr.mxu0 0.0
  %1555 = vmatpush2.msra.mxu0 0.0
  %1556 = vmatprep.subr.mxu0 0.0
  %1557 = vmatpush2.msra.mxu0 0.0
  %1558 = vmatprep.subr.mxu0 0.0
  %1559 = vmatpush2.msra.mxu0 0.0
  %1560 = vmatprep.subr.mxu0 0.0
  %1561 = vmatpush2.msra.mxu0 0.0
  %1562 = vmatprep.subr.mxu0 0.0
  %1563 = vmatpush2.msra.mxu0 0.0
  %1564 = vmatprep.subr.mxu0 0.0
  %1565 = vmatpush2.msra.mxu0 0.0
  %1566 = vmatprep.mubr.f32.mxu0 0.0
  %1567 = vmatmul.mubr.f32.gmra.mxu0 %v1496
  %v1568 = vpop.f32.mrf.mxu0
  %v1569 = vadd.f32 0.0, %v1568
  %v1570 = vpop.f32.mrf.mxu0
  %v1571 = vadd.f32 0.0, %v1570
  %1572 = vdwg.mxu0
  %1573 = vmatprep.subr.mxu0 %v445
  %1574 = vmatpush1.msra.mxu0 %v444
  %1575 = vmatprep.subr.mxu0 %v441
  %1576 = vmatpush1.msra.mxu0 %v440
  %1577 = vmatprep.subr.mxu0 %v437
  %1578 = vmatpush1.msra.mxu0 %v436
  %1579 = vmatprep.subr.mxu0 %v433
  %1580 = vmatpush1.msra.mxu0 %v432
  %1581 = vmatprep.subr.mxu0 %v429
  %1582 = vmatpush1.msra.mxu0 %v428
  %1583 = vmatprep.subr.mxu0 %v425
  %1584 = vmatpush1.msra.mxu0 %v424
  %1585 = vmatprep.subr.mxu0 %v421
  %1586 = vmatpush1.msra.mxu0 %v420
  %1587 = vmatprep.subr.mxu0 %v417
  %1588 = vmatpush1.msra.mxu0 %v416
  %1589 = vmatprep.subr.mxu0 %v413
  %1590 = vmatpush1.msra.mxu0 %v412
  %1591 = vmatprep.subr.mxu0 %v409
  %1592 = vmatpush1.msra.mxu0 %v408
  %1593 = vmatprep.subr.mxu0 %v405
  %1594 = vmatpush1.msra.mxu0 %v404
  %1595 = vmatprep.subr.mxu0 %v401
  %1596 = vmatpush1.msra.mxu0 %v400
  %1597 = vmatprep.subr.mxu0 %v397
  %1598 = vmatpush1.msra.mxu0 %v396
  %1599 = vmatprep.subr.mxu0 %v393
  %1600 = vmatpush1.msra.mxu0 %v392
  %1601 = vmatprep.subr.mxu0 %v389
  %1602 = vmatpush1.msra.mxu0 %v388
  %1603 = vmatprep.subr.mxu0 %v385
  %1604 = vmatpush1.msra.mxu0 %v384
  %1605 = vmatprep.subr.mxu0 0.0
  %1606 = vmatpush2.msra.mxu0 0.0
  %1607 = vmatprep.subr.mxu0 0.0
  %1608 = vmatpush2.msra.mxu0 0.0
  %1609 = vmatprep.subr.mxu0 0.0
  %1610 = vmatpush2.msra.mxu0 0.0
  %1611 = vmatprep.subr.mxu0 0.0
  %1612 = vmatpush2.msra.mxu0 0.0
  %1613 = vmatprep.subr.mxu0 0.0
  %1614 = vmatpush2.msra.mxu0 0.0
  %1615 = vmatprep.subr.mxu0 0.0
  %1616 = vmatpush2.msra.mxu0 0.0
  %1617 = vmatprep.subr.mxu0 0.0
  %1618 = vmatpush2.msra.mxu0 0.0
  %1619 = vmatprep.subr.mxu0 0.0
  %1620 = vmatpush2.msra.mxu0 0.0
  %1621 = vmatprep.subr.mxu0 0.0
  %1622 = vmatpush2.msra.mxu0 0.0
  %1623 = vmatprep.subr.mxu0 0.0
  %1624 = vmatpush2.msra.mxu0 0.0
  %1625 = vmatprep.subr.mxu0 0.0
  %1626 = vmatpush2.msra.mxu0 0.0
  %1627 = vmatprep.subr.mxu0 0.0
  %1628 = vmatpush2.msra.mxu0 0.0
  %1629 = vmatprep.subr.mxu0 0.0
  %1630 = vmatpush2.msra.mxu0 0.0
  %1631 = vmatprep.subr.mxu0 0.0
  %1632 = vmatpush2.msra.mxu0 0.0
  %1633 = vmatprep.subr.mxu0 0.0
  %1634 = vmatpush2.msra.mxu0 0.0
  %1635 = vmatprep.subr.mxu0 0.0
  %1636 = vmatpush2.msra.mxu0 0.0
  %1637 = vmatprep.mubr.f32.mxu0 0.0
  %1638 = vmatmul.mubr.f32.gmra.mxu0 %v1496
  %v1639 = vpop.f32.mrf.mxu0
  %v1640 = vadd.f32 0.0, %v1639
  %v1641 = vpop.f32.mrf.mxu0
  %v1642 = vadd.f32 0.0, %v1641
  %1643 = vdwg.mxu0
  %v1644 = vadd.f32 %v1498, %v1569
  %v1645 = vadd.f32 %v1499, %v1571
  %v1646 = vadd.f32 %v1500, %v1640
  %v1647 = vadd.f32 %v1501, %v1642
  %v1648 = vxor.u32 %v1644, 2147483648
  %v1649 = vmul.f32 %v1648, 1.442695
  %v1650 = vpow.pop %v1649
  %v1651 = vadd.f32 %v1650, 1.0
  %v1652 = vrcp.pop %v1651
  %v1653 = vmul.f32 1.0, %v1652
  %v1654 = vxor.u32 %v1645, 2147483648
  %v1655 = vmul.f32 %v1654, 1.442695
  %v1656 = vpow.pop %v1655
  %v1657 = vadd.f32 %v1656, 1.0
  %v1658 = vrcp.pop %v1657
  %v1659 = vmul.f32 1.0, %v1658
  %v1660 = vtanh.pop %v1646
  %v1661 = vxor.u32 %v1647, 2147483648
  %v1662 = vmul.f32 %v1661, 1.442695
  %v1663 = vpow.pop %v1662
  %v1664 = vadd.f32 %v1663, 1.0
  %v1665 = vrcp.pop %v1664
  %v1666 = vmul.f32 1.0, %v1665
  %v1667 = vmul.f32 %v1659, %v1494
  %v1668 = vmul.f32 %v1653, %v1660
  %v1669 = vadd.f32 %v1667, %v1668
  %v1670 = vtanh.pop %v1669
  %v1671 = vmul.f32 %v1666, %v1670
  %s1672 = scalar_lea.vmem [#allocation2], 224
  %v1673 = vld [vmem:[%s1672] sm:$0xff]
  %v1674 = vld [vmem:[%s1672 + $0x8] sm:$0xff]
  %v1675 = vld [vmem:[%s1672 + $0x10] sm:$0xff]
  %v1676 = vld [vmem:[%s1672 + $0x18] sm:$0xff]
  %1677 = vmatprep.subr.mxu0 %v443
  %1678 = vmatpush1.msra.mxu0 %v442
  %1679 = vmatprep.subr.mxu0 %v439
  %1680 = vmatpush1.msra.mxu0 %v438
  %1681 = vmatprep.subr.mxu0 %v435
  %1682 = vmatpush1.msra.mxu0 %v434
  %1683 = vmatprep.subr.mxu0 %v431
  %1684 = vmatpush1.msra.mxu0 %v430
  %1685 = vmatprep.subr.mxu0 %v427
  %1686 = vmatpush1.msra.mxu0 %v426
  %1687 = vmatprep.subr.mxu0 %v423
  %1688 = vmatpush1.msra.mxu0 %v422
  %1689 = vmatprep.subr.mxu0 %v419
  %1690 = vmatpush1.msra.mxu0 %v418
  %1691 = vmatprep.subr.mxu0 %v415
  %1692 = vmatpush1.msra.mxu0 %v414
  %1693 = vmatprep.subr.mxu0 %v411
  %1694 = vmatpush1.msra.mxu0 %v410
  %1695 = vmatprep.subr.mxu0 %v407
  %1696 = vmatpush1.msra.mxu0 %v406
  %1697 = vmatprep.subr.mxu0 %v403
  %1698 = vmatpush1.msra.mxu0 %v402
  %1699 = vmatprep.subr.mxu0 %v399
  %1700 = vmatpush1.msra.mxu0 %v398
  %1701 = vmatprep.subr.mxu0 %v395
  %1702 = vmatpush1.msra.mxu0 %v394
  %1703 = vmatprep.subr.mxu0 %v391
  %1704 = vmatpush1.msra.mxu0 %v390
  %1705 = vmatprep.subr.mxu0 %v387
  %1706 = vmatpush1.msra.mxu0 %v386
  %1707 = vmatprep.subr.mxu0 %v383
  %1708 = vmatpush1.msra.mxu0 %v382
  %1709 = vmatprep.subr.mxu0 0.0
  %1710 = vmatpush2.msra.mxu0 0.0
  %1711 = vmatprep.subr.mxu0 0.0
  %1712 = vmatpush2.msra.mxu0 0.0
  %1713 = vmatprep.subr.mxu0 0.0
  %1714 = vmatpush2.msra.mxu0 0.0
  %1715 = vmatprep.subr.mxu0 0.0
  %1716 = vmatpush2.msra.mxu0 0.0
  %1717 = vmatprep.subr.mxu0 0.0
  %1718 = vmatpush2.msra.mxu0 0.0
  %1719 = vmatprep.subr.mxu0 0.0
  %1720 = vmatpush2.msra.mxu0 0.0
  %1721 = vmatprep.subr.mxu0 0.0
  %1722 = vmatpush2.msra.mxu0 0.0
  %1723 = vmatprep.subr.mxu0 0.0
  %1724 = vmatpush2.msra.mxu0 0.0
  %1725 = vmatprep.subr.mxu0 0.0
  %1726 = vmatpush2.msra.mxu0 0.0
  %1727 = vmatprep.subr.mxu0 0.0
  %1728 = vmatpush2.msra.mxu0 0.0
  %1729 = vmatprep.subr.mxu0 0.0
  %1730 = vmatpush2.msra.mxu0 0.0
  %1731 = vmatprep.subr.mxu0 0.0
  %1732 = vmatpush2.msra.mxu0 0.0
  %1733 = vmatprep.subr.mxu0 0.0
  %1734 = vmatpush2.msra.mxu0 0.0
  %1735 = vmatprep.subr.mxu0 0.0
  %1736 = vmatpush2.msra.mxu0 0.0
  %1737 = vmatprep.subr.mxu0 0.0
  %1738 = vmatpush2.msra.mxu0 0.0
  %1739 = vmatprep.subr.mxu0 0.0
  %1740 = vmatpush2.msra.mxu0 0.0
  %1741 = vmatprep.mubr.f32.mxu0 0.0
  %1742 = vmatmul.mubr.f32.gmra.mxu0 %v1671
  %v1743 = vpop.f32.mrf.mxu0
  %v1744 = vadd.f32 0.0, %v1743
  %v1745 = vpop.f32.mrf.mxu0
  %v1746 = vadd.f32 0.0, %v1745
  %1747 = vdwg.mxu0
  %1748 = vmatprep.subr.mxu0 %v445
  %1749 = vmatpush1.msra.mxu0 %v444
  %1750 = vmatprep.subr.mxu0 %v441
  %1751 = vmatpush1.msra.mxu0 %v440
  %1752 = vmatprep.subr.mxu0 %v437
  %1753 = vmatpush1.msra.mxu0 %v436
  %1754 = vmatprep.subr.mxu0 %v433
  %1755 = vmatpush1.msra.mxu0 %v432
  %1756 = vmatprep.subr.mxu0 %v429
  %1757 = vmatpush1.msra.mxu0 %v428
  %1758 = vmatprep.subr.mxu0 %v425
  %1759 = vmatpush1.msra.mxu0 %v424
  %1760 = vmatprep.subr.mxu0 %v421
  %1761 = vmatpush1.msra.mxu0 %v420
  %1762 = vmatprep.subr.mxu0 %v417
  %1763 = vmatpush1.msra.mxu0 %v416
  %1764 = vmatprep.subr.mxu0 %v413
  %1765 = vmatpush1.msra.mxu0 %v412
  %1766 = vmatprep.subr.mxu0 %v409
  %1767 = vmatpush1.msra.mxu0 %v408
  %1768 = vmatprep.subr.mxu0 %v405
  %1769 = vmatpush1.msra.mxu0 %v404
  %1770 = vmatprep.subr.mxu0 %v401
  %1771 = vmatpush1.msra.mxu0 %v400
  %1772 = vmatprep.subr.mxu0 %v397
  %1773 = vmatpush1.msra.mxu0 %v396
  %1774 = vmatprep.subr.mxu0 %v393
  %1775 = vmatpush1.msra.mxu0 %v392
  %1776 = vmatprep.subr.mxu0 %v389
  %1777 = vmatpush1.msra.mxu0 %v388
  %1778 = vmatprep.subr.mxu0 %v385
  %1779 = vmatpush1.msra.mxu0 %v384
  %1780 = vmatprep.subr.mxu0 0.0
  %1781 = vmatpush2.msra.mxu0 0.0
  %1782 = vmatprep.subr.mxu0 0.0
  %1783 = vmatpush2.msra.mxu0 0.0
  %1784 = vmatprep.subr.mxu0 0.0
  %1785 = vmatpush2.msra.mxu0 0.0
  %1786 = vmatprep.subr.mxu0 0.0
  %1787 = vmatpush2.msra.mxu0 0.0
  %1788 = vmatprep.subr.mxu0 0.0
  %1789 = vmatpush2.msra.mxu0 0.0
  %1790 = vmatprep.subr.mxu0 0.0
  %1791 = vmatpush2.msra.mxu0 0.0
  %1792 = vmatprep.subr.mxu0 0.0
  %1793 = vmatpush2.msra.mxu0 0.0
  %1794 = vmatprep.subr.mxu0 0.0
  %1795 = vmatpush2.msra.mxu0 0.0
  %1796 = vmatprep.subr.mxu0 0.0
  %1797 = vmatpush2.msra.mxu0 0.0
  %1798 = vmatprep.subr.mxu0 0.0
  %1799 = vmatpush2.msra.mxu0 0.0
  %1800 = vmatprep.subr.mxu0 0.0
  %1801 = vmatpush2.msra.mxu0 0.0
  %1802 = vmatprep.subr.mxu0 0.0
  %1803 = vmatpush2.msra.mxu0 0.0
  %1804 = vmatprep.subr.mxu0 0.0
  %1805 = vmatpush2.msra.mxu0 0.0
  %1806 = vmatprep.subr.mxu0 0.0
  %1807 = vmatpush2.msra.mxu0 0.0
  %1808 = vmatprep.subr.mxu0 0.0
  %1809 = vmatpush2.msra.mxu0 0.0
  %1810 = vmatprep.subr.mxu0 0.0
  %1811 = vmatpush2.msra.mxu0 0.0
  %1812 = vmatprep.mubr.f32.mxu0 0.0
  %1813 = vmatmul.mubr.f32.gmra.mxu0 %v1671
  %v1814 = vpop.f32.mrf.mxu0
  %v1815 = vadd.f32 0.0, %v1814
  %v1816 = vpop.f32.mrf.mxu0
  %v1817 = vadd.f32 0.0, %v1816
  %1818 = vdwg.mxu0
  %v1819 = vadd.f32 %v1673, %v1744
  %v1820 = vadd.f32 %v1674, %v1746
  %v1821 = vadd.f32 %v1675, %v1815
  %v1822 = vadd.f32 %v1676, %v1817
  %v1823 = vxor.u32 %v1819, 2147483648
  %v1824 = vmul.f32 %v1823, 1.442695
  %v1825 = vpow.pop %v1824
  %v1826 = vadd.f32 %v1825, 1.0
  %v1827 = vrcp.pop %v1826
  %v1828 = vmul.f32 1.0, %v1827
  %v1829 = vxor.u32 %v1820, 2147483648
  %v1830 = vmul.f32 %v1829, 1.442695
  %v1831 = vpow.pop %v1830
  %v1832 = vadd.f32 %v1831, 1.0
  %v1833 = vrcp.pop %v1832
  %v1834 = vmul.f32 1.0, %v1833
  %v1835 = vtanh.pop %v1821
  %v1836 = vxor.u32 %v1822, 2147483648
  %v1837 = vmul.f32 %v1836, 1.442695
  %v1838 = vpow.pop %v1837
  %v1839 = vadd.f32 %v1838, 1.0
  %v1840 = vrcp.pop %v1839
  %v1841 = vmul.f32 1.0, %v1840
  %v1842 = vmul.f32 %v1834, %v1669
  %v1843 = vmul.f32 %v1828, %v1835
  %v1844 = vadd.f32 %v1842, %v1843
  %v1845 = vtanh.pop %v1844
  %v1846 = vmul.f32 %v1841, %v1845
  %1847 = vst [vmem:[#allocation3] sm:$0xff] %v1846
  %1848 = vst [vmem:[#allocation4] sm:$0xff] %v1844
  // Predicated region
  $region30: #{_rnn_forward_impl.3} parent=0 // pred_check
    %p1849 = pneg %p23
  $region31: #{_rnn_forward_impl.3} parent=0 // pred_check_branch
    %1851 = sbr.rel (%p1849) target = $region33
  $region32: #{_rnn_forward_impl.3} parent=0 // pred_region
    %v1852 = vld [vmem:[%s4] sm:$0xff]
    %v1853 = vld [vmem:[%s4 + $0x8] sm:$0xff]
    %v1854 = vld [vmem:[%s4 + $0x10] sm:$0xff]
    %v1855 = vld [vmem:[%s4 + $0x18] sm:$0xff]
    %v1856 = vld [vmem:[%s4 + $0x20] sm:$0xff]
    %v1857 = vld [vmem:[%s4 + $0x28] sm:$0xff]
    %v1858 = vld [vmem:[%s4 + $0x30] sm:$0xff]
    %v1859 = vld [vmem:[%s4 + $0x38] sm:$0xff]
    %v1860 = vld [vmem:[%s4 + $0x40] sm:$0xff]
    %v1861 = vld [vmem:[%s4 + $0x48] sm:$0xff]
    %v1862 = vld [vmem:[%s4 + $0x50] sm:$0xff]
    %v1863 = vld [vmem:[%s4 + $0x58] sm:$0xff]
    %v1864 = vld [vmem:[%s4 + $0x60] sm:$0xff]
    %v1865 = vld [vmem:[%s4 + $0x68] sm:$0xff]
    %v1866 = vld [vmem:[%s4 + $0x70] sm:$0xff]
    %v1867 = vld [vmem:[%s4 + $0x78] sm:$0xff]
    %v1868 = vld [vmem:[%s5] sm:$0x1]
    %v1870 = vlaneseq
    %v1871 = vshrl.u32 %v1870, 7
    %v1872 = vsub.s32 0, %v1871
    %v1873 = vrot.slane %v1868, %v1872
    %1875 = vmatprep.subr.mxu0 0.0
    %1876 = vmatpush1.msra.mxu0 %v1867
    %1877 = vmatprep.subr.mxu0 0.0
    %1878 = vmatpush1.msra.mxu0 %v1866
    %1879 = vmatprep.subr.mxu0 0.0
    %1880 = vmatpush1.msra.mxu0 %v1865
    %1881 = vmatprep.subr.mxu0 0.0
    %1882 = vmatpush1.msra.mxu0 %v1864
    %1883 = vmatprep.subr.mxu0 0.0
    %1884 = vmatpush1.msra.mxu0 %v1863
    %1885 = vmatprep.subr.mxu0 0.0
    %1886 = vmatpush1.msra.mxu0 %v1862
    %1887 = vmatprep.subr.mxu0 0.0
    %1888 = vmatpush1.msra.mxu0 %v1861
    %1889 = vmatprep.subr.mxu0 0.0
    %1890 = vmatpush1.msra.mxu0 %v1860
    %1891 = vmatprep.subr.mxu0 0.0
    %1892 = vmatpush1.msra.mxu0 %v1859
    %1893 = vmatprep.subr.mxu0 0.0
    %1894 = vmatpush1.msra.mxu0 %v1858
    %1895 = vmatprep.subr.mxu0 0.0
    %1896 = vmatpush1.msra.mxu0 %v1857
    %1897 = vmatprep.subr.mxu0 0.0
    %1898 = vmatpush1.msra.mxu0 %v1856
    %1899 = vmatprep.subr.mxu0 0.0
    %1900 = vmatpush1.msra.mxu0 %v1855
    %1901 = vmatprep.subr.mxu0 0.0
    %1902 = vmatpush1.msra.mxu0 %v1854
    %1903 = vmatprep.subr.mxu0 0.0
    %1904 = vmatpush1.msra.mxu0 %v1853
    %1905 = vmatprep.subr.mxu0 0.0
    %1906 = vmatpush1.msra.mxu0 %v1852
    %1907 = vmatprep.subr.mxu0 0.0
    %1908 = vmatpush2.msra.mxu0 0.0
    %1909 = vmatprep.subr.mxu0 0.0
    %1910 = vmatpush2.msra.mxu0 0.0
    %1911 = vmatprep.subr.mxu0 0.0
    %1912 = vmatpush2.msra.mxu0 0.0
    %1913 = vmatprep.subr.mxu0 0.0
    %1914 = vmatpush2.msra.mxu0 0.0
    %1915 = vmatprep.subr.mxu0 0.0
    %1916 = vmatpush2.msra.mxu0 0.0
    %1917 = vmatprep.subr.mxu0 0.0
    %1918 = vmatpush2.msra.mxu0 0.0
    %1919 = vmatprep.subr.mxu0 0.0
    %1920 = vmatpush2.msra.mxu0 0.0
    %1921 = vmatprep.subr.mxu0 0.0
    %1922 = vmatpush2.msra.mxu0 0.0
    %1923 = vmatprep.subr.mxu0 0.0
    %1924 = vmatpush2.msra.mxu0 0.0
    %1925 = vmatprep.subr.mxu0 0.0
    %1926 = vmatpush2.msra.mxu0 0.0
    %1927 = vmatprep.subr.mxu0 0.0
    %1928 = vmatpush2.msra.mxu0 0.0
    %1929 = vmatprep.subr.mxu0 0.0
    %1930 = vmatpush2.msra.mxu0 0.0
    %1931 = vmatprep.subr.mxu0 0.0
    %1932 = vmatpush2.msra.mxu0 0.0
    %1933 = vmatprep.subr.mxu0 0.0
    %1934 = vmatpush2.msra.mxu0 0.0
    %1935 = vmatprep.subr.mxu0 0.0
    %1936 = vmatpush2.msra.mxu0 0.0
    %1937 = vmatprep.subr.mxu0 0.0
    %1938 = vmatpush2.msra.mxu0 0.0
    %1939 = vmatprep.mubr.f32.mxu0 0.0
    %1940 = vmatmul.mubr.f32.gmra.mxu0 %v1846
    %v1941 = vpop.f32.mrf.mxu0
    %v1942 = vadd.f32 %v1873, %v1941
    %v1943 = vpop.f32.mrf.mxu0
    %1944 = vdwg.mxu0
    %1945 = vst [vmem:[%s6] sm:$0xff] %v1942
  $region33: #{_rnn_forward_impl.3} parent=0 // pred_fallthru
    _
  // Predicated region
  $region34: #{_rnn_forward_impl.3} parent=0 // pred_check
    _
  $region35: #{_rnn_forward_impl.3} parent=0 // pred_check_branch
    %1947 = sbr.rel (0) target = $region37
  $region36: #{_rnn_forward_impl.3} parent=0 // pred_region
    _
  $region37: #{_rnn_forward_impl.3} parent=0 // pred_fallthru
    _
  // Predicated region
  $region38: #{_rnn_forward_impl.3} parent=0 // pred_check
    _
  $region39: #{_rnn_forward_impl.3} parent=0 // pred_check_branch
    %1949 = sbr.rel (0) target = $region41
  $region40: #{_rnn_forward_impl.3} parent=0 // pred_region
    _
  $region41: #{_rnn_forward_impl.3} parent=0 // pred_fallthru
    _

// kernel: _rnn_forward_impl.2
$region0: #{_rnn_forward_impl.2}
  #allocation0 [shape = 'u32[]', space=smem, size = 0x4, offset = 0x4, fixed_abs, tag = 'smem constant byte address 0x4 - core index']
  #allocation1 [shape = 'u32[144,128]{1,0:T(1,128)}', space=vmem, size = 0x12000, scoped, tag = 'internal scratch']
  #allocation2 [shape = 'f32[8,8,512]{2,1,0:T(8,128)}', space=vmem, size = 0x20000, scoped, tag = 'scratch operand']
  #allocation3 [shape = 'f32[8,128]{1,0:T(8,128)}', space=vmem, size = 0x1000, scoped, tag = 'scratch operand']
  #allocation4 [shape = 'f32[8,128]{1,0:T(8,128)}', space=vmem, size = 0x1000, scoped, tag = 'scratch operand']
  %s0 = inlined_call_operand.vmem [shape: f32[8,8,128], index: 0, kind: input, shape index: {}]
  %s1 = inlined_call_operand.hbm [shape: f32[128,512], index: 1, kind: input, shape index: {}]
  %s2 = inlined_call_operand.hbm [shape: f32[128,512], index: 2, kind: input, shape index: {}]
  %s3 = inlined_call_operand.vmem [shape: f32[1,512], index: 3, kind: input, shape index: {}]
  %s4 = inlined_call_operand.vmem [shape: f32[8,8,128], index: 4, kind: output, shape index: {}]
  %s5 = sld [smem:[#allocation0]]
  $region38: #{_rnn_forward_impl.2} parent=0
    _
  %s7 = ssub.s32 1, %s5
  %s8 = scalar_select 0, %s7, %s5
  $region1: #{_rnn_forward_impl.2} parent=0
    #allocation5 [shape = 'u8[262144]{0}', space=vmem, size = 0x40000, scoped, tag = 'input window, operand 1, single buffered']
    #allocation6 [shape = 's32[1]{0}', space=sflag, size = 0x4, scoped, tag = 'scoped memory for _rnn_forward_impl.2']
    #allocation7 [shape = 'u8[262144]{0}', space=vmem, size = 0x40000, scoped, tag = 'input window, operand 2, single buffered']
    #allocation8 [shape = 's32[1]{0}', space=sflag, size = 0x4, scoped, tag = 'scoped memory for _rnn_forward_impl.2']
    %9 = vsyncpa [#allocation6], 0
    %10 = vsyncpa [#allocation8], 0
    // Predicated region
    $region2: #{_rnn_forward_impl.2} parent=1 // pred_check
      _
    $region3: #{_rnn_forward_impl.2} parent=1 // pred_check_branch
      %12 = sbr.rel (0) target = $region5
    $region4: #{_rnn_forward_impl.2} parent=1 // pred_region
      _
    $region5: #{_rnn_forward_impl.2} parent=1 // pred_fallthru
      _
    // Predicated region
    $region6: #{_rnn_forward_impl.2} parent=1 // pred_check
      _
    $region7: #{_rnn_forward_impl.2} parent=1 // pred_check_branch
      %14 = sbr.rel (0) target = $region9
    $region8: #{_rnn_forward_impl.2} parent=1 // pred_region
      %s16 = ssub.s32 8192, 8192
      %17 = vsyncadd [#allocation6], %s16
      %s18 = sshll.u32 [#allocation5], 4
      %s19 = int_to_ptr.vmem [resolvable:$true] %s18
      %24 = dma.hbm_to_vmem [thread:$0]  %s1, 8192, %s19, [#allocation6], 512, 512, 32
    $region9: #{_rnn_forward_impl.2} parent=1 // pred_fallthru
      _
    // Predicated region
    $region10: #{_rnn_forward_impl.2} parent=1 // pred_check
      _
    $region11: #{_rnn_forward_impl.2} parent=1 // pred_check_branch
      %26 = sbr.rel (0) target = $region13
    $region12: #{_rnn_forward_impl.2} parent=1 // pred_region
      %s28 = ssub.s32 8192, 8192
      %29 = vsyncadd [#allocation8], %s28
      %s30 = sshll.u32 [#allocation7], 4
      %s31 = int_to_ptr.vmem [resolvable:$true] %s30
      %36 = dma.hbm_to_vmem [thread:$0]  %s2, 8192, %s31, [#allocation8], 512, 512, 32
    $region13: #{_rnn_forward_impl.2} parent=1 // pred_fallthru
      _
    // Predicated region
    $region14: #{_rnn_forward_impl.2} parent=1 // pred_check
      _
    $region15: #{_rnn_forward_impl.2} parent=1 // pred_check_branch
      %38 = sbr.rel (0) target = $region17
    $region16: #{_rnn_forward_impl.2} parent=1 // pred_region
      _
    $region17: #{_rnn_forward_impl.2} parent=1 // pred_fallthru
      _
    // Predicated region
    $region18: #{_rnn_forward_impl.2} parent=1 // pred_check
      _
    $region19: #{_rnn_forward_impl.2} parent=1 // pred_check_branch
      %40 = sbr.rel (0) target = $region21
    $region20: #{_rnn_forward_impl.2} parent=1 // pred_region
      %41 = dma.done [#allocation6], 8192
    $region21: #{_rnn_forward_impl.2} parent=1 // pred_fallthru
      _
    // Predicated region
    $region22: #{_rnn_forward_impl.2} parent=1 // pred_check
      _
    $region23: #{_rnn_forward_impl.2} parent=1 // pred_check_branch
      %43 = sbr.rel (0) target = $region25
    $region24: #{_rnn_forward_impl.2} parent=1 // pred_region
      %44 = dma.done [#allocation8], 8192
    $region25: #{_rnn_forward_impl.2} parent=1 // pred_fallthru
      _
    %p45 = scmp.eq.s32.totalorder 0, 0
    // Predicated region
    $region26: #{_rnn_forward_impl.2} parent=1 // pred_check
      %p46 = pneg %p45
    $region27: #{_rnn_forward_impl.2} parent=1 // pred_check_branch
      %48 = sbr.rel (%p46) target = $region29
    $region28: #{_rnn_forward_impl.2} parent=1 // pred_region
      %49 = vst [vmem:[#allocation3] sm:$0xff] 0.0
      %50 = vst [vmem:[#allocation4] sm:$0xff] 0.0
    $region29: #{_rnn_forward_impl.2} parent=1 // pred_fallthru
      _
    %v51 = vld [vmem:[%s0] sm:$0xff]
    %v52 = vld [vmem:[%s0 + $0x8] sm:$0xff]
    %v53 = vld [vmem:[%s0 + $0x10] sm:$0xff]
    %v54 = vld [vmem:[%s0 + $0x18] sm:$0xff]
    %v55 = vld [vmem:[%s0 + $0x20] sm:$0xff]
    %v56 = vld [vmem:[%s0 + $0x28] sm:$0xff]
    %v57 = vld [vmem:[%s0 + $0x30] sm:$0xff]
    %v58 = vld [vmem:[%s0 + $0x38] sm:$0xff]
    %v59 = vld [vmem:[#allocation5] sm:$0xff]
    %v60 = vld [vmem:[#allocation5 + $0x8] sm:$0xff]
    %v61 = vld [vmem:[#allocation5 + $0x10] sm:$0xff]
    %v62 = vld [vmem:[#allocation5 + $0x18] sm:$0xff]
    %v63 = vld [vmem:[#allocation5 + $0x20] sm:$0xff]
    %v64 = vld [vmem:[#allocation5 + $0x28] sm:$0xff]
    %v65 = vld [vmem:[#allocation5 + $0x30] sm:$0xff]
    %v66 = vld [vmem:[#allocation5 + $0x38] sm:$0xff]
    %v67 = vld [vmem:[#allocation5 + $0x40] sm:$0xff]
    %v68 = vld [vmem:[#allocation5 + $0x48] sm:$0xff]
    %v69 = vld [vmem:[#allocation5 + $0x50] sm:$0xff]
    %v70 = vld [vmem:[#allocation5 + $0x58] sm:$0xff]
    %v71 = vld [vmem:[#allocation5 + $0x60] sm:$0xff]
    %v72 = vld [vmem:[#allocation5 + $0x68] sm:$0xff]
    %v73 = vld [vmem:[#allocation5 + $0x70] sm:$0xff]
    %v74 = vld [vmem:[#allocation5 + $0x78] sm:$0xff]
    %v75 = vld [vmem:[#allocation5 + $0x80] sm:$0xff]
    %v76 = vld [vmem:[#allocation5 + $0x88] sm:$0xff]
    %v77 = vld [vmem:[#allocation5 + $0x90] sm:$0xff]
    %v78 = vld [vmem:[#allocation5 + $0x98] sm:$0xff]
    %v79 = vld [vmem:[#allocation5 + $0xa0] sm:$0xff]
    %v80 = vld [vmem:[#allocation5 + $0xa8] sm:$0xff]
    %v81 = vld [vmem:[#allocation5 + $0xb0] sm:$0xff]
    %v82 = vld [vmem:[#allocation5 + $0xb8] sm:$0xff]
    %v83 = vld [vmem:[#allocation5 + $0xc0] sm:$0xff]
    %v84 = vld [vmem:[#allocation5 + $0xc8] sm:$0xff]
    %v85 = vld [vmem:[#allocation5 + $0xd0] sm:$0xff]
    %v86 = vld [vmem:[#allocation5 + $0xd8] sm:$0xff]
    %v87 = vld [vmem:[#allocation5 + $0xe0] sm:$0xff]
    %v88 = vld [vmem:[#allocation5 + $0xe8] sm:$0xff]
    %v89 = vld [vmem:[#allocation5 + $0xf0] sm:$0xff]
    %v90 = vld [vmem:[#allocation5 + $0xf8] sm:$0xff]
    %v91 = vld [vmem:[#allocation5 + $0x100] sm:$0xff]
    %v92 = vld [vmem:[#allocation5 + $0x108] sm:$0xff]
    %v93 = vld [vmem:[#allocation5 + $0x110] sm:$0xff]
    %v94 = vld [vmem:[#allocation5 + $0x118] sm:$0xff]
    %v95 = vld [vmem:[#allocation5 + $0x120] sm:$0xff]
    %v96 = vld [vmem:[#allocation5 + $0x128] sm:$0xff]
    %v97 = vld [vmem:[#allocation5 + $0x130] sm:$0xff]
    %v98 = vld [vmem:[#allocation5 + $0x138] sm:$0xff]
    %v99 = vld [vmem:[#allocation5 + $0x140] sm:$0xff]
    %v100 = vld [vmem:[#allocation5 + $0x148] sm:$0xff]
    %v101 = vld [vmem:[#allocation5 + $0x150] sm:$0xff]
    %v102 = vld [vmem:[#allocation5 + $0x158] sm:$0xff]
    %v103 = vld [vmem:[#allocation5 + $0x160] sm:$0xff]
    %v104 = vld [vmem:[#allocation5 + $0x168] sm:$0xff]
    %v105 = vld [vmem:[#allocation5 + $0x170] sm:$0xff]
    %v106 = vld [vmem:[#allocation5 + $0x178] sm:$0xff]
    %v107 = vld [vmem:[#allocation5 + $0x180] sm:$0xff]
    %v108 = vld [vmem:[#allocation5 + $0x188] sm:$0xff]
    %v109 = vld [vmem:[#allocation5 + $0x190] sm:$0xff]
    %v110 = vld [vmem:[#allocation5 + $0x198] sm:$0xff]
    %v111 = vld [vmem:[#allocation5 + $0x1a0] sm:$0xff]
    %v112 = vld [vmem:[#allocation5 + $0x1a8] sm:$0xff]
    %v113 = vld [vmem:[#allocation5 + $0x1b0] sm:$0xff]
    %v114 = vld [vmem:[#allocation5 + $0x1b8] sm:$0xff]
    %v115 = vld [vmem:[#allocation5 + $0x1c0] sm:$0xff]
    %v116 = vld [vmem:[#allocation5 + $0x1c8] sm:$0xff]
    %v117 = vld [vmem:[#allocation5 + $0x1d0] sm:$0xff]
    %v118 = vld [vmem:[#allocation5 + $0x1d8] sm:$0xff]
    %v119 = vld [vmem:[#allocation5 + $0x1e0] sm:$0xff]
    %v120 = vld [vmem:[#allocation5 + $0x1e8] sm:$0xff]
    %v121 = vld [vmem:[#allocation5 + $0x1f0] sm:$0xff]
    %v122 = vld [vmem:[#allocation5 + $0x1f8] sm:$0xff]
    %v123 = vld [vmem:[%s3] sm:$0xf]
    %v125 = vlaneseq
    %v126 = vshrl.u32 %v125, 7
    %v127 = vsub.s32 0, %v126
    %v128 = vrot.slane %v123, %v127
    %v129 = vlaneseq
    %v130 = vshrl.u32 %v129, 7
    %v131 = vsub.s32 1, %v130
    %v132 = vrot.slane %v123, %v131
    %v133 = vlaneseq
    %v134 = vshrl.u32 %v133, 7
    %v135 = vsub.s32 2, %v134
    %v136 = vrot.slane %v123, %v135
    %v137 = vlaneseq
    %v138 = vshrl.u32 %v137, 7
    %v139 = vsub.s32 3, %v138
    %v140 = vrot.slane %v123, %v139
    %145 = vmatprep.subr.mxu0 %v120
    %146 = vmatpush1.msra.mxu0 %v119
    %147 = vmatprep.subr.mxu0 %v116
    %148 = vmatpush1.msra.mxu0 %v115
    %149 = vmatprep.subr.mxu0 %v112
    %150 = vmatpush1.msra.mxu0 %v111
    %151 = vmatprep.subr.mxu0 %v108
    %152 = vmatpush1.msra.mxu0 %v107
    %153 = vmatprep.subr.mxu0 %v104
    %154 = vmatpush1.msra.mxu0 %v103
    %155 = vmatprep.subr.mxu0 %v100
    %156 = vmatpush1.msra.mxu0 %v99
    %157 = vmatprep.subr.mxu0 %v96
    %158 = vmatpush1.msra.mxu0 %v95
    %159 = vmatprep.subr.mxu0 %v92
    %160 = vmatpush1.msra.mxu0 %v91
    %161 = vmatprep.subr.mxu0 %v88
    %162 = vmatpush1.msra.mxu0 %v87
    %163 = vmatprep.subr.mxu0 %v84
    %164 = vmatpush1.msra.mxu0 %v83
    %165 = vmatprep.subr.mxu0 %v80
    %166 = vmatpush1.msra.mxu0 %v79
    %167 = vmatprep.subr.mxu0 %v76
    %168 = vmatpush1.msra.mxu0 %v75
    %169 = vmatprep.subr.mxu0 %v72
    %170 = vmatpush1.msra.mxu0 %v71
    %171 = vmatprep.subr.mxu0 %v68
    %172 = vmatpush1.msra.mxu0 %v67
    %173 = vmatprep.subr.mxu0 %v64
    %174 = vmatpush1.msra.mxu0 %v63
    %175 = vmatprep.subr.mxu0 %v60
    %176 = vmatpush1.msra.mxu0 %v59
    %177 = vmatprep.subr.mxu0 0.0
    %178 = vmatpush2.msra.mxu0 0.0
    %179 = vmatprep.subr.mxu0 0.0
    %180 = vmatpush2.msra.mxu0 0.0
    %181 = vmatprep.subr.mxu0 0.0
    %182 = vmatpush2.msra.mxu0 0.0
    %183 = vmatprep.subr.mxu0 0.0
    %184 = vmatpush2.msra.mxu0 0.0
    %185 = vmatprep.subr.mxu0 0.0
    %186 = vmatpush2.msra.mxu0 0.0
    %187 = vmatprep.subr.mxu0 0.0
    %188 = vmatpush2.msra.mxu0 0.0
    %189 = vmatprep.subr.mxu0 0.0
    %190 = vmatpush2.msra.mxu0 0.0
    %191 = vmatprep.subr.mxu0 0.0
    %192 = vmatpush2.msra.mxu0 0.0
    %193 = vmatprep.subr.mxu0 0.0
    %194 = vmatpush2.msra.mxu0 0.0
    %195 = vmatprep.subr.mxu0 0.0
    %196 = vmatpush2.msra.mxu0 0.0
    %197 = vmatprep.subr.mxu0 0.0
    %198 = vmatpush2.msra.mxu0 0.0
    %199 = vmatprep.subr.mxu0 0.0
    %200 = vmatpush2.msra.mxu0 0.0
    %201 = vmatprep.subr.mxu0 0.0
    %202 = vmatpush2.msra.mxu0 0.0
    %203 = vmatprep.subr.mxu0 0.0
    %204 = vmatpush2.msra.mxu0 0.0
    %205 = vmatprep.subr.mxu0 0.0
    %206 = vmatpush2.msra.mxu0 0.0
    %207 = vmatprep.subr.mxu0 0.0
    %208 = vmatpush2.msra.mxu0 0.0
    %209 = vmatprep.mubr.f32.mxu0 0.0
    %210 = vmatmul.mubr.f32.gmra.mxu0 %v51
    %v211 = vpop.f32.mrf.mxu0
    %v212 = vadd.f32 %v128, %v211
    %v213 = vpop.f32.mrf.mxu0
    %v214 = vadd.f32 %v132, %v213
    %215 = vmatprep.mubr.f32.mxu0 0.0
    %216 = vmatmul.mubr.f32.gmra.mxu0 %v52
    %v217 = vpop.f32.mrf.mxu0
    %v218 = vadd.f32 %v128, %v217
    %v219 = vpop.f32.mrf.mxu0
    %v220 = vadd.f32 %v132, %v219
    %221 = vmatprep.mubr.f32.mxu0 0.0
    %222 = vmatmul.mubr.f32.gmra.mxu0 %v53
    %v223 = vpop.f32.mrf.mxu0
    %v224 = vadd.f32 %v128, %v223
    %v225 = vpop.f32.mrf.mxu0
    %v226 = vadd.f32 %v132, %v225
    %227 = vmatprep.mubr.f32.mxu0 0.0
    %228 = vmatmul.mubr.f32.gmra.mxu0 %v54
    %v229 = vpop.f32.mrf.mxu0
    %v230 = vadd.f32 %v128, %v229
    %v231 = vpop.f32.mrf.mxu0
    %v232 = vadd.f32 %v132, %v231
    %233 = vmatprep.mubr.f32.mxu0 0.0
    %234 = vmatmul.mubr.f32.gmra.mxu0 %v55
    %v235 = vpop.f32.mrf.mxu0
    %v236 = vadd.f32 %v128, %v235
    %v237 = vpop.f32.mrf.mxu0
    %v238 = vadd.f32 %v132, %v237
    %239 = vmatprep.mubr.f32.mxu0 0.0
    %240 = vmatmul.mubr.f32.gmra.mxu0 %v56
    %v241 = vpop.f32.mrf.mxu0
    %v242 = vadd.f32 %v128, %v241
    %v243 = vpop.f32.mrf.mxu0
    %v244 = vadd.f32 %v132, %v243
    %245 = vmatprep.mubr.f32.mxu0 0.0
    %246 = vmatmul.mubr.f32.gmra.mxu0 %v57
    %v247 = vpop.f32.mrf.mxu0
    %v248 = vadd.f32 %v128, %v247
    %v249 = vpop.f32.mrf.mxu0
    %v250 = vadd.f32 %v132, %v249
    %251 = vmatprep.mubr.f32.mxu0 0.0
    %252 = vmatmul.mubr.f32.gmra.mxu0 %v58
    %v253 = vpop.f32.mrf.mxu0
    %v254 = vadd.f32 %v128, %v253
    %v255 = vpop.f32.mrf.mxu0
    %v256 = vadd.f32 %v132, %v255
    %257 = vdwg.mxu0
    %258 = vmatprep.subr.mxu0 %v122
    %259 = vmatpush1.msra.mxu0 %v121
    %260 = vmatprep.subr.mxu0 %v118
    %261 = vmatpush1.msra.mxu0 %v117
    %262 = vmatprep.subr.mxu0 %v114
    %263 = vmatpush1.msra.mxu0 %v113
    %264 = vmatprep.subr.mxu0 %v110
    %265 = vmatpush1.msra.mxu0 %v109
    %266 = vmatprep.subr.mxu0 %v106
    %267 = vmatpush1.msra.mxu0 %v105
    %268 = vmatprep.subr.mxu0 %v102
    %269 = vmatpush1.msra.mxu0 %v101
    %270 = vmatprep.subr.mxu0 %v98
    %271 = vmatpush1.msra.mxu0 %v97
    %272 = vmatprep.subr.mxu0 %v94
    %273 = vmatpush1.msra.mxu0 %v93
    %274 = vmatprep.subr.mxu0 %v90
    %275 = vmatpush1.msra.mxu0 %v89
    %276 = vmatprep.subr.mxu0 %v86
    %277 = vmatpush1.msra.mxu0 %v85
    %278 = vmatprep.subr.mxu0 %v82
    %279 = vmatpush1.msra.mxu0 %v81
    %280 = vmatprep.subr.mxu0 %v78
    %281 = vmatpush1.msra.mxu0 %v77
    %282 = vmatprep.subr.mxu0 %v74
    %283 = vmatpush1.msra.mxu0 %v73
    %284 = vmatprep.subr.mxu0 %v70
    %285 = vmatpush1.msra.mxu0 %v69
    %286 = vmatprep.subr.mxu0 %v66
    %287 = vmatpush1.msra.mxu0 %v65
    %288 = vmatprep.subr.mxu0 %v62
    %289 = vmatpush1.msra.mxu0 %v61
    %290 = vmatprep.subr.mxu0 0.0
    %291 = vmatpush2.msra.mxu0 0.0
    %292 = vmatprep.subr.mxu0 0.0
    %293 = vmatpush2.msra.mxu0 0.0
    %294 = vmatprep.subr.mxu0 0.0
    %295 = vmatpush2.msra.mxu0 0.0
    %296 = vmatprep.subr.mxu0 0.0
    %297 = vmatpush2.msra.mxu0 0.0
    %298 = vmatprep.subr.mxu0 0.0
    %299 = vmatpush2.msra.mxu0 0.0
    %300 = vmatprep.subr.mxu0 0.0
    %301 = vmatpush2.msra.mxu0 0.0
    %302 = vmatprep.subr.mxu0 0.0
    %303 = vmatpush2.msra.mxu0 0.0
    %304 = vmatprep.subr.mxu0 0.0
    %305 = vmatpush2.msra.mxu0 0.0
    %306 = vmatprep.subr.mxu0 0.0
    %307 = vmatpush2.msra.mxu0 0.0
    %308 = vmatprep.subr.mxu0 0.0
    %309 = vmatpush2.msra.mxu0 0.0
    %310 = vmatprep.subr.mxu0 0.0
    %311 = vmatpush2.msra.mxu0 0.0
    %312 = vmatprep.subr.mxu0 0.0
    %313 = vmatpush2.msra.mxu0 0.0
    %314 = vmatprep.subr.mxu0 0.0
    %315 = vmatpush2.msra.mxu0 0.0
    %316 = vmatprep.subr.mxu0 0.0
    %317 = vmatpush2.msra.mxu0 0.0
    %318 = vmatprep.subr.mxu0 0.0
    %319 = vmatpush2.msra.mxu0 0.0
    %320 = vmatprep.subr.mxu0 0.0
    %321 = vmatpush2.msra.mxu0 0.0
    %322 = vmatprep.mubr.f32.mxu0 0.0
    %323 = vmatmul.mubr.f32.gmra.mxu0 %v51
    %v324 = vpop.f32.mrf.mxu0
    %v325 = vadd.f32 %v136, %v324
    %v326 = vpop.f32.mrf.mxu0
    %v327 = vadd.f32 %v140, %v326
    %328 = vmatprep.mubr.f32.mxu0 0.0
    %329 = vmatmul.mubr.f32.gmra.mxu0 %v52
    %v330 = vpop.f32.mrf.mxu0
    %v331 = vadd.f32 %v136, %v330
    %v332 = vpop.f32.mrf.mxu0
    %v333 = vadd.f32 %v140, %v332
    %334 = vmatprep.mubr.f32.mxu0 0.0
    %335 = vmatmul.mubr.f32.gmra.mxu0 %v53
    %v336 = vpop.f32.mrf.mxu0
    %v337 = vadd.f32 %v136, %v336
    %v338 = vpop.f32.mrf.mxu0
    %v339 = vadd.f32 %v140, %v338
    %340 = vmatprep.mubr.f32.mxu0 0.0
    %341 = vmatmul.mubr.f32.gmra.mxu0 %v54
    %v342 = vpop.f32.mrf.mxu0
    %v343 = vadd.f32 %v136, %v342
    %v344 = vpop.f32.mrf.mxu0
    %v345 = vadd.f32 %v140, %v344
    %346 = vmatprep.mubr.f32.mxu0 0.0
    %347 = vmatmul.mubr.f32.gmra.mxu0 %v55
    %v348 = vpop.f32.mrf.mxu0
    %v349 = vadd.f32 %v136, %v348
    %v350 = vpop.f32.mrf.mxu0
    %v351 = vadd.f32 %v140, %v350
    %352 = vmatprep.mubr.f32.mxu0 0.0
    %353 = vmatmul.mubr.f32.gmra.mxu0 %v56
    %v354 = vpop.f32.mrf.mxu0
    %v355 = vadd.f32 %v136, %v354
    %v356 = vpop.f32.mrf.mxu0
    %v357 = vadd.f32 %v140, %v356
    %358 = vmatprep.mubr.f32.mxu0 0.0
    %359 = vmatmul.mubr.f32.gmra.mxu0 %v57
    %v360 = vpop.f32.mrf.mxu0
    %v361 = vadd.f32 %v136, %v360
    %v362 = vpop.f32.mrf.mxu0
    %v363 = vadd.f32 %v140, %v362
    %364 = vmatprep.mubr.f32.mxu0 0.0
    %365 = vmatmul.mubr.f32.gmra.mxu0 %v58
    %v366 = vpop.f32.mrf.mxu0
    %v367 = vadd.f32 %v136, %v366
    %v368 = vpop.f32.mrf.mxu0
    %v369 = vadd.f32 %v140, %v368
    %370 = vdwg.mxu0
    %371 = vst [vmem:[#allocation2] sm:$0xff] %v212
    %372 = vst [vmem:[#allocation2 + $0x8] sm:$0xff] %v214
    %373 = vst [vmem:[#allocation2 + $0x10] sm:$0xff] %v325
    %374 = vst [vmem:[#allocation2 + $0x18] sm:$0xff] %v327
    %375 = vst [vmem:[#allocation2 + $0x20] sm:$0xff] %v218
    %376 = vst [vmem:[#allocation2 + $0x28] sm:$0xff] %v220
    %377 = vst [vmem:[#allocation2 + $0x30] sm:$0xff] %v331
    %378 = vst [vmem:[#allocation2 + $0x38] sm:$0xff] %v333
    %379 = vst [vmem:[#allocation2 + $0x40] sm:$0xff] %v224
    %380 = vst [vmem:[#allocation2 + $0x48] sm:$0xff] %v226
    %381 = vst [vmem:[#allocation2 + $0x50] sm:$0xff] %v337
    %382 = vst [vmem:[#allocation2 + $0x58] sm:$0xff] %v339
    %383 = vst [vmem:[#allocation2 + $0x60] sm:$0xff] %v230
    %384 = vst [vmem:[#allocation2 + $0x68] sm:$0xff] %v232
    %385 = vst [vmem:[#allocation2 + $0x70] sm:$0xff] %v343
    %386 = vst [vmem:[#allocation2 + $0x78] sm:$0xff] %v345
    %387 = vst [vmem:[#allocation2 + $0x80] sm:$0xff] %v236
    %388 = vst [vmem:[#allocation2 + $0x88] sm:$0xff] %v238
    %389 = vst [vmem:[#allocation2 + $0x90] sm:$0xff] %v349
    %390 = vst [vmem:[#allocation2 + $0x98] sm:$0xff] %v351
    %391 = vst [vmem:[#allocation2 + $0xa0] sm:$0xff] %v242
    %392 = vst [vmem:[#allocation2 + $0xa8] sm:$0xff] %v244
    %393 = vst [vmem:[#allocation2 + $0xb0] sm:$0xff] %v355
    %394 = vst [vmem:[#allocation2 + $0xb8] sm:$0xff] %v357
    %395 = vst [vmem:[#allocation2 + $0xc0] sm:$0xff] %v248
    %396 = vst [vmem:[#allocation2 + $0xc8] sm:$0xff] %v250
    %397 = vst [vmem:[#allocation2 + $0xd0] sm:$0xff] %v361
    %398 = vst [vmem:[#allocation2 + $0xd8] sm:$0xff] %v363
    %399 = vst [vmem:[#allocation2 + $0xe0] sm:$0xff] %v254
    %400 = vst [vmem:[#allocation2 + $0xe8] sm:$0xff] %v256
    %401 = vst [vmem:[#allocation2 + $0xf0] sm:$0xff] %v367
    %402 = vst [vmem:[#allocation2 + $0xf8] sm:$0xff] %v369
    %v403 = vld [vmem:[#allocation7] sm:$0xff]
    %v404 = vld [vmem:[#allocation7 + $0x8] sm:$0xff]
    %v405 = vld [vmem:[#allocation7 + $0x10] sm:$0xff]
    %v406 = vld [vmem:[#allocation7 + $0x18] sm:$0xff]
    %v407 = vld [vmem:[#allocation7 + $0x20] sm:$0xff]
    %v408 = vld [vmem:[#allocation7 + $0x28] sm:$0xff]
    %v409 = vld [vmem:[#allocation7 + $0x30] sm:$0xff]
    %v410 = vld [vmem:[#allocation7 + $0x38] sm:$0xff]
    %v411 = vld [vmem:[#allocation7 + $0x40] sm:$0xff]
    %v412 = vld [vmem:[#allocation7 + $0x48] sm:$0xff]
    %v413 = vld [vmem:[#allocation7 + $0x50] sm:$0xff]
    %v414 = vld [vmem:[#allocation7 + $0x58] sm:$0xff]
    %v415 = vld [vmem:[#allocation7 + $0x60] sm:$0xff]
    %v416 = vld [vmem:[#allocation7 + $0x68] sm:$0xff]
    %v417 = vld [vmem:[#allocation7 + $0x70] sm:$0xff]
    %v418 = vld [vmem:[#allocation7 + $0x78] sm:$0xff]
    %v419 = vld [vmem:[#allocation7 + $0x80] sm:$0xff]
    %v420 = vld [vmem:[#allocation7 + $0x88] sm:$0xff]
    %v421 = vld [vmem:[#allocation7 + $0x90] sm:$0xff]
    %v422 = vld [vmem:[#allocation7 + $0x98] sm:$0xff]
    %v423 = vld [vmem:[#allocation7 + $0xa0] sm:$0xff]
    %v424 = vld [vmem:[#allocation7 + $0xa8] sm:$0xff]
    %v425 = vld [vmem:[#allocation7 + $0xb0] sm:$0xff]
    %v426 = vld [vmem:[#allocation7 + $0xb8] sm:$0xff]
    %v427 = vld [vmem:[#allocation7 + $0xc0] sm:$0xff]
    %v428 = vld [vmem:[#allocation7 + $0xc8] sm:$0xff]
    %v429 = vld [vmem:[#allocation7 + $0xd0] sm:$0xff]
    %v430 = vld [vmem:[#allocation7 + $0xd8] sm:$0xff]
    %v431 = vld [vmem:[#allocation7 + $0xe0] sm:$0xff]
    %v432 = vld [vmem:[#allocation7 + $0xe8] sm:$0xff]
    %v433 = vld [vmem:[#allocation7 + $0xf0] sm:$0xff]
    %v434 = vld [vmem:[#allocation7 + $0xf8] sm:$0xff]
    %v435 = vld [vmem:[#allocation7 + $0x100] sm:$0xff]
    %v436 = vld [vmem:[#allocation7 + $0x108] sm:$0xff]
    %v437 = vld [vmem:[#allocation7 + $0x110] sm:$0xff]
    %v438 = vld [vmem:[#allocation7 + $0x118] sm:$0xff]
    %v439 = vld [vmem:[#allocation7 + $0x120] sm:$0xff]
    %v440 = vld [vmem:[#allocation7 + $0x128] sm:$0xff]
    %v441 = vld [vmem:[#allocation7 + $0x130] sm:$0xff]
    %v442 = vld [vmem:[#allocation7 + $0x138] sm:$0xff]
    %v443 = vld [vmem:[#allocation7 + $0x140] sm:$0xff]
    %v444 = vld [vmem:[#allocation7 + $0x148] sm:$0xff]
    %v445 = vld [vmem:[#allocation7 + $0x150] sm:$0xff]
    %v446 = vld [vmem:[#allocation7 + $0x158] sm:$0xff]
    %v447 = vld [vmem:[#allocation7 + $0x160] sm:$0xff]
    %v448 = vld [vmem:[#allocation7 + $0x168] sm:$0xff]
    %v449 = vld [vmem:[#allocation7 + $0x170] sm:$0xff]
    %v450 = vld [vmem:[#allocation7 + $0x178] sm:$0xff]
    %v451 = vld [vmem:[#allocation7 + $0x180] sm:$0xff]
    %v452 = vld [vmem:[#allocation7 + $0x188] sm:$0xff]
    %v453 = vld [vmem:[#allocation7 + $0x190] sm:$0xff]
    %v454 = vld [vmem:[#allocation7 + $0x198] sm:$0xff]
    %v455 = vld [vmem:[#allocation7 + $0x1a0] sm:$0xff]
    %v456 = vld [vmem:[#allocation7 + $0x1a8] sm:$0xff]
    %v457 = vld [vmem:[#allocation7 + $0x1b0] sm:$0xff]
    %v458 = vld [vmem:[#allocation7 + $0x1b8] sm:$0xff]
    %v459 = vld [vmem:[#allocation7 + $0x1c0] sm:$0xff]
    %v460 = vld [vmem:[#allocation7 + $0x1c8] sm:$0xff]
    %v461 = vld [vmem:[#allocation7 + $0x1d0] sm:$0xff]
    %v462 = vld [vmem:[#allocation7 + $0x1d8] sm:$0xff]
    %v463 = vld [vmem:[#allocation7 + $0x1e0] sm:$0xff]
    %v464 = vld [vmem:[#allocation7 + $0x1e8] sm:$0xff]
    %v465 = vld [vmem:[#allocation7 + $0x1f0] sm:$0xff]
    %v466 = vld [vmem:[#allocation7 + $0x1f8] sm:$0xff]
    %v467 = vld [vmem:[#allocation3] sm:$0xff]
    %v468 = vld [vmem:[#allocation4] sm:$0xff]
    %v469 = vld [vmem:[#allocation2] sm:$0xff]
    %v470 = vld [vmem:[#allocation2 + $0x8] sm:$0xff]
    %v471 = vld [vmem:[#allocation2 + $0x10] sm:$0xff]
    %v472 = vld [vmem:[#allocation2 + $0x18] sm:$0xff]
    %473 = vmatprep.subr.mxu0 %v464
    %474 = vmatpush1.msra.mxu0 %v463
    %475 = vmatprep.subr.mxu0 %v460
    %476 = vmatpush1.msra.mxu0 %v459
    %477 = vmatprep.subr.mxu0 %v456
    %478 = vmatpush1.msra.mxu0 %v455
    %479 = vmatprep.subr.mxu0 %v452
    %480 = vmatpush1.msra.mxu0 %v451
    %481 = vmatprep.subr.mxu0 %v448
    %482 = vmatpush1.msra.mxu0 %v447
    %483 = vmatprep.subr.mxu0 %v444
    %484 = vmatpush1.msra.mxu0 %v443
    %485 = vmatprep.subr.mxu0 %v440
    %486 = vmatpush1.msra.mxu0 %v439
    %487 = vmatprep.subr.mxu0 %v436
    %488 = vmatpush1.msra.mxu0 %v435
    %489 = vmatprep.subr.mxu0 %v432
    %490 = vmatpush1.msra.mxu0 %v431
    %491 = vmatprep.subr.mxu0 %v428
    %492 = vmatpush1.msra.mxu0 %v427
    %493 = vmatprep.subr.mxu0 %v424
    %494 = vmatpush1.msra.mxu0 %v423
    %495 = vmatprep.subr.mxu0 %v420
    %496 = vmatpush1.msra.mxu0 %v419
    %497 = vmatprep.subr.mxu0 %v416
    %498 = vmatpush1.msra.mxu0 %v415
    %499 = vmatprep.subr.mxu0 %v412
    %500 = vmatpush1.msra.mxu0 %v411
    %501 = vmatprep.subr.mxu0 %v408
    %502 = vmatpush1.msra.mxu0 %v407
    %503 = vmatprep.subr.mxu0 %v404
    %504 = vmatpush1.msra.mxu0 %v403
    %505 = vmatprep.subr.mxu0 0.0
    %506 = vmatpush2.msra.mxu0 0.0
    %507 = vmatprep.subr.mxu0 0.0
    %508 = vmatpush2.msra.mxu0 0.0
    %509 = vmatprep.subr.mxu0 0.0
    %510 = vmatpush2.msra.mxu0 0.0
    %511 = vmatprep.subr.mxu0 0.0
    %512 = vmatpush2.msra.mxu0 0.0
    %513 = vmatprep.subr.mxu0 0.0
    %514 = vmatpush2.msra.mxu0 0.0
    %515 = vmatprep.subr.mxu0 0.0
    %516 = vmatpush2.msra.mxu0 0.0
    %517 = vmatprep.subr.mxu0 0.0
    %518 = vmatpush2.msra.mxu0 0.0
    %519 = vmatprep.subr.mxu0 0.0
    %520 = vmatpush2.msra.mxu0 0.0
    %521 = vmatprep.subr.mxu0 0.0
    %522 = vmatpush2.msra.mxu0 0.0
    %523 = vmatprep.subr.mxu0 0.0
    %524 = vmatpush2.msra.mxu0 0.0
    %525 = vmatprep.subr.mxu0 0.0
    %526 = vmatpush2.msra.mxu0 0.0
    %527 = vmatprep.subr.mxu0 0.0
    %528 = vmatpush2.msra.mxu0 0.0
    %529 = vmatprep.subr.mxu0 0.0
    %530 = vmatpush2.msra.mxu0 0.0
    %531 = vmatprep.subr.mxu0 0.0
    %532 = vmatpush2.msra.mxu0 0.0
    %533 = vmatprep.subr.mxu0 0.0
    %534 = vmatpush2.msra.mxu0 0.0
    %535 = vmatprep.subr.mxu0 0.0
    %536 = vmatpush2.msra.mxu0 0.0
    %537 = vmatprep.mubr.f32.mxu0 0.0
    %538 = vmatmul.mubr.f32.gmra.mxu0 %v467
    %v539 = vpop.f32.mrf.mxu0
    %v540 = vadd.f32 0.0, %v539
    %v541 = vpop.f32.mrf.mxu0
    %v542 = vadd.f32 0.0, %v541
    %543 = vdwg.mxu0
    %544 = vmatprep.subr.mxu0 %v466
    %545 = vmatpush1.msra.mxu0 %v465
    %546 = vmatprep.subr.mxu0 %v462
    %547 = vmatpush1.msra.mxu0 %v461
    %548 = vmatprep.subr.mxu0 %v458
    %549 = vmatpush1.msra.mxu0 %v457
    %550 = vmatprep.subr.mxu0 %v454
    %551 = vmatpush1.msra.mxu0 %v453
    %552 = vmatprep.subr.mxu0 %v450
    %553 = vmatpush1.msra.mxu0 %v449
    %554 = vmatprep.subr.mxu0 %v446
    %555 = vmatpush1.msra.mxu0 %v445
    %556 = vmatprep.subr.mxu0 %v442
    %557 = vmatpush1.msra.mxu0 %v441
    %558 = vmatprep.subr.mxu0 %v438
    %559 = vmatpush1.msra.mxu0 %v437
    %560 = vmatprep.subr.mxu0 %v434
    %561 = vmatpush1.msra.mxu0 %v433
    %562 = vmatprep.subr.mxu0 %v430
    %563 = vmatpush1.msra.mxu0 %v429
    %564 = vmatprep.subr.mxu0 %v426
    %565 = vmatpush1.msra.mxu0 %v425
    %566 = vmatprep.subr.mxu0 %v422
    %567 = vmatpush1.msra.mxu0 %v421
    %568 = vmatprep.subr.mxu0 %v418
    %569 = vmatpush1.msra.mxu0 %v417
    %570 = vmatprep.subr.mxu0 %v414
    %571 = vmatpush1.msra.mxu0 %v413
    %572 = vmatprep.subr.mxu0 %v410
    %573 = vmatpush1.msra.mxu0 %v409
    %574 = vmatprep.subr.mxu0 %v406
    %575 = vmatpush1.msra.mxu0 %v405
    %576 = vmatprep.subr.mxu0 0.0
    %577 = vmatpush2.msra.mxu0 0.0
    %578 = vmatprep.subr.mxu0 0.0
    %579 = vmatpush2.msra.mxu0 0.0
    %580 = vmatprep.subr.mxu0 0.0
    %581 = vmatpush2.msra.mxu0 0.0
    %582 = vmatprep.subr.mxu0 0.0
    %583 = vmatpush2.msra.mxu0 0.0
    %584 = vmatprep.subr.mxu0 0.0
    %585 = vmatpush2.msra.mxu0 0.0
    %586 = vmatprep.subr.mxu0 0.0
    %587 = vmatpush2.msra.mxu0 0.0
    %588 = vmatprep.subr.mxu0 0.0
    %589 = vmatpush2.msra.mxu0 0.0
    %590 = vmatprep.subr.mxu0 0.0
    %591 = vmatpush2.msra.mxu0 0.0
    %592 = vmatprep.subr.mxu0 0.0
    %593 = vmatpush2.msra.mxu0 0.0
    %594 = vmatprep.subr.mxu0 0.0
    %595 = vmatpush2.msra.mxu0 0.0
    %596 = vmatprep.subr.mxu0 0.0
    %597 = vmatpush2.msra.mxu0 0.0
    %598 = vmatprep.subr.mxu0 0.0
    %599 = vmatpush2.msra.mxu0 0.0
    %600 = vmatprep.subr.mxu0 0.0
    %601 = vmatpush2.msra.mxu0 0.0
    %602 = vmatprep.subr.mxu0 0.0
    %603 = vmatpush2.msra.mxu0 0.0
    %604 = vmatprep.subr.mxu0 0.0
    %605 = vmatpush2.msra.mxu0 0.0
    %606 = vmatprep.subr.mxu0 0.0
    %607 = vmatpush2.msra.mxu0 0.0
    %608 = vmatprep.mubr.f32.mxu0 0.0
    %609 = vmatmul.mubr.f32.gmra.mxu0 %v467
    %v610 = vpop.f32.mrf.mxu0
    %v611 = vadd.f32 0.0, %v610
    %v612 = vpop.f32.mrf.mxu0
    %v613 = vadd.f32 0.0, %v612
    %614 = vdwg.mxu0
    %v615 = vadd.f32 %v469, %v540
    %v616 = vadd.f32 %v470, %v542
    %v617 = vadd.f32 %v471, %v611
    %v618 = vadd.f32 %v472, %v613
    %v619 = vxor.u32 %v615, 2147483648
    %v620 = vmul.f32 %v619, 1.442695
    %v621 = vpow.pop %v620
    %v622 = vadd.f32 %v621, 1.0
    %v623 = vrcp.pop %v622
    %v624 = vmul.f32 1.0, %v623
    %v625 = vxor.u32 %v616, 2147483648
    %v626 = vmul.f32 %v625, 1.442695
    %v627 = vpow.pop %v626
    %v628 = vadd.f32 %v627, 1.0
    %v629 = vrcp.pop %v628
    %v630 = vmul.f32 1.0, %v629
    %v631 = vtanh.pop %v617
    %v632 = vxor.u32 %v618, 2147483648
    %v633 = vmul.f32 %v632, 1.442695
    %v634 = vpow.pop %v633
    %v635 = vadd.f32 %v634, 1.0
    %v636 = vrcp.pop %v635
    %v637 = vmul.f32 1.0, %v636
    %v638 = vmul.f32 %v630, %v468
    %v639 = vmul.f32 %v624, %v631
    %v640 = vadd.f32 %v638, %v639
    %v641 = vtanh.pop %v640
    %v642 = vmul.f32 %v637, %v641
    %643 = vst [vmem:[%s4] sm:$0xff] %v642
    %s644 = scalar_lea.vmem [#allocation2], 32
    %v645 = vld [vmem:[%s644] sm:$0xff]
    %v646 = vld [vmem:[%s644 + $0x8] sm:$0xff]
    %v647 = vld [vmem:[%s644 + $0x10] sm:$0xff]
    %v648 = vld [vmem:[%s644 + $0x18] sm:$0xff]
    %649 = vmatprep.subr.mxu0 %v464
    %650 = vmatpush1.msra.mxu0 %v463
    %651 = vmatprep.subr.mxu0 %v460
    %652 = vmatpush1.msra.mxu0 %v459
    %653 = vmatprep.subr.mxu0 %v456
    %654 = vmatpush1.msra.mxu0 %v455
    %655 = vmatprep.subr.mxu0 %v452
    %656 = vmatpush1.msra.mxu0 %v451
    %657 = vmatprep.subr.mxu0 %v448
    %658 = vmatpush1.msra.mxu0 %v447
    %659 = vmatprep.subr.mxu0 %v444
    %660 = vmatpush1.msra.mxu0 %v443
    %661 = vmatprep.subr.mxu0 %v440
    %662 = vmatpush1.msra.mxu0 %v439
    %663 = vmatprep.subr.mxu0 %v436
    %664 = vmatpush1.msra.mxu0 %v435
    %665 = vmatprep.subr.mxu0 %v432
    %666 = vmatpush1.msra.mxu0 %v431
    %667 = vmatprep.subr.mxu0 %v428
    %668 = vmatpush1.msra.mxu0 %v427
    %669 = vmatprep.subr.mxu0 %v424
    %670 = vmatpush1.msra.mxu0 %v423
    %671 = vmatprep.subr.mxu0 %v420
    %672 = vmatpush1.msra.mxu0 %v419
    %673 = vmatprep.subr.mxu0 %v416
    %674 = vmatpush1.msra.mxu0 %v415
    %675 = vmatprep.subr.mxu0 %v412
    %676 = vmatpush1.msra.mxu0 %v411
    %677 = vmatprep.subr.mxu0 %v408
    %678 = vmatpush1.msra.mxu0 %v407
    %679 = vmatprep.subr.mxu0 %v404
    %680 = vmatpush1.msra.mxu0 %v403
    %681 = vmatprep.subr.mxu0 0.0
    %682 = vmatpush2.msra.mxu0 0.0
    %683 = vmatprep.subr.mxu0 0.0
    %684 = vmatpush2.msra.mxu0 0.0
    %685 = vmatprep.subr.mxu0 0.0
    %686 = vmatpush2.msra.mxu0 0.0
    %687 = vmatprep.subr.mxu0 0.0
    %688 = vmatpush2.msra.mxu0 0.0
    %689 = vmatprep.subr.mxu0 0.0
    %690 = vmatpush2.msra.mxu0 0.0
    %691 = vmatprep.subr.mxu0 0.0
    %692 = vmatpush2.msra.mxu0 0.0
    %693 = vmatprep.subr.mxu0 0.0
    %694 = vmatpush2.msra.mxu0 0.0
    %695 = vmatprep.subr.mxu0 0.0
    %696 = vmatpush2.msra.mxu0 0.0
    %697 = vmatprep.subr.mxu0 0.0
    %698 = vmatpush2.msra.mxu0 0.0
    %699 = vmatprep.subr.mxu0 0.0
    %700 = vmatpush2.msra.mxu0 0.0
    %701 = vmatprep.subr.mxu0 0.0
    %702 = vmatpush2.msra.mxu0 0.0
    %703 = vmatprep.subr.mxu0 0.0
    %704 = vmatpush2.msra.mxu0 0.0
    %705 = vmatprep.subr.mxu0 0.0
    %706 = vmatpush2.msra.mxu0 0.0
    %707 = vmatprep.subr.mxu0 0.0
    %708 = vmatpush2.msra.mxu0 0.0
    %709 = vmatprep.subr.mxu0 0.0
    %710 = vmatpush2.msra.mxu0 0.0
    %711 = vmatprep.subr.mxu0 0.0
    %712 = vmatpush2.msra.mxu0 0.0
    %713 = vmatprep.mubr.f32.mxu0 0.0
    %714 = vmatmul.mubr.f32.gmra.mxu0 %v642
    %v715 = vpop.f32.mrf.mxu0
    %v716 = vadd.f32 0.0, %v715
    %v717 = vpop.f32.mrf.mxu0
    %v718 = vadd.f32 0.0, %v717
    %719 = vdwg.mxu0
    %720 = vmatprep.subr.mxu0 %v466
    %721 = vmatpush1.msra.mxu0 %v465
    %722 = vmatprep.subr.mxu0 %v462
    %723 = vmatpush1.msra.mxu0 %v461
    %724 = vmatprep.subr.mxu0 %v458
    %725 = vmatpush1.msra.mxu0 %v457
    %726 = vmatprep.subr.mxu0 %v454
    %727 = vmatpush1.msra.mxu0 %v453
    %728 = vmatprep.subr.mxu0 %v450
    %729 = vmatpush1.msra.mxu0 %v449
    %730 = vmatprep.subr.mxu0 %v446
    %731 = vmatpush1.msra.mxu0 %v445
    %732 = vmatprep.subr.mxu0 %v442
    %733 = vmatpush1.msra.mxu0 %v441
    %734 = vmatprep.subr.mxu0 %v438
    %735 = vmatpush1.msra.mxu0 %v437
    %736 = vmatprep.subr.mxu0 %v434
    %737 = vmatpush1.msra.mxu0 %v433
    %738 = vmatprep.subr.mxu0 %v430
    %739 = vmatpush1.msra.mxu0 %v429
    %740 = vmatprep.subr.mxu0 %v426
    %741 = vmatpush1.msra.mxu0 %v425
    %742 = vmatprep.subr.mxu0 %v422
    %743 = vmatpush1.msra.mxu0 %v421
    %744 = vmatprep.subr.mxu0 %v418
    %745 = vmatpush1.msra.mxu0 %v417
    %746 = vmatprep.subr.mxu0 %v414
    %747 = vmatpush1.msra.mxu0 %v413
    %748 = vmatprep.subr.mxu0 %v410
    %749 = vmatpush1.msra.mxu0 %v409
    %750 = vmatprep.subr.mxu0 %v406
    %751 = vmatpush1.msra.mxu0 %v405
    %752 = vmatprep.subr.mxu0 0.0
    %753 = vmatpush2.msra.mxu0 0.0
    %754 = vmatprep.subr.mxu0 0.0
    %755 = vmatpush2.msra.mxu0 0.0
    %756 = vmatprep.subr.mxu0 0.0
    %757 = vmatpush2.msra.mxu0 0.0
    %758 = vmatprep.subr.mxu0 0.0
    %759 = vmatpush2.msra.mxu0 0.0
    %760 = vmatprep.subr.mxu0 0.0
    %761 = vmatpush2.msra.mxu0 0.0
    %762 = vmatprep.subr.mxu0 0.0
    %763 = vmatpush2.msra.mxu0 0.0
    %764 = vmatprep.subr.mxu0 0.0
    %765 = vmatpush2.msra.mxu0 0.0
    %766 = vmatprep.subr.mxu0 0.0
    %767 = vmatpush2.msra.mxu0 0.0
    %768 = vmatprep.subr.mxu0 0.0
    %769 = vmatpush2.msra.mxu0 0.0
    %770 = vmatprep.subr.mxu0 0.0
    %771 = vmatpush2.msra.mxu0 0.0
    %772 = vmatprep.subr.mxu0 0.0
    %773 = vmatpush2.msra.mxu0 0.0
    %774 = vmatprep.subr.mxu0 0.0
    %775 = vmatpush2.msra.mxu0 0.0
    %776 = vmatprep.subr.mxu0 0.0
    %777 = vmatpush2.msra.mxu0 0.0
    %778 = vmatprep.subr.mxu0 0.0
    %779 = vmatpush2.msra.mxu0 0.0
    %780 = vmatprep.subr.mxu0 0.0
    %781 = vmatpush2.msra.mxu0 0.0
    %782 = vmatprep.subr.mxu0 0.0
    %783 = vmatpush2.msra.mxu0 0.0
    %784 = vmatprep.mubr.f32.mxu0 0.0
    %785 = vmatmul.mubr.f32.gmra.mxu0 %v642
    %v786 = vpop.f32.mrf.mxu0
    %v787 = vadd.f32 0.0, %v786
    %v788 = vpop.f32.mrf.mxu0
    %v789 = vadd.f32 0.0, %v788
    %790 = vdwg.mxu0
    %v791 = vadd.f32 %v645, %v716
    %v792 = vadd.f32 %v646, %v718
    %v793 = vadd.f32 %v647, %v787
    %v794 = vadd.f32 %v648, %v789
    %v795 = vxor.u32 %v791, 2147483648
    %v796 = vmul.f32 %v795, 1.442695
    %v797 = vpow.pop %v796
    %v798 = vadd.f32 %v797, 1.0
    %v799 = vrcp.pop %v798
    %v800 = vmul.f32 1.0, %v799
    %v801 = vxor.u32 %v792, 2147483648
    %v802 = vmul.f32 %v801, 1.442695
    %v803 = vpow.pop %v802
    %v804 = vadd.f32 %v803, 1.0
    %v805 = vrcp.pop %v804
    %v806 = vmul.f32 1.0, %v805
    %v807 = vtanh.pop %v793
    %v808 = vxor.u32 %v794, 2147483648
    %v809 = vmul.f32 %v808, 1.442695
    %v810 = vpow.pop %v809
    %v811 = vadd.f32 %v810, 1.0
    %v812 = vrcp.pop %v811
    %v813 = vmul.f32 1.0, %v812
    %v814 = vmul.f32 %v806, %v640
    %v815 = vmul.f32 %v800, %v807
    %v816 = vadd.f32 %v814, %v815
    %v817 = vtanh.pop %v816
    %v818 = vmul.f32 %v813, %v817
    %s819 = scalar_lea.vmem %s4, 8
    %820 = vst [vmem:[%s819] sm:$0xff] %v818
    %s821 = scalar_lea.vmem [#allocation2], 64
    %v822 = vld [vmem:[%s821] sm:$0xff]
    %v823 = vld [vmem:[%s821 + $0x8] sm:$0xff]
    %v824 = vld [vmem:[%s821 + $0x10] sm:$0xff]
    %v825 = vld [vmem:[%s821 + $0x18] sm:$0xff]
    %826 = vmatprep.subr.mxu0 %v464
    %827 = vmatpush1.msra.mxu0 %v463
    %828 = vmatprep.subr.mxu0 %v460
    %829 = vmatpush1.msra.mxu0 %v459
    %830 = vmatprep.subr.mxu0 %v456
    %831 = vmatpush1.msra.mxu0 %v455
    %832 = vmatprep.subr.mxu0 %v452
    %833 = vmatpush1.msra.mxu0 %v451
    %834 = vmatprep.subr.mxu0 %v448
    %835 = vmatpush1.msra.mxu0 %v447
    %836 = vmatprep.subr.mxu0 %v444
    %837 = vmatpush1.msra.mxu0 %v443
    %838 = vmatprep.subr.mxu0 %v440
    %839 = vmatpush1.msra.mxu0 %v439
    %840 = vmatprep.subr.mxu0 %v436
    %841 = vmatpush1.msra.mxu0 %v435
    %842 = vmatprep.subr.mxu0 %v432
    %843 = vmatpush1.msra.mxu0 %v431
    %844 = vmatprep.subr.mxu0 %v428
    %845 = vmatpush1.msra.mxu0 %v427
    %846 = vmatprep.subr.mxu0 %v424
    %847 = vmatpush1.msra.mxu0 %v423
    %848 = vmatprep.subr.mxu0 %v420
    %849 = vmatpush1.msra.mxu0 %v419
    %850 = vmatprep.subr.mxu0 %v416
    %851 = vmatpush1.msra.mxu0 %v415
    %852 = vmatprep.subr.mxu0 %v412
    %853 = vmatpush1.msra.mxu0 %v411
    %854 = vmatprep.subr.mxu0 %v408
    %855 = vmatpush1.msra.mxu0 %v407
    %856 = vmatprep.subr.mxu0 %v404
    %857 = vmatpush1.msra.mxu0 %v403
    %858 = vmatprep.subr.mxu0 0.0
    %859 = vmatpush2.msra.mxu0 0.0
    %860 = vmatprep.subr.mxu0 0.0
    %861 = vmatpush2.msra.mxu0 0.0
    %862 = vmatprep.subr.mxu0 0.0
    %863 = vmatpush2.msra.mxu0 0.0
    %864 = vmatprep.subr.mxu0 0.0
    %865 = vmatpush2.msra.mxu0 0.0
    %866 = vmatprep.subr.mxu0 0.0
    %867 = vmatpush2.msra.mxu0 0.0
    %868 = vmatprep.subr.mxu0 0.0
    %869 = vmatpush2.msra.mxu0 0.0
    %870 = vmatprep.subr.mxu0 0.0
    %871 = vmatpush2.msra.mxu0 0.0
    %872 = vmatprep.subr.mxu0 0.0
    %873 = vmatpush2.msra.mxu0 0.0
    %874 = vmatprep.subr.mxu0 0.0
    %875 = vmatpush2.msra.mxu0 0.0
    %876 = vmatprep.subr.mxu0 0.0
    %877 = vmatpush2.msra.mxu0 0.0
    %878 = vmatprep.subr.mxu0 0.0
    %879 = vmatpush2.msra.mxu0 0.0
    %880 = vmatprep.subr.mxu0 0.0
    %881 = vmatpush2.msra.mxu0 0.0
    %882 = vmatprep.subr.mxu0 0.0
    %883 = vmatpush2.msra.mxu0 0.0
    %884 = vmatprep.subr.mxu0 0.0
    %885 = vmatpush2.msra.mxu0 0.0
    %886 = vmatprep.subr.mxu0 0.0
    %887 = vmatpush2.msra.mxu0 0.0
    %888 = vmatprep.subr.mxu0 0.0
    %889 = vmatpush2.msra.mxu0 0.0
    %890 = vmatprep.mubr.f32.mxu0 0.0
    %891 = vmatmul.mubr.f32.gmra.mxu0 %v818
    %v892 = vpop.f32.mrf.mxu0
    %v893 = vadd.f32 0.0, %v892
    %v894 = vpop.f32.mrf.mxu0
    %v895 = vadd.f32 0.0, %v894
    %896 = vdwg.mxu0
    %897 = vmatprep.subr.mxu0 %v466
    %898 = vmatpush1.msra.mxu0 %v465
    %899 = vmatprep.subr.mxu0 %v462
    %900 = vmatpush1.msra.mxu0 %v461
    %901 = vmatprep.subr.mxu0 %v458
    %902 = vmatpush1.msra.mxu0 %v457
    %903 = vmatprep.subr.mxu0 %v454
    %904 = vmatpush1.msra.mxu0 %v453
    %905 = vmatprep.subr.mxu0 %v450
    %906 = vmatpush1.msra.mxu0 %v449
    %907 = vmatprep.subr.mxu0 %v446
    %908 = vmatpush1.msra.mxu0 %v445
    %909 = vmatprep.subr.mxu0 %v442
    %910 = vmatpush1.msra.mxu0 %v441
    %911 = vmatprep.subr.mxu0 %v438
    %912 = vmatpush1.msra.mxu0 %v437
    %913 = vmatprep.subr.mxu0 %v434
    %914 = vmatpush1.msra.mxu0 %v433
    %915 = vmatprep.subr.mxu0 %v430
    %916 = vmatpush1.msra.mxu0 %v429
    %917 = vmatprep.subr.mxu0 %v426
    %918 = vmatpush1.msra.mxu0 %v425
    %919 = vmatprep.subr.mxu0 %v422
    %920 = vmatpush1.msra.mxu0 %v421
    %921 = vmatprep.subr.mxu0 %v418
    %922 = vmatpush1.msra.mxu0 %v417
    %923 = vmatprep.subr.mxu0 %v414
    %924 = vmatpush1.msra.mxu0 %v413
    %925 = vmatprep.subr.mxu0 %v410
    %926 = vmatpush1.msra.mxu0 %v409
    %927 = vmatprep.subr.mxu0 %v406
    %928 = vmatpush1.msra.mxu0 %v405
    %929 = vmatprep.subr.mxu0 0.0
    %930 = vmatpush2.msra.mxu0 0.0
    %931 = vmatprep.subr.mxu0 0.0
    %932 = vmatpush2.msra.mxu0 0.0
    %933 = vmatprep.subr.mxu0 0.0
    %934 = vmatpush2.msra.mxu0 0.0
    %935 = vmatprep.subr.mxu0 0.0
    %936 = vmatpush2.msra.mxu0 0.0
    %937 = vmatprep.subr.mxu0 0.0
    %938 = vmatpush2.msra.mxu0 0.0
    %939 = vmatprep.subr.mxu0 0.0
    %940 = vmatpush2.msra.mxu0 0.0
    %941 = vmatprep.subr.mxu0 0.0
    %942 = vmatpush2.msra.mxu0 0.0
    %943 = vmatprep.subr.mxu0 0.0
    %944 = vmatpush2.msra.mxu0 0.0
    %945 = vmatprep.subr.mxu0 0.0
    %946 = vmatpush2.msra.mxu0 0.0
    %947 = vmatprep.subr.mxu0 0.0
    %948 = vmatpush2.msra.mxu0 0.0
    %949 = vmatprep.subr.mxu0 0.0
    %950 = vmatpush2.msra.mxu0 0.0
    %951 = vmatprep.subr.mxu0 0.0
    %952 = vmatpush2.msra.mxu0 0.0
    %953 = vmatprep.subr.mxu0 0.0
    %954 = vmatpush2.msra.mxu0 0.0
    %955 = vmatprep.subr.mxu0 0.0
    %956 = vmatpush2.msra.mxu0 0.0
    %957 = vmatprep.subr.mxu0 0.0
    %958 = vmatpush2.msra.mxu0 0.0
    %959 = vmatprep.subr.mxu0 0.0
    %960 = vmatpush2.msra.mxu0 0.0
    %961 = vmatprep.mubr.f32.mxu0 0.0
    %962 = vmatmul.mubr.f32.gmra.mxu0 %v818
    %v963 = vpop.f32.mrf.mxu0
    %v964 = vadd.f32 0.0, %v963
    %v965 = vpop.f32.mrf.mxu0
    %v966 = vadd.f32 0.0, %v965
    %967 = vdwg.mxu0
    %v968 = vadd.f32 %v822, %v893
    %v969 = vadd.f32 %v823, %v895
    %v970 = vadd.f32 %v824, %v964
    %v971 = vadd.f32 %v825, %v966
    %v972 = vxor.u32 %v968, 2147483648
    %v973 = vmul.f32 %v972, 1.442695
    %v974 = vpow.pop %v973
    %v975 = vadd.f32 %v974, 1.0
    %v976 = vrcp.pop %v975
    %v977 = vmul.f32 1.0, %v976
    %v978 = vxor.u32 %v969, 2147483648
    %v979 = vmul.f32 %v978, 1.442695
    %v980 = vpow.pop %v979
    %v981 = vadd.f32 %v980, 1.0
    %v982 = vrcp.pop %v981
    %v983 = vmul.f32 1.0, %v982
    %v984 = vtanh.pop %v970
    %v985 = vxor.u32 %v971, 2147483648
    %v986 = vmul.f32 %v985, 1.442695
    %v987 = vpow.pop %v986
    %v988 = vadd.f32 %v987, 1.0
    %v989 = vrcp.pop %v988
    %v990 = vmul.f32 1.0, %v989
    %v991 = vmul.f32 %v983, %v816
    %v992 = vmul.f32 %v977, %v984
    %v993 = vadd.f32 %v991, %v992
    %v994 = vtanh.pop %v993
    %v995 = vmul.f32 %v990, %v994
    %s996 = scalar_lea.vmem %s4, 16
    %997 = vst [vmem:[%s996] sm:$0xff] %v995
    %s998 = scalar_lea.vmem [#allocation2], 96
    %v999 = vld [vmem:[%s998] sm:$0xff]
    %v1000 = vld [vmem:[%s998 + $0x8] sm:$0xff]
    %v1001 = vld [vmem:[%s998 + $0x10] sm:$0xff]
    %v1002 = vld [vmem:[%s998 + $0x18] sm:$0xff]
    %1003 = vmatprep.subr.mxu0 %v464
    %1004 = vmatpush1.msra.mxu0 %v463
    %1005 = vmatprep.subr.mxu0 %v460
    %1006 = vmatpush1.msra.mxu0 %v459
    %1007 = vmatprep.subr.mxu0 %v456
    %1008 = vmatpush1.msra.mxu0 %v455
    %1009 = vmatprep.subr.mxu0 %v452
    %1010 = vmatpush1.msra.mxu0 %v451
    %1011 = vmatprep.subr.mxu0 %v448
    %1012 = vmatpush1.msra.mxu0 %v447
    %1013 = vmatprep.subr.mxu0 %v444
    %1014 = vmatpush1.msra.mxu0 %v443
    %1015 = vmatprep.subr.mxu0 %v440
    %1016 = vmatpush1.msra.mxu0 %v439
    %1017 = vmatprep.subr.mxu0 %v436
    %1018 = vmatpush1.msra.mxu0 %v435
    %1019 = vmatprep.subr.mxu0 %v432
    %1020 = vmatpush1.msra.mxu0 %v431
    %1021 = vmatprep.subr.mxu0 %v428
    %1022 = vmatpush1.msra.mxu0 %v427
    %1023 = vmatprep.subr.mxu0 %v424
    %1024 = vmatpush1.msra.mxu0 %v423
    %1025 = vmatprep.subr.mxu0 %v420
    %1026 = vmatpush1.msra.mxu0 %v419
    %1027 = vmatprep.subr.mxu0 %v416
    %1028 = vmatpush1.msra.mxu0 %v415
    %1029 = vmatprep.subr.mxu0 %v412
    %1030 = vmatpush1.msra.mxu0 %v411
    %1031 = vmatprep.subr.mxu0 %v408
    %1032 = vmatpush1.msra.mxu0 %v407
    %1033 = vmatprep.subr.mxu0 %v404
    %1034 = vmatpush1.msra.mxu0 %v403
    %1035 = vmatprep.subr.mxu0 0.0
    %1036 = vmatpush2.msra.mxu0 0.0
    %1037 = vmatprep.subr.mxu0 0.0
    %1038 = vmatpush2.msra.mxu0 0.0
    %1039 = vmatprep.subr.mxu0 0.0
    %1040 = vmatpush2.msra.mxu0 0.0
    %1041 = vmatprep.subr.mxu0 0.0
    %1042 = vmatpush2.msra.mxu0 0.0
    %1043 = vmatprep.subr.mxu0 0.0
    %1044 = vmatpush2.msra.mxu0 0.0
    %1045 = vmatprep.subr.mxu0 0.0
    %1046 = vmatpush2.msra.mxu0 0.0
    %1047 = vmatprep.subr.mxu0 0.0
    %1048 = vmatpush2.msra.mxu0 0.0
    %1049 = vmatprep.subr.mxu0 0.0
    %1050 = vmatpush2.msra.mxu0 0.0
    %1051 = vmatprep.subr.mxu0 0.0
    %1052 = vmatpush2.msra.mxu0 0.0
    %1053 = vmatprep.subr.mxu0 0.0
    %1054 = vmatpush2.msra.mxu0 0.0
    %1055 = vmatprep.subr.mxu0 0.0
    %1056 = vmatpush2.msra.mxu0 0.0
    %1057 = vmatprep.subr.mxu0 0.0
    %1058 = vmatpush2.msra.mxu0 0.0
    %1059 = vmatprep.subr.mxu0 0.0
    %1060 = vmatpush2.msra.mxu0 0.0
    %1061 = vmatprep.subr.mxu0 0.0
    %1062 = vmatpush2.msra.mxu0 0.0
    %1063 = vmatprep.subr.mxu0 0.0
    %1064 = vmatpush2.msra.mxu0 0.0
    %1065 = vmatprep.subr.mxu0 0.0
    %1066 = vmatpush2.msra.mxu0 0.0
    %1067 = vmatprep.mubr.f32.mxu0 0.0
    %1068 = vmatmul.mubr.f32.gmra.mxu0 %v995
    %v1069 = vpop.f32.mrf.mxu0
    %v1070 = vadd.f32 0.0, %v1069
    %v1071 = vpop.f32.mrf.mxu0
    %v1072 = vadd.f32 0.0, %v1071
    %1073 = vdwg.mxu0
    %1074 = vmatprep.subr.mxu0 %v466
    %1075 = vmatpush1.msra.mxu0 %v465
    %1076 = vmatprep.subr.mxu0 %v462
    %1077 = vmatpush1.msra.mxu0 %v461
    %1078 = vmatprep.subr.mxu0 %v458
    %1079 = vmatpush1.msra.mxu0 %v457
    %1080 = vmatprep.subr.mxu0 %v454
    %1081 = vmatpush1.msra.mxu0 %v453
    %1082 = vmatprep.subr.mxu0 %v450
    %1083 = vmatpush1.msra.mxu0 %v449
    %1084 = vmatprep.subr.mxu0 %v446
    %1085 = vmatpush1.msra.mxu0 %v445
    %1086 = vmatprep.subr.mxu0 %v442
    %1087 = vmatpush1.msra.mxu0 %v441
    %1088 = vmatprep.subr.mxu0 %v438
    %1089 = vmatpush1.msra.mxu0 %v437
    %1090 = vmatprep.subr.mxu0 %v434
    %1091 = vmatpush1.msra.mxu0 %v433
    %1092 = vmatprep.subr.mxu0 %v430
    %1093 = vmatpush1.msra.mxu0 %v429
    %1094 = vmatprep.subr.mxu0 %v426
    %1095 = vmatpush1.msra.mxu0 %v425
    %1096 = vmatprep.subr.mxu0 %v422
    %1097 = vmatpush1.msra.mxu0 %v421
    %1098 = vmatprep.subr.mxu0 %v418
    %1099 = vmatpush1.msra.mxu0 %v417
    %1100 = vmatprep.subr.mxu0 %v414
    %1101 = vmatpush1.msra.mxu0 %v413
    %1102 = vmatprep.subr.mxu0 %v410
    %1103 = vmatpush1.msra.mxu0 %v409
    %1104 = vmatprep.subr.mxu0 %v406
    %1105 = vmatpush1.msra.mxu0 %v405
    %1106 = vmatprep.subr.mxu0 0.0
    %1107 = vmatpush2.msra.mxu0 0.0
    %1108 = vmatprep.subr.mxu0 0.0
    %1109 = vmatpush2.msra.mxu0 0.0
    %1110 = vmatprep.subr.mxu0 0.0
    %1111 = vmatpush2.msra.mxu0 0.0
    %1112 = vmatprep.subr.mxu0 0.0
    %1113 = vmatpush2.msra.mxu0 0.0
    %1114 = vmatprep.subr.mxu0 0.0
    %1115 = vmatpush2.msra.mxu0 0.0
    %1116 = vmatprep.subr.mxu0 0.0
    %1117 = vmatpush2.msra.mxu0 0.0
    %1118 = vmatprep.subr.mxu0 0.0
    %1119 = vmatpush2.msra.mxu0 0.0
    %1120 = vmatprep.subr.mxu0 0.0
    %1121 = vmatpush2.msra.mxu0 0.0
    %1122 = vmatprep.subr.mxu0 0.0
    %1123 = vmatpush2.msra.mxu0 0.0
    %1124 = vmatprep.subr.mxu0 0.0
    %1125 = vmatpush2.msra.mxu0 0.0
    %1126 = vmatprep.subr.mxu0 0.0
    %1127 = vmatpush2.msra.mxu0 0.0
    %1128 = vmatprep.subr.mxu0 0.0
    %1129 = vmatpush2.msra.mxu0 0.0
    %1130 = vmatprep.subr.mxu0 0.0
    %1131 = vmatpush2.msra.mxu0 0.0
    %1132 = vmatprep.subr.mxu0 0.0
    %1133 = vmatpush2.msra.mxu0 0.0
    %1134 = vmatprep.subr.mxu0 0.0
    %1135 = vmatpush2.msra.mxu0 0.0
    %1136 = vmatprep.subr.mxu0 0.0
    %1137 = vmatpush2.msra.mxu0 0.0
    %1138 = vmatprep.mubr.f32.mxu0 0.0
    %1139 = vmatmul.mubr.f32.gmra.mxu0 %v995
    %v1140 = vpop.f32.mrf.mxu0
    %v1141 = vadd.f32 0.0, %v1140
    %v1142 = vpop.f32.mrf.mxu0
    %v1143 = vadd.f32 0.0, %v1142
    %1144 = vdwg.mxu0
    %v1145 = vadd.f32 %v999, %v1070
    %v1146 = vadd.f32 %v1000, %v1072
    %v1147 = vadd.f32 %v1001, %v1141
    %v1148 = vadd.f32 %v1002, %v1143
    %v1149 = vxor.u32 %v1145, 2147483648
    %v1150 = vmul.f32 %v1149, 1.442695
    %v1151 = vpow.pop %v1150
    %v1152 = vadd.f32 %v1151, 1.0
    %v1153 = vrcp.pop %v1152
    %v1154 = vmul.f32 1.0, %v1153
    %v1155 = vxor.u32 %v1146, 2147483648
    %v1156 = vmul.f32 %v1155, 1.442695
    %v1157 = vpow.pop %v1156
    %v1158 = vadd.f32 %v1157, 1.0
    %v1159 = vrcp.pop %v1158
    %v1160 = vmul.f32 1.0, %v1159
    %v1161 = vtanh.pop %v1147
    %v1162 = vxor.u32 %v1148, 2147483648
    %v1163 = vmul.f32 %v1162, 1.442695
    %v1164 = vpow.pop %v1163
    %v1165 = vadd.f32 %v1164, 1.0
    %v1166 = vrcp.pop %v1165
    %v1167 = vmul.f32 1.0, %v1166
    %v1168 = vmul.f32 %v1160, %v993
    %v1169 = vmul.f32 %v1154, %v1161
    %v1170 = vadd.f32 %v1168, %v1169
    %v1171 = vtanh.pop %v1170
    %v1172 = vmul.f32 %v1167, %v1171
    %s1173 = scalar_lea.vmem %s4, 24
    %1174 = vst [vmem:[%s1173] sm:$0xff] %v1172
    %s1175 = scalar_lea.vmem [#allocation2], 128
    %v1176 = vld [vmem:[%s1175] sm:$0xff]
    %v1177 = vld [vmem:[%s1175 + $0x8] sm:$0xff]
    %v1178 = vld [vmem:[%s1175 + $0x10] sm:$0xff]
    %v1179 = vld [vmem:[%s1175 + $0x18] sm:$0xff]
    %1180 = vmatprep.subr.mxu0 %v464
    %1181 = vmatpush1.msra.mxu0 %v463
    %1182 = vmatprep.subr.mxu0 %v460
    %1183 = vmatpush1.msra.mxu0 %v459
    %1184 = vmatprep.subr.mxu0 %v456
    %1185 = vmatpush1.msra.mxu0 %v455
    %1186 = vmatprep.subr.mxu0 %v452
    %1187 = vmatpush1.msra.mxu0 %v451
    %1188 = vmatprep.subr.mxu0 %v448
    %1189 = vmatpush1.msra.mxu0 %v447
    %1190 = vmatprep.subr.mxu0 %v444
    %1191 = vmatpush1.msra.mxu0 %v443
    %1192 = vmatprep.subr.mxu0 %v440
    %1193 = vmatpush1.msra.mxu0 %v439
    %1194 = vmatprep.subr.mxu0 %v436
    %1195 = vmatpush1.msra.mxu0 %v435
    %1196 = vmatprep.subr.mxu0 %v432
    %1197 = vmatpush1.msra.mxu0 %v431
    %1198 = vmatprep.subr.mxu0 %v428
    %1199 = vmatpush1.msra.mxu0 %v427
    %1200 = vmatprep.subr.mxu0 %v424
    %1201 = vmatpush1.msra.mxu0 %v423
    %1202 = vmatprep.subr.mxu0 %v420
    %1203 = vmatpush1.msra.mxu0 %v419
    %1204 = vmatprep.subr.mxu0 %v416
    %1205 = vmatpush1.msra.mxu0 %v415
    %1206 = vmatprep.subr.mxu0 %v412
    %1207 = vmatpush1.msra.mxu0 %v411
    %1208 = vmatprep.subr.mxu0 %v408
    %1209 = vmatpush1.msra.mxu0 %v407
    %1210 = vmatprep.subr.mxu0 %v404
    %1211 = vmatpush1.msra.mxu0 %v403
    %1212 = vmatprep.subr.mxu0 0.0
    %1213 = vmatpush2.msra.mxu0 0.0
    %1214 = vmatprep.subr.mxu0 0.0
    %1215 = vmatpush2.msra.mxu0 0.0
    %1216 = vmatprep.subr.mxu0 0.0
    %1217 = vmatpush2.msra.mxu0 0.0
    %1218 = vmatprep.subr.mxu0 0.0
    %1219 = vmatpush2.msra.mxu0 0.0
    %1220 = vmatprep.subr.mxu0 0.0
    %1221 = vmatpush2.msra.mxu0 0.0
    %1222 = vmatprep.subr.mxu0 0.0
    %1223 = vmatpush2.msra.mxu0 0.0
    %1224 = vmatprep.subr.mxu0 0.0
    %1225 = vmatpush2.msra.mxu0 0.0
    %1226 = vmatprep.subr.mxu0 0.0
    %1227 = vmatpush2.msra.mxu0 0.0
    %1228 = vmatprep.subr.mxu0 0.0
    %1229 = vmatpush2.msra.mxu0 0.0
    %1230 = vmatprep.subr.mxu0 0.0
    %1231 = vmatpush2.msra.mxu0 0.0
    %1232 = vmatprep.subr.mxu0 0.0
    %1233 = vmatpush2.msra.mxu0 0.0
    %1234 = vmatprep.subr.mxu0 0.0
    %1235 = vmatpush2.msra.mxu0 0.0
    %1236 = vmatprep.subr.mxu0 0.0
    %1237 = vmatpush2.msra.mxu0 0.0
    %1238 = vmatprep.subr.mxu0 0.0
    %1239 = vmatpush2.msra.mxu0 0.0
    %1240 = vmatprep.subr.mxu0 0.0
    %1241 = vmatpush2.msra.mxu0 0.0
    %1242 = vmatprep.subr.mxu0 0.0
    %1243 = vmatpush2.msra.mxu0 0.0
    %1244 = vmatprep.mubr.f32.mxu0 0.0
    %1245 = vmatmul.mubr.f32.gmra.mxu0 %v1172
    %v1246 = vpop.f32.mrf.mxu0
    %v1247 = vadd.f32 0.0, %v1246
    %v1248 = vpop.f32.mrf.mxu0
    %v1249 = vadd.f32 0.0, %v1248
    %1250 = vdwg.mxu0
    %1251 = vmatprep.subr.mxu0 %v466
    %1252 = vmatpush1.msra.mxu0 %v465
    %1253 = vmatprep.subr.mxu0 %v462
    %1254 = vmatpush1.msra.mxu0 %v461
    %1255 = vmatprep.subr.mxu0 %v458
    %1256 = vmatpush1.msra.mxu0 %v457
    %1257 = vmatprep.subr.mxu0 %v454
    %1258 = vmatpush1.msra.mxu0 %v453
    %1259 = vmatprep.subr.mxu0 %v450
    %1260 = vmatpush1.msra.mxu0 %v449
    %1261 = vmatprep.subr.mxu0 %v446
    %1262 = vmatpush1.msra.mxu0 %v445
    %1263 = vmatprep.subr.mxu0 %v442
    %1264 = vmatpush1.msra.mxu0 %v441
    %1265 = vmatprep.subr.mxu0 %v438
    %1266 = vmatpush1.msra.mxu0 %v437
    %1267 = vmatprep.subr.mxu0 %v434
    %1268 = vmatpush1.msra.mxu0 %v433
    %1269 = vmatprep.subr.mxu0 %v430
    %1270 = vmatpush1.msra.mxu0 %v429
    %1271 = vmatprep.subr.mxu0 %v426
    %1272 = vmatpush1.msra.mxu0 %v425
    %1273 = vmatprep.subr.mxu0 %v422
    %1274 = vmatpush1.msra.mxu0 %v421
    %1275 = vmatprep.subr.mxu0 %v418
    %1276 = vmatpush1.msra.mxu0 %v417
    %1277 = vmatprep.subr.mxu0 %v414
    %1278 = vmatpush1.msra.mxu0 %v413
    %1279 = vmatprep.subr.mxu0 %v410
    %1280 = vmatpush1.msra.mxu0 %v409
    %1281 = vmatprep.subr.mxu0 %v406
    %1282 = vmatpush1.msra.mxu0 %v405
    %1283 = vmatprep.subr.mxu0 0.0
    %1284 = vmatpush2.msra.mxu0 0.0
    %1285 = vmatprep.subr.mxu0 0.0
    %1286 = vmatpush2.msra.mxu0 0.0
    %1287 = vmatprep.subr.mxu0 0.0
    %1288 = vmatpush2.msra.mxu0 0.0
    %1289 = vmatprep.subr.mxu0 0.0
    %1290 = vmatpush2.msra.mxu0 0.0
    %1291 = vmatprep.subr.mxu0 0.0
    %1292 = vmatpush2.msra.mxu0 0.0
    %1293 = vmatprep.subr.mxu0 0.0
    %1294 = vmatpush2.msra.mxu0 0.0
    %1295 = vmatprep.subr.mxu0 0.0
    %1296 = vmatpush2.msra.mxu0 0.0
    %1297 = vmatprep.subr.mxu0 0.0
    %1298 = vmatpush2.msra.mxu0 0.0
    %1299 = vmatprep.subr.mxu0 0.0
    %1300 = vmatpush2.msra.mxu0 0.0
    %1301 = vmatprep.subr.mxu0 0.0
    %1302 = vmatpush2.msra.mxu0 0.0
    %1303 = vmatprep.subr.mxu0 0.0
    %1304 = vmatpush2.msra.mxu0 0.0
    %1305 = vmatprep.subr.mxu0 0.0
    %1306 = vmatpush2.msra.mxu0 0.0
    %1307 = vmatprep.subr.mxu0 0.0
    %1308 = vmatpush2.msra.mxu0 0.0
    %1309 = vmatprep.subr.mxu0 0.0
    %1310 = vmatpush2.msra.mxu0 0.0
    %1311 = vmatprep.subr.mxu0 0.0
    %1312 = vmatpush2.msra.mxu0 0.0
    %1313 = vmatprep.subr.mxu0 0.0
    %1314 = vmatpush2.msra.mxu0 0.0
    %1315 = vmatprep.mubr.f32.mxu0 0.0
    %1316 = vmatmul.mubr.f32.gmra.mxu0 %v1172
    %v1317 = vpop.f32.mrf.mxu0
    %v1318 = vadd.f32 0.0, %v1317
    %v1319 = vpop.f32.mrf.mxu0
    %v1320 = vadd.f32 0.0, %v1319
    %1321 = vdwg.mxu0
    %v1322 = vadd.f32 %v1176, %v1247
    %v1323 = vadd.f32 %v1177, %v1249
    %v1324 = vadd.f32 %v1178, %v1318
    %v1325 = vadd.f32 %v1179, %v1320
    %v1326 = vxor.u32 %v1322, 2147483648
    %v1327 = vmul.f32 %v1326, 1.442695
    %v1328 = vpow.pop %v1327
    %v1329 = vadd.f32 %v1328, 1.0
    %v1330 = vrcp.pop %v1329
    %v1331 = vmul.f32 1.0, %v1330
    %v1332 = vxor.u32 %v1323, 2147483648
    %v1333 = vmul.f32 %v1332, 1.442695
    %v1334 = vpow.pop %v1333
    %v1335 = vadd.f32 %v1334, 1.0
    %v1336 = vrcp.pop %v1335
    %v1337 = vmul.f32 1.0, %v1336
    %v1338 = vtanh.pop %v1324
    %v1339 = vxor.u32 %v1325, 2147483648
    %v1340 = vmul.f32 %v1339, 1.442695
    %v1341 = vpow.pop %v1340
    %v1342 = vadd.f32 %v1341, 1.0
    %v1343 = vrcp.pop %v1342
    %v1344 = vmul.f32 1.0, %v1343
    %v1345 = vmul.f32 %v1337, %v1170
    %v1346 = vmul.f32 %v1331, %v1338
    %v1347 = vadd.f32 %v1345, %v1346
    %v1348 = vtanh.pop %v1347
    %v1349 = vmul.f32 %v1344, %v1348
    %s1350 = scalar_lea.vmem %s4, 32
    %1351 = vst [vmem:[%s1350] sm:$0xff] %v1349
    %s1352 = scalar_lea.vmem [#allocation2], 160
    %v1353 = vld [vmem:[%s1352] sm:$0xff]
    %v1354 = vld [vmem:[%s1352 + $0x8] sm:$0xff]
    %v1355 = vld [vmem:[%s1352 + $0x10] sm:$0xff]
    %v1356 = vld [vmem:[%s1352 + $0x18] sm:$0xff]
    %1357 = vmatprep.subr.mxu0 %v464
    %1358 = vmatpush1.msra.mxu0 %v463
    %1359 = vmatprep.subr.mxu0 %v460
    %1360 = vmatpush1.msra.mxu0 %v459
    %1361 = vmatprep.subr.mxu0 %v456
    %1362 = vmatpush1.msra.mxu0 %v455
    %1363 = vmatprep.subr.mxu0 %v452
    %1364 = vmatpush1.msra.mxu0 %v451
    %1365 = vmatprep.subr.mxu0 %v448
    %1366 = vmatpush1.msra.mxu0 %v447
    %1367 = vmatprep.subr.mxu0 %v444
    %1368 = vmatpush1.msra.mxu0 %v443
    %1369 = vmatprep.subr.mxu0 %v440
    %1370 = vmatpush1.msra.mxu0 %v439
    %1371 = vmatprep.subr.mxu0 %v436
    %1372 = vmatpush1.msra.mxu0 %v435
    %1373 = vmatprep.subr.mxu0 %v432
    %1374 = vmatpush1.msra.mxu0 %v431
    %1375 = vmatprep.subr.mxu0 %v428
    %1376 = vmatpush1.msra.mxu0 %v427
    %1377 = vmatprep.subr.mxu0 %v424
    %1378 = vmatpush1.msra.mxu0 %v423
    %1379 = vmatprep.subr.mxu0 %v420
    %1380 = vmatpush1.msra.mxu0 %v419
    %1381 = vmatprep.subr.mxu0 %v416
    %1382 = vmatpush1.msra.mxu0 %v415
    %1383 = vmatprep.subr.mxu0 %v412
    %1384 = vmatpush1.msra.mxu0 %v411
    %1385 = vmatprep.subr.mxu0 %v408
    %1386 = vmatpush1.msra.mxu0 %v407
    %1387 = vmatprep.subr.mxu0 %v404
    %1388 = vmatpush1.msra.mxu0 %v403
    %1389 = vmatprep.subr.mxu0 0.0
    %1390 = vmatpush2.msra.mxu0 0.0
    %1391 = vmatprep.subr.mxu0 0.0
    %1392 = vmatpush2.msra.mxu0 0.0
    %1393 = vmatprep.subr.mxu0 0.0
    %1394 = vmatpush2.msra.mxu0 0.0
    %1395 = vmatprep.subr.mxu0 0.0
    %1396 = vmatpush2.msra.mxu0 0.0
    %1397 = vmatprep.subr.mxu0 0.0
    %1398 = vmatpush2.msra.mxu0 0.0
    %1399 = vmatprep.subr.mxu0 0.0
    %1400 = vmatpush2.msra.mxu0 0.0
    %1401 = vmatprep.subr.mxu0 0.0
    %1402 = vmatpush2.msra.mxu0 0.0
    %1403 = vmatprep.subr.mxu0 0.0
    %1404 = vmatpush2.msra.mxu0 0.0
    %1405 = vmatprep.subr.mxu0 0.0
    %1406 = vmatpush2.msra.mxu0 0.0
    %1407 = vmatprep.subr.mxu0 0.0
    %1408 = vmatpush2.msra.mxu0 0.0
    %1409 = vmatprep.subr.mxu0 0.0
    %1410 = vmatpush2.msra.mxu0 0.0
    %1411 = vmatprep.subr.mxu0 0.0
    %1412 = vmatpush2.msra.mxu0 0.0
    %1413 = vmatprep.subr.mxu0 0.0
    %1414 = vmatpush2.msra.mxu0 0.0
    %1415 = vmatprep.subr.mxu0 0.0
    %1416 = vmatpush2.msra.mxu0 0.0
    %1417 = vmatprep.subr.mxu0 0.0
    %1418 = vmatpush2.msra.mxu0 0.0
    %1419 = vmatprep.subr.mxu0 0.0
    %1420 = vmatpush2.msra.mxu0 0.0
    %1421 = vmatprep.mubr.f32.mxu0 0.0
    %1422 = vmatmul.mubr.f32.gmra.mxu0 %v1349
    %v1423 = vpop.f32.mrf.mxu0
    %v1424 = vadd.f32 0.0, %v1423
    %v1425 = vpop.f32.mrf.mxu0
    %v1426 = vadd.f32 0.0, %v1425
    %1427 = vdwg.mxu0
    %1428 = vmatprep.subr.mxu0 %v466
    %1429 = vmatpush1.msra.mxu0 %v465
    %1430 = vmatprep.subr.mxu0 %v462
    %1431 = vmatpush1.msra.mxu0 %v461
    %1432 = vmatprep.subr.mxu0 %v458
    %1433 = vmatpush1.msra.mxu0 %v457
    %1434 = vmatprep.subr.mxu0 %v454
    %1435 = vmatpush1.msra.mxu0 %v453
    %1436 = vmatprep.subr.mxu0 %v450
    %1437 = vmatpush1.msra.mxu0 %v449
    %1438 = vmatprep.subr.mxu0 %v446
    %1439 = vmatpush1.msra.mxu0 %v445
    %1440 = vmatprep.subr.mxu0 %v442
    %1441 = vmatpush1.msra.mxu0 %v441
    %1442 = vmatprep.subr.mxu0 %v438
    %1443 = vmatpush1.msra.mxu0 %v437
    %1444 = vmatprep.subr.mxu0 %v434
    %1445 = vmatpush1.msra.mxu0 %v433
    %1446 = vmatprep.subr.mxu0 %v430
    %1447 = vmatpush1.msra.mxu0 %v429
    %1448 = vmatprep.subr.mxu0 %v426
    %1449 = vmatpush1.msra.mxu0 %v425
    %1450 = vmatprep.subr.mxu0 %v422
    %1451 = vmatpush1.msra.mxu0 %v421
    %1452 = vmatprep.subr.mxu0 %v418
    %1453 = vmatpush1.msra.mxu0 %v417
    %1454 = vmatprep.subr.mxu0 %v414
    %1455 = vmatpush1.msra.mxu0 %v413
    %1456 = vmatprep.subr.mxu0 %v410
    %1457 = vmatpush1.msra.mxu0 %v409
    %1458 = vmatprep.subr.mxu0 %v406
    %1459 = vmatpush1.msra.mxu0 %v405
    %1460 = vmatprep.subr.mxu0 0.0
    %1461 = vmatpush2.msra.mxu0 0.0
    %1462 = vmatprep.subr.mxu0 0.0
    %1463 = vmatpush2.msra.mxu0 0.0
    %1464 = vmatprep.subr.mxu0 0.0
    %1465 = vmatpush2.msra.mxu0 0.0
    %1466 = vmatprep.subr.mxu0 0.0
    %1467 = vmatpush2.msra.mxu0 0.0
    %1468 = vmatprep.subr.mxu0 0.0
    %1469 = vmatpush2.msra.mxu0 0.0
    %1470 = vmatprep.subr.mxu0 0.0
    %1471 = vmatpush2.msra.mxu0 0.0
    %1472 = vmatprep.subr.mxu0 0.0
    %1473 = vmatpush2.msra.mxu0 0.0
    %1474 = vmatprep.subr.mxu0 0.0
    %1475 = vmatpush2.msra.mxu0 0.0
    %1476 = vmatprep.subr.mxu0 0.0
    %1477 = vmatpush2.msra.mxu0 0.0
    %1478 = vmatprep.subr.mxu0 0.0
    %1479 = vmatpush2.msra.mxu0 0.0
    %1480 = vmatprep.subr.mxu0 0.0
    %1481 = vmatpush2.msra.mxu0 0.0
    %1482 = vmatprep.subr.mxu0 0.0
    %1483 = vmatpush2.msra.mxu0 0.0
    %1484 = vmatprep.subr.mxu0 0.0
    %1485 = vmatpush2.msra.mxu0 0.0
    %1486 = vmatprep.subr.mxu0 0.0
    %1487 = vmatpush2.msra.mxu0 0.0
    %1488 = vmatprep.subr.mxu0 0.0
    %1489 = vmatpush2.msra.mxu0 0.0
    %1490 = vmatprep.subr.mxu0 0.0
    %1491 = vmatpush2.msra.mxu0 0.0
    %1492 = vmatprep.mubr.f32.mxu0 0.0
    %1493 = vmatmul.mubr.f32.gmra.mxu0 %v1349
    %v1494 = vpop.f32.mrf.mxu0
    %v1495 = vadd.f32 0.0, %v1494
    %v1496 = vpop.f32.mrf.mxu0
    %v1497 = vadd.f32 0.0, %v1496
    %1498 = vdwg.mxu0
    %v1499 = vadd.f32 %v1353, %v1424
    %v1500 = vadd.f32 %v1354, %v1426
    %v1501 = vadd.f32 %v1355, %v1495
    %v1502 = vadd.f32 %v1356, %v1497
    %v1503 = vxor.u32 %v1499, 2147483648
    %v1504 = vmul.f32 %v1503, 1.442695
    %v1505 = vpow.pop %v1504
    %v1506 = vadd.f32 %v1505, 1.0
    %v1507 = vrcp.pop %v1506
    %v1508 = vmul.f32 1.0, %v1507
    %v1509 = vxor.u32 %v1500, 2147483648
    %v1510 = vmul.f32 %v1509, 1.442695
    %v1511 = vpow.pop %v1510
    %v1512 = vadd.f32 %v1511, 1.0
    %v1513 = vrcp.pop %v1512
    %v1514 = vmul.f32 1.0, %v1513
    %v1515 = vtanh.pop %v1501
    %v1516 = vxor.u32 %v1502, 2147483648
    %v1517 = vmul.f32 %v1516, 1.442695
    %v1518 = vpow.pop %v1517
    %v1519 = vadd.f32 %v1518, 1.0
    %v1520 = vrcp.pop %v1519
    %v1521 = vmul.f32 1.0, %v1520
    %v1522 = vmul.f32 %v1514, %v1347
    %v1523 = vmul.f32 %v1508, %v1515
    %v1524 = vadd.f32 %v1522, %v1523
    %v1525 = vtanh.pop %v1524
    %v1526 = vmul.f32 %v1521, %v1525
    %s1527 = scalar_lea.vmem %s4, 40
    %1528 = vst [vmem:[%s1527] sm:$0xff] %v1526
    %s1529 = scalar_lea.vmem [#allocation2], 192
    %v1530 = vld [vmem:[%s1529] sm:$0xff]
    %v1531 = vld [vmem:[%s1529 + $0x8] sm:$0xff]
    %v1532 = vld [vmem:[%s1529 + $0x10] sm:$0xff]
    %v1533 = vld [vmem:[%s1529 + $0x18] sm:$0xff]
    %1534 = vmatprep.subr.mxu0 %v464
    %1535 = vmatpush1.msra.mxu0 %v463
    %1536 = vmatprep.subr.mxu0 %v460
    %1537 = vmatpush1.msra.mxu0 %v459
    %1538 = vmatprep.subr.mxu0 %v456
    %1539 = vmatpush1.msra.mxu0 %v455
    %1540 = vmatprep.subr.mxu0 %v452
    %1541 = vmatpush1.msra.mxu0 %v451
    %1542 = vmatprep.subr.mxu0 %v448
    %1543 = vmatpush1.msra.mxu0 %v447
    %1544 = vmatprep.subr.mxu0 %v444
    %1545 = vmatpush1.msra.mxu0 %v443
    %1546 = vmatprep.subr.mxu0 %v440
    %1547 = vmatpush1.msra.mxu0 %v439
    %1548 = vmatprep.subr.mxu0 %v436
    %1549 = vmatpush1.msra.mxu0 %v435
    %1550 = vmatprep.subr.mxu0 %v432
    %1551 = vmatpush1.msra.mxu0 %v431
    %1552 = vmatprep.subr.mxu0 %v428
    %1553 = vmatpush1.msra.mxu0 %v427
    %1554 = vmatprep.subr.mxu0 %v424
    %1555 = vmatpush1.msra.mxu0 %v423
    %1556 = vmatprep.subr.mxu0 %v420
    %1557 = vmatpush1.msra.mxu0 %v419
    %1558 = vmatprep.subr.mxu0 %v416
    %1559 = vmatpush1.msra.mxu0 %v415
    %1560 = vmatprep.subr.mxu0 %v412
    %1561 = vmatpush1.msra.mxu0 %v411
    %1562 = vmatprep.subr.mxu0 %v408
    %1563 = vmatpush1.msra.mxu0 %v407
    %1564 = vmatprep.subr.mxu0 %v404
    %1565 = vmatpush1.msra.mxu0 %v403
    %1566 = vmatprep.subr.mxu0 0.0
    %1567 = vmatpush2.msra.mxu0 0.0
    %1568 = vmatprep.subr.mxu0 0.0
    %1569 = vmatpush2.msra.mxu0 0.0
    %1570 = vmatprep.subr.mxu0 0.0
    %1571 = vmatpush2.msra.mxu0 0.0
    %1572 = vmatprep.subr.mxu0 0.0
    %1573 = vmatpush2.msra.mxu0 0.0
    %1574 = vmatprep.subr.mxu0 0.0
    %1575 = vmatpush2.msra.mxu0 0.0
    %1576 = vmatprep.subr.mxu0 0.0
    %1577 = vmatpush2.msra.mxu0 0.0
    %1578 = vmatprep.subr.mxu0 0.0
    %1579 = vmatpush2.msra.mxu0 0.0
    %1580 = vmatprep.subr.mxu0 0.0
    %1581 = vmatpush2.msra.mxu0 0.0
    %1582 = vmatprep.subr.mxu0 0.0
    %1583 = vmatpush2.msra.mxu0 0.0
    %1584 = vmatprep.subr.mxu0 0.0
    %1585 = vmatpush2.msra.mxu0 0.0
    %1586 = vmatprep.subr.mxu0 0.0
    %1587 = vmatpush2.msra.mxu0 0.0
    %1588 = vmatprep.subr.mxu0 0.0
    %1589 = vmatpush2.msra.mxu0 0.0
    %1590 = vmatprep.subr.mxu0 0.0
    %1591 = vmatpush2.msra.mxu0 0.0
    %1592 = vmatprep.subr.mxu0 0.0
    %1593 = vmatpush2.msra.mxu0 0.0
    %1594 = vmatprep.subr.mxu0 0.0
    %1595 = vmatpush2.msra.mxu0 0.0
    %1596 = vmatprep.subr.mxu0 0.0
    %1597 = vmatpush2.msra.mxu0 0.0
    %1598 = vmatprep.mubr.f32.mxu0 0.0
    %1599 = vmatmul.mubr.f32.gmra.mxu0 %v1526
    %v1600 = vpop.f32.mrf.mxu0
    %v1601 = vadd.f32 0.0, %v1600
    %v1602 = vpop.f32.mrf.mxu0
    %v1603 = vadd.f32 0.0, %v1602
    %1604 = vdwg.mxu0
    %1605 = vmatprep.subr.mxu0 %v466
    %1606 = vmatpush1.msra.mxu0 %v465
    %1607 = vmatprep.subr.mxu0 %v462
    %1608 = vmatpush1.msra.mxu0 %v461
    %1609 = vmatprep.subr.mxu0 %v458
    %1610 = vmatpush1.msra.mxu0 %v457
    %1611 = vmatprep.subr.mxu0 %v454
    %1612 = vmatpush1.msra.mxu0 %v453
    %1613 = vmatprep.subr.mxu0 %v450
    %1614 = vmatpush1.msra.mxu0 %v449
    %1615 = vmatprep.subr.mxu0 %v446
    %1616 = vmatpush1.msra.mxu0 %v445
    %1617 = vmatprep.subr.mxu0 %v442
    %1618 = vmatpush1.msra.mxu0 %v441
    %1619 = vmatprep.subr.mxu0 %v438
    %1620 = vmatpush1.msra.mxu0 %v437
    %1621 = vmatprep.subr.mxu0 %v434
    %1622 = vmatpush1.msra.mxu0 %v433
    %1623 = vmatprep.subr.mxu0 %v430
    %1624 = vmatpush1.msra.mxu0 %v429
    %1625 = vmatprep.subr.mxu0 %v426
    %1626 = vmatpush1.msra.mxu0 %v425
    %1627 = vmatprep.subr.mxu0 %v422
    %1628 = vmatpush1.msra.mxu0 %v421
    %1629 = vmatprep.subr.mxu0 %v418
    %1630 = vmatpush1.msra.mxu0 %v417
    %1631 = vmatprep.subr.mxu0 %v414
    %1632 = vmatpush1.msra.mxu0 %v413
    %1633 = vmatprep.subr.mxu0 %v410
    %1634 = vmatpush1.msra.mxu0 %v409
    %1635 = vmatprep.subr.mxu0 %v406
    %1636 = vmatpush1.msra.mxu0 %v405
    %1637 = vmatprep.subr.mxu0 0.0
    %1638 = vmatpush2.msra.mxu0 0.0
    %1639 = vmatprep.subr.mxu0 0.0
    %1640 = vmatpush2.msra.mxu0 0.0
    %1641 = vmatprep.subr.mxu0 0.0
    %1642 = vmatpush2.msra.mxu0 0.0
    %1643 = vmatprep.subr.mxu0 0.0
    %1644 = vmatpush2.msra.mxu0 0.0
    %1645 = vmatprep.subr.mxu0 0.0
    %1646 = vmatpush2.msra.mxu0 0.0
    %1647 = vmatprep.subr.mxu0 0.0
    %1648 = vmatpush2.msra.mxu0 0.0
    %1649 = vmatprep.subr.mxu0 0.0
    %1650 = vmatpush2.msra.mxu0 0.0
    %1651 = vmatprep.subr.mxu0 0.0
    %1652 = vmatpush2.msra.mxu0 0.0
    %1653 = vmatprep.subr.mxu0 0.0
    %1654 = vmatpush2.msra.mxu0 0.0
    %1655 = vmatprep.subr.mxu0 0.0
    %1656 = vmatpush2.msra.mxu0 0.0
    %1657 = vmatprep.subr.mxu0 0.0
    %1658 = vmatpush2.msra.mxu0 0.0
    %1659 = vmatprep.subr.mxu0 0.0
    %1660 = vmatpush2.msra.mxu0 0.0
    %1661 = vmatprep.subr.mxu0 0.0
    %1662 = vmatpush2.msra.mxu0 0.0
    %1663 = vmatprep.subr.mxu0 0.0
    %1664 = vmatpush2.msra.mxu0 0.0
    %1665 = vmatprep.subr.mxu0 0.0
    %1666 = vmatpush2.msra.mxu0 0.0
    %1667 = vmatprep.subr.mxu0 0.0
    %1668 = vmatpush2.msra.mxu0 0.0
    %1669 = vmatprep.mubr.f32.mxu0 0.0
    %1670 = vmatmul.mubr.f32.gmra.mxu0 %v1526
    %v1671 = vpop.f32.mrf.mxu0
    %v1672 = vadd.f32 0.0, %v1671
    %v1673 = vpop.f32.mrf.mxu0
    %v1674 = vadd.f32 0.0, %v1673
    %1675 = vdwg.mxu0
    %v1676 = vadd.f32 %v1530, %v1601
    %v1677 = vadd.f32 %v1531, %v1603
    %v1678 = vadd.f32 %v1532, %v1672
    %v1679 = vadd.f32 %v1533, %v1674
    %v1680 = vxor.u32 %v1676, 2147483648
    %v1681 = vmul.f32 %v1680, 1.442695
    %v1682 = vpow.pop %v1681
    %v1683 = vadd.f32 %v1682, 1.0
    %v1684 = vrcp.pop %v1683
    %v1685 = vmul.f32 1.0, %v1684
    %v1686 = vxor.u32 %v1677, 2147483648
    %v1687 = vmul.f32 %v1686, 1.442695
    %v1688 = vpow.pop %v1687
    %v1689 = vadd.f32 %v1688, 1.0
    %v1690 = vrcp.pop %v1689
    %v1691 = vmul.f32 1.0, %v1690
    %v1692 = vtanh.pop %v1678
    %v1693 = vxor.u32 %v1679, 2147483648
    %v1694 = vmul.f32 %v1693, 1.442695
    %v1695 = vpow.pop %v1694
    %v1696 = vadd.f32 %v1695, 1.0
    %v1697 = vrcp.pop %v1696
    %v1698 = vmul.f32 1.0, %v1697
    %v1699 = vmul.f32 %v1691, %v1524
    %v1700 = vmul.f32 %v1685, %v1692
    %v1701 = vadd.f32 %v1699, %v1700
    %v1702 = vtanh.pop %v1701
    %v1703 = vmul.f32 %v1698, %v1702
    %s1704 = scalar_lea.vmem %s4, 48
    %1705 = vst [vmem:[%s1704] sm:$0xff] %v1703
    %s1706 = scalar_lea.vmem [#allocation2], 224
    %v1707 = vld [vmem:[%s1706] sm:$0xff]
    %v1708 = vld [vmem:[%s1706 + $0x8] sm:$0xff]
    %v1709 = vld [vmem:[%s1706 + $0x10] sm:$0xff]
    %v1710 = vld [vmem:[%s1706 + $0x18] sm:$0xff]
    %1711 = vmatprep.subr.mxu0 %v464
    %1712 = vmatpush1.msra.mxu0 %v463
    %1713 = vmatprep.subr.mxu0 %v460
    %1714 = vmatpush1.msra.mxu0 %v459
    %1715 = vmatprep.subr.mxu0 %v456
    %1716 = vmatpush1.msra.mxu0 %v455
    %1717 = vmatprep.subr.mxu0 %v452
    %1718 = vmatpush1.msra.mxu0 %v451
    %1719 = vmatprep.subr.mxu0 %v448
    %1720 = vmatpush1.msra.mxu0 %v447
    %1721 = vmatprep.subr.mxu0 %v444
    %1722 = vmatpush1.msra.mxu0 %v443
    %1723 = vmatprep.subr.mxu0 %v440
    %1724 = vmatpush1.msra.mxu0 %v439
    %1725 = vmatprep.subr.mxu0 %v436
    %1726 = vmatpush1.msra.mxu0 %v435
    %1727 = vmatprep.subr.mxu0 %v432
    %1728 = vmatpush1.msra.mxu0 %v431
    %1729 = vmatprep.subr.mxu0 %v428
    %1730 = vmatpush1.msra.mxu0 %v427
    %1731 = vmatprep.subr.mxu0 %v424
    %1732 = vmatpush1.msra.mxu0 %v423
    %1733 = vmatprep.subr.mxu0 %v420
    %1734 = vmatpush1.msra.mxu0 %v419
    %1735 = vmatprep.subr.mxu0 %v416
    %1736 = vmatpush1.msra.mxu0 %v415
    %1737 = vmatprep.subr.mxu0 %v412
    %1738 = vmatpush1.msra.mxu0 %v411
    %1739 = vmatprep.subr.mxu0 %v408
    %1740 = vmatpush1.msra.mxu0 %v407
    %1741 = vmatprep.subr.mxu0 %v404
    %1742 = vmatpush1.msra.mxu0 %v403
    %1743 = vmatprep.subr.mxu0 0.0
    %1744 = vmatpush2.msra.mxu0 0.0
    %1745 = vmatprep.subr.mxu0 0.0
    %1746 = vmatpush2.msra.mxu0 0.0
    %1747 = vmatprep.subr.mxu0 0.0
    %1748 = vmatpush2.msra.mxu0 0.0
    %1749 = vmatprep.subr.mxu0 0.0
    %1750 = vmatpush2.msra.mxu0 0.0
    %1751 = vmatprep.subr.mxu0 0.0
    %1752 = vmatpush2.msra.mxu0 0.0
    %1753 = vmatprep.subr.mxu0 0.0
    %1754 = vmatpush2.msra.mxu0 0.0
    %1755 = vmatprep.subr.mxu0 0.0
    %1756 = vmatpush2.msra.mxu0 0.0
    %1757 = vmatprep.subr.mxu0 0.0
    %1758 = vmatpush2.msra.mxu0 0.0
    %1759 = vmatprep.subr.mxu0 0.0
    %1760 = vmatpush2.msra.mxu0 0.0
    %1761 = vmatprep.subr.mxu0 0.0
    %1762 = vmatpush2.msra.mxu0 0.0
    %1763 = vmatprep.subr.mxu0 0.0
    %1764 = vmatpush2.msra.mxu0 0.0
    %1765 = vmatprep.subr.mxu0 0.0
    %1766 = vmatpush2.msra.mxu0 0.0
    %1767 = vmatprep.subr.mxu0 0.0
    %1768 = vmatpush2.msra.mxu0 0.0
    %1769 = vmatprep.subr.mxu0 0.0
    %1770 = vmatpush2.msra.mxu0 0.0
    %1771 = vmatprep.subr.mxu0 0.0
    %1772 = vmatpush2.msra.mxu0 0.0
    %1773 = vmatprep.subr.mxu0 0.0
    %1774 = vmatpush2.msra.mxu0 0.0
    %1775 = vmatprep.mubr.f32.mxu0 0.0
    %1776 = vmatmul.mubr.f32.gmra.mxu0 %v1703
    %v1777 = vpop.f32.mrf.mxu0
    %v1778 = vadd.f32 0.0, %v1777
    %v1779 = vpop.f32.mrf.mxu0
    %v1780 = vadd.f32 0.0, %v1779
    %1781 = vdwg.mxu0
    %1782 = vmatprep.subr.mxu0 %v466
    %1783 = vmatpush1.msra.mxu0 %v465
    %1784 = vmatprep.subr.mxu0 %v462
    %1785 = vmatpush1.msra.mxu0 %v461
    %1786 = vmatprep.subr.mxu0 %v458
    %1787 = vmatpush1.msra.mxu0 %v457
    %1788 = vmatprep.subr.mxu0 %v454
    %1789 = vmatpush1.msra.mxu0 %v453
    %1790 = vmatprep.subr.mxu0 %v450
    %1791 = vmatpush1.msra.mxu0 %v449
    %1792 = vmatprep.subr.mxu0 %v446
    %1793 = vmatpush1.msra.mxu0 %v445
    %1794 = vmatprep.subr.mxu0 %v442
    %1795 = vmatpush1.msra.mxu0 %v441
    %1796 = vmatprep.subr.mxu0 %v438
    %1797 = vmatpush1.msra.mxu0 %v437
    %1798 = vmatprep.subr.mxu0 %v434
    %1799 = vmatpush1.msra.mxu0 %v433
    %1800 = vmatprep.subr.mxu0 %v430
    %1801 = vmatpush1.msra.mxu0 %v429
    %1802 = vmatprep.subr.mxu0 %v426
    %1803 = vmatpush1.msra.mxu0 %v425
    %1804 = vmatprep.subr.mxu0 %v422
    %1805 = vmatpush1.msra.mxu0 %v421
    %1806 = vmatprep.subr.mxu0 %v418
    %1807 = vmatpush1.msra.mxu0 %v417
    %1808 = vmatprep.subr.mxu0 %v414
    %1809 = vmatpush1.msra.mxu0 %v413
    %1810 = vmatprep.subr.mxu0 %v410
    %1811 = vmatpush1.msra.mxu0 %v409
    %1812 = vmatprep.subr.mxu0 %v406
    %1813 = vmatpush1.msra.mxu0 %v405
    %1814 = vmatprep.subr.mxu0 0.0
    %1815 = vmatpush2.msra.mxu0 0.0
    %1816 = vmatprep.subr.mxu0 0.0
    %1817 = vmatpush2.msra.mxu0 0.0
    %1818 = vmatprep.subr.mxu0 0.0
    %1819 = vmatpush2.msra.mxu0 0.0
    %1820 = vmatprep.subr.mxu0 0.0
    %1821 = vmatpush2.msra.mxu0 0.0
    %1822 = vmatprep.subr.mxu0 0.0
    %1823 = vmatpush2.msra.mxu0 0.0
    %1824 = vmatprep.subr.mxu0 0.0
    %1825 = vmatpush2.msra.mxu0 0.0
    %1826 = vmatprep.subr.mxu0 0.0
    %1827 = vmatpush2.msra.mxu0 0.0
    %1828 = vmatprep.subr.mxu0 0.0
    %1829 = vmatpush2.msra.mxu0 0.0
    %1830 = vmatprep.subr.mxu0 0.0
    %1831 = vmatpush2.msra.mxu0 0.0
    %1832 = vmatprep.subr.mxu0 0.0
    %1833 = vmatpush2.msra.mxu0 0.0
    %1834 = vmatprep.subr.mxu0 0.0
    %1835 = vmatpush2.msra.mxu0 0.0
    %1836 = vmatprep.subr.mxu0 0.0
    %1837 = vmatpush2.msra.mxu0 0.0
    %1838 = vmatprep.subr.mxu0 0.0
    %1839 = vmatpush2.msra.mxu0 0.0
    %1840 = vmatprep.subr.mxu0 0.0
    %1841 = vmatpush2.msra.mxu0 0.0
    %1842 = vmatprep.subr.mxu0 0.0
    %1843 = vmatpush2.msra.mxu0 0.0
    %1844 = vmatprep.subr.mxu0 0.0
    %1845 = vmatpush2.msra.mxu0 0.0
    %1846 = vmatprep.mubr.f32.mxu0 0.0
    %1847 = vmatmul.mubr.f32.gmra.mxu0 %v1703
    %v1848 = vpop.f32.mrf.mxu0
    %v1849 = vadd.f32 0.0, %v1848
    %v1850 = vpop.f32.mrf.mxu0
    %v1851 = vadd.f32 0.0, %v1850
    %1852 = vdwg.mxu0
    %v1853 = vadd.f32 %v1707, %v1778
    %v1854 = vadd.f32 %v1708, %v1780
    %v1855 = vadd.f32 %v1709, %v1849
    %v1856 = vadd.f32 %v1710, %v1851
    %v1857 = vxor.u32 %v1853, 2147483648
    %v1858 = vmul.f32 %v1857, 1.442695
    %v1859 = vpow.pop %v1858
    %v1860 = vadd.f32 %v1859, 1.0
    %v1861 = vrcp.pop %v1860
    %v1862 = vmul.f32 1.0, %v1861
    %v1863 = vxor.u32 %v1854, 2147483648
    %v1864 = vmul.f32 %v1863, 1.442695
    %v1865 = vpow.pop %v1864
    %v1866 = vadd.f32 %v1865, 1.0
    %v1867 = vrcp.pop %v1866
    %v1868 = vmul.f32 1.0, %v1867
    %v1869 = vtanh.pop %v1855
    %v1870 = vxor.u32 %v1856, 2147483648
    %v1871 = vmul.f32 %v1870, 1.442695
    %v1872 = vpow.pop %v1871
    %v1873 = vadd.f32 %v1872, 1.0
    %v1874 = vrcp.pop %v1873
    %v1875 = vmul.f32 1.0, %v1874
    %v1876 = vmul.f32 %v1868, %v1701
    %v1877 = vmul.f32 %v1862, %v1869
    %v1878 = vadd.f32 %v1876, %v1877
    %v1879 = vtanh.pop %v1878
    %v1880 = vmul.f32 %v1875, %v1879
    %s1881 = scalar_lea.vmem %s4, 56
    %1882 = vst [vmem:[%s1881] sm:$0xff] %v1880
    %1883 = vst [vmem:[#allocation3] sm:$0xff] %v1880
    %1884 = vst [vmem:[#allocation4] sm:$0xff] %v1878
    // Predicated region
    $region30: #{_rnn_forward_impl.2} parent=1 // pred_check
      _
    $region31: #{_rnn_forward_impl.2} parent=1 // pred_check_branch
      %1886 = sbr.rel (0) target = $region33
    $region32: #{_rnn_forward_impl.2} parent=1 // pred_region
      _
    $region33: #{_rnn_forward_impl.2} parent=1 // pred_fallthru
      _
    // Predicated region
    $region34: #{_rnn_forward_impl.2} parent=1 // pred_check
      _
    $region35: #{_rnn_forward_impl.2} parent=1 // pred_check_branch
      %1888 = sbr.rel (0) target = $region37
    $region36: #{_rnn_forward_impl.2} parent=1 // pred_region
      _
    $region37: #{_rnn_forward_impl.2} parent=1 // pred_fallthru
      _
    %1889 = vsyncpa [#allocation6], 1
    %1890 = vsyncpa [#allocation8], 1

</llo_original>
